<compile_context>
chip_gen: v5e
topology: v5e:2x2
jax: 0.10.0
libtpu: 0.0.40
codegen_flags: <defaults>
</compile_context>

<pallas_src>
import jax
import jax.numpy as jnp
from jax.experimental import pallas as pl
from jax.experimental.pallas import tpu as pltpu


# ------------------------------ fused kernel --------------------------------


def _make_rdb_kernel(G0, Gpad, C, H, W, NB):
    """Build the fused RDB kernel for static (G0, Gpad, C, H, W, NB)."""
    HW = H * W
    LANES = NB * HW
    Ctot_pad = G0 + C * Gpad
    # Tap order t = ky*3 + kx  <->  (dy, dx) = (ky-1, kx-1); matches the weight
    # column ordering built in prepare_rdb_params.
    OFFS = [(dy, dx) for dy in (-1, 0, 1) for dx in (-1, 0, 1)]

    def kernel(mask_ref, x_ref, w_ref, b_ref, lffw_ref, lffb_ref, o_ref,
               tap_ref):
        # tap_ref: VMEM (9*Ctot_pad, LANES) f32 tap cache.
        # Zero it once per grid step: each layer's dot spans the FULL padded
        # channel range, so not-yet-written channels must contribute exactly 0.
        tap_ref[...] = jnp.zeros_like(tap_ref)

        # Hoist the 9 boundary masks (resident VMEM input, (1, LANES) each).
        masks = [mask_ref[t] for t in range(9)]

        def write_taps(group, ch_off, rows):
            """Write the 9 shifted+masked taps of `group` (rows, LANES) into
            the cache at padded-channel offset `ch_off` (aligned, static)."""
            for t, (dy, dx) in enumerate(OFFS):
                s = dy * W + dx
                if s == 0:
                    tap = group
                else:
                    rolled = pltpu.roll(group, shift=(-s) % LANES, axis=1)
                    tap = rolled * masks[t]          # zero out-of-bounds taps
                base = t * Ctot_pad + ch_off          # multiple of 8
                tap_ref[base:base + rows, :] = tap

        # Fold the NB images of this grid step onto the lane axis
        # (lane-aligned concat; masks also kill cross-image roll wrap).
        if NB == 1:
            x_fold = x_ref[0].astype(jnp.float32)
        else:
            x_fold = jnp.concatenate(
                [x_ref[i].astype(jnp.float32) for i in range(NB)], axis=1)

        # Input group -> tap cache (padded channels [0, G0)).
        write_taps(x_fold, 0, G0)

        # Dense conv layers: one MXU dot per layer over the whole tap cache,
        # then bias + ReLU (f32), then cache the new group's taps.
        for c in range(C):
            acc = jnp.dot(w_ref[c], tap_ref[...],
                          preferred_element_type=jnp.float32)   # (Gpad, LANES)
            acc = jnp.maximum(acc + b_ref[c], 0.0)
            write_taps(acc, G0 + c * Gpad, Gpad)

        # LFF 1x1 conv over the unshifted (tap index 4) feature block +
        # residual add with the original input (exact f32).
        feat = tap_ref[4 * Ctot_pad:5 * Ctot_pad, :]             # (Ctot_pad, LANES)
        out = jnp.dot(lffw_ref[...], feat,
                      preferred_element_type=jnp.float32)        # (G0, LANES)
        out = out + lffb_ref[...] + x_fold

        # Lane-aligned per-image stores (offsets are multiples of HW=256).
        for i in range(NB):
            o_ref[i] = out[:, i * HW:(i + 1) * HW].astype(o_ref.dtype)

    return kernel


# ------------------------------- wrapper ------------------------------------


def _build_tap_masks(H, W, NB):
    """(9, 1, NB*HW) f32 0/1 masks; local coords (p % HW) so they also mask
    cross-image wrap when images are folded onto the lane axis."""
    HW = H * W
    p = jnp.arange(NB * HW, dtype=jnp.int32) % HW
    y = p // W
    x = p % W
    rows = []
    for dy in (-1, 0, 1):
        for dx in (-1, 0, 1):
            ok = (y + dy >= 0) & (y + dy < H) & (x + dx >= 0) & (x + dx < W)
            rows.append(ok.astype(jnp.float32))
    return jnp.stack(rows, 0).reshape(9, 1, NB * HW)


@jax.jit
def rdb_forward(x_nchw, w_all, b_all, lff_w_mat, lff_b_col):
    """RDB forward.  Input/output NCHW (PyTorch convention).

    w_all:     (C, Gpad, 9*Ctot_pad) tap-major, channel-padded conv weights
    b_all:     (C, Gpad, 1)
    lff_w_mat: (G0, Ctot_pad)        lff_b_col: (G0, 1)
    (built by prepare_rdb_params)
    """
    N, G0, H, W = x_nchw.shape
    C, Gpad, K = w_all.shape
    Ctot_pad = K // 9
    assert Ctot_pad == G0 + C * Gpad
    HW = H * W

    # Fold images onto the lane axis to widen the matmul N dimension and
    # amortize per-step roll/mask/overhead cost.
    NB = 2 if (N % 2 == 0 and 2 * HW <= 2048) else 1
    LANES = NB * HW

    x_flat = x_nchw.reshape(N, G0, HW)          # channel-first, spatial on lanes
    masks = _build_tap_masks(H, W, NB)

    kernel = _make_rdb_kernel(G0, Gpad, C, H, W, NB)

    y_flat = pl.pallas_call(
        kernel,
        out_shape=jax.ShapeDtypeStruct((N, G0, HW), x_nchw.dtype),
        grid=(N // NB,),
        in_specs=[
            pl.BlockSpec((9, 1, LANES), lambda n: (0, 0, 0)),    # masks (resident)
            pl.BlockSpec((NB, G0, HW), lambda n: (n, 0, 0)),     # input block
            pl.BlockSpec((C, Gpad, K), lambda n: (0, 0, 0)),     # conv weights
            pl.BlockSpec((C, Gpad, 1), lambda n: (0, 0, 0)),     # conv biases
            pl.BlockSpec((G0, Ctot_pad), lambda n: (0, 0)),      # LFF weight
            pl.BlockSpec((G0, 1), lambda n: (0, 0)),             # LFF bias
        ],
        out_specs=pl.BlockSpec((NB, G0, HW), lambda n: (n, 0, 0)),
        scratch_shapes=[pltpu.VMEM((9 * Ctot_pad, LANES), jnp.float32)],
        compiler_params=pltpu.CompilerParams(
            dimension_semantics=("parallel",)),
    )(masks, x_flat, w_all, b_all, lff_w_mat, lff_b_col)

    return y_flat.reshape(N, G0, H, W)


# ------------------------------ parameters ----------------------------------


def init_rdb_params(key, G0, G, C, kSize=3):
    """Deterministic parameter init.  Weights stored PyTorch-style (OIHW)."""
    conv_ws, conv_bs = [], []
    for c in range(C):
        cin = G0 + c * G
        key, kw, kb = jax.random.split(key, 3)
        fan_in = cin * kSize * kSize
        conv_ws.append(jax.random.normal(kw, (G, cin, kSize, kSize),
                                         jnp.float32) / jnp.sqrt(fan_in))
        conv_bs.append(jax.random.normal(kb, (G,), jnp.float32) * 0.01)
    key, kw, kb = jax.random.split(key, 3)
    cin = G0 + C * G
    lff_w = jax.random.normal(kw, (G0, cin, 1, 1), jnp.float32) / jnp.sqrt(cin)
    lff_b = jax.random.normal(kb, (G0,), jnp.float32) * 0.01
    return conv_ws, conv_bs, lff_w, lff_b


def _padded_channel(ci, G0, G, Gpad):
    """Map a real concat-channel index to its 8-aligned padded slot."""
    if ci < G0:
        return ci
    j, r = divmod(ci - G0, G)
    return G0 + j * Gpad + r


def prepare_rdb_params(conv_ws_oihw, conv_bs, lff_w_oihw, lff_b):
    """One-time layout prep (outside the hot path).

    Each layer's OIHW weight becomes a (Gpad, 9*Ctot_pad) matrix whose column
    index is tap*Ctot_pad + padded_channel (tap = ky*3+kx), matching the
    tap-major VMEM tap-cache layout.  Output rows are padded to Gpad=8 with
    zeros; columns of padding / not-yet-produced channels are zero so the
    single full-K dot per layer is exact.  All layers are stacked.
    """
    C = len(conv_ws_oihw)
    G = conv_ws_oihw[0].shape[0]
    G0 = lff_w_oihw.shape[0]
    assert G0 % 8 == 0, "G0 must be a multiple of 8 for this kernel"
    Gpad = ((G + 7) // 8) * 8
    Ctot_pad = G0 + C * Gpad
    K = 9 * Ctot_pad

    w_all = jnp.zeros((C, Gpad, K), jnp.float32)
    b_all = jnp.zeros((C, Gpad, 1), jnp.float32)
    for c, (w, b) in enumerate(zip(conv_ws_oihw, conv_bs)):
        cin = w.shape[1]
        w_pad_in = jnp.zeros((G, Ctot_pad, 3, 3), jnp.float32)
        for ci in range(cin):
            p = _padded_channel(ci, G0, G, Gpad)
            w_pad_in = w_pad_in.at[:, p].set(w[:, ci])
        # (G, Ctot_pad, 3, 3) -> columns ordered (ky, kx, padded_channel)
        w_mat = jnp.transpose(w_pad_in, (0, 2, 3, 1)).reshape(G, K)
        w_all = w_all.at[c, :G, :].set(w_mat)
        b_all = b_all.at[c, :G, 0].set(b)

    Ctot = lff_w_oihw.shape[1]
    lff_mat = jnp.zeros((G0, Ctot_pad), jnp.float32)
    for ci in range(Ctot):
        p = _padded_channel(ci, G0, G, Gpad)
        lff_mat = lff_mat.at[:, p].set(lff_w_oihw[:, ci, 0, 0])
    lff_b_col = lff_b.reshape(G0, 1)
    return w_all, b_all, lff_mat, lff_b_col


# ------------------------------- reference ----------------------------------


def rdb_forward_ref(x_nchw, conv_ws, conv_bs, lff_w, lff_b):
    """Plain-JAX reference (lax.conv), NCHW, for correctness checking."""
    dn = ('NCHW', 'OIHW', 'NCHW')
    cur = x_nchw
    for w, b in zip(conv_ws, conv_bs):
        out = jax.lax.conv_general_dilated(cur, w, (1, 1), 'SAME',
                                           dimension_numbers=dn)
        out = jax.nn.relu(out + b[None, :, None, None])
        cur = jnp.concatenate([cur, out], axis=1)
    y = jax.lax.conv_general_dilated(cur, lff_w, (1, 1), 'SAME',
                                     dimension_numbers=dn)
    y = y + lff_b[None, :, None, None]
    return y + x_nchw


if __name__ == "__main__":
    # Small config: G0=8, G=4, C=3, kSize=3; input (N=2, C=G0=8, H=W=16).
    G0, G, C = 8, 4, 3
    N, H, W = 2, 16, 16

    key = jax.random.PRNGKey(0)
    key, kx = jax.random.split(key)
    x = jax.random.normal(kx, (N, G0, H, W), jnp.float32)

    conv_ws, conv_bs, lff_w, lff_b = init_rdb_params(key, G0, G, C)
    prepared = prepare_rdb_params(conv_ws, conv_bs, lff_w, lff_b)

    y = rdb_forward(x, *prepared)
    y = jax.block_until_ready(y)

    y_ref = rdb_forward_ref(x, conv_ws, conv_bs, lff_w, lff_b)
    assert y.shape == (N, G0, H, W), y.shape
    assert jnp.allclose(y, y_ref, atol=1e-4, rtol=1e-4), (
        float(jnp.max(jnp.abs(y - y_ref))))

    print("KERNEL_OK")
</pallas_src>

<mosaic_0001>
module attributes {stable_mosaic.version = 11 : i64} {
  func.func @kernel(%arg0: i32, %arg1: memref<9x1x512xf32, #tpu.memory_space<vmem>>, %arg2: memref<2x8x256xf32, #tpu.memory_space<vmem>>, %arg3: memref<3x8x288xf32, #tpu.memory_space<vmem>>, %arg4: memref<3x8x1xf32, #tpu.memory_space<vmem>>, %arg5: memref<8x32xf32, #tpu.memory_space<vmem>>, %arg6: memref<8x1xf32, #tpu.memory_space<vmem>>, %arg7: memref<2x8x256xf32, #tpu.memory_space<vmem>>, %arg8: memref<288x512xf32, #tpu.memory_space<vmem>>) attributes {dimension_semantics = [#tpu.dimension_semantics<parallel>], iteration_bounds = array<i64: 1>, scalar_prefetch = 0 : i64, scratch_operands = 1 : i64, tpu.core_type = #tpu.core_type<tc>, window_params = [{pipeline_mode = #tpu.pipeline_mode<synchronous>, transform_indices = @transform_0, window_bounds = array<i64: 9, 1, 512>}, {transform_indices = @transform_1, window_bounds = array<i64: 2, 8, 256>}, {pipeline_mode = #tpu.pipeline_mode<synchronous>, transform_indices = @transform_2, window_bounds = array<i64: 3, 8, 288>}, {pipeline_mode = #tpu.pipeline_mode<synchronous>, transform_indices = @transform_3, window_bounds = array<i64: 3, 8, 1>}, {pipeline_mode = #tpu.pipeline_mode<synchronous>, transform_indices = @transform_4, window_bounds = array<i64: 8, 32>}, {pipeline_mode = #tpu.pipeline_mode<synchronous>, transform_indices = @transform_5, window_bounds = array<i64: 8, 1>}, {transform_indices = @transform_6, window_bounds = array<i64: 2, 8, 256>}]} {
    %cst = arith.constant 0.000000e+00 : f32
    %0 = vector.broadcast %cst : f32 to vector<288x512xf32>
    %c0 = arith.constant 0 : index
    %c0_0 = arith.constant 0 : index
    %1 = vector.load %arg8[%c0, %c0_0] : memref<288x512xf32, #tpu.memory_space<vmem>>, vector<288x512xf32>
    tpu.vector_store %arg8[%c0, %c0_0], %0 {strides = array<i32>} : memref<288x512xf32, #tpu.memory_space<vmem>>, vector<288x512xf32>,
    %c0_1 = arith.constant 0 : index
    %c0_2 = arith.constant 0 : index
    %c0_3 = arith.constant 0 : index
    %2 = vector.load %arg1[%c0_1, %c0_2, %c0_3] : memref<9x1x512xf32, #tpu.memory_space<vmem>>, vector<1x1x512xf32>
    %3 = vector.shape_cast %2 : vector<1x1x512xf32> to vector<1x512xf32>
    %c1 = arith.constant 1 : index
    %c0_4 = arith.constant 0 : index
    %c0_5 = arith.constant 0 : index
    %4 = vector.load %arg1[%c1, %c0_4, %c0_5] : memref<9x1x512xf32, #tpu.memory_space<vmem>>, vector<1x1x512xf32>
    %5 = vector.shape_cast %4 : vector<1x1x512xf32> to vector<1x512xf32>
    %c2 = arith.constant 2 : index
    %c0_6 = arith.constant 0 : index
    %c0_7 = arith.constant 0 : index
    %6 = vector.load %arg1[%c2, %c0_6, %c0_7] : memref<9x1x512xf32, #tpu.memory_space<vmem>>, vector<1x1x512xf32>
    %7 = vector.shape_cast %6 : vector<1x1x512xf32> to vector<1x512xf32>
    %c3 = arith.constant 3 : index
    %c0_8 = arith.constant 0 : index
    %c0_9 = arith.constant 0 : index
    %8 = vector.load %arg1[%c3, %c0_8, %c0_9] : memref<9x1x512xf32, #tpu.memory_space<vmem>>, vector<1x1x512xf32>
    %9 = vector.shape_cast %8 : vector<1x1x512xf32> to vector<1x512xf32>
    %c5 = arith.constant 5 : index
    %c0_10 = arith.constant 0 : index
    %c0_11 = arith.constant 0 : index
    %10 = vector.load %arg1[%c5, %c0_10, %c0_11] : memref<9x1x512xf32, #tpu.memory_space<vmem>>, vector<1x1x512xf32>
    %11 = vector.shape_cast %10 : vector<1x1x512xf32> to vector<1x512xf32>
    %c6 = arith.constant 6 : index
    %c0_12 = arith.constant 0 : index
    %c0_13 = arith.constant 0 : index
    %12 = vector.load %arg1[%c6, %c0_12, %c0_13] : memref<9x1x512xf32, #tpu.memory_space<vmem>>, vector<1x1x512xf32>
    %13 = vector.shape_cast %12 : vector<1x1x512xf32> to vector<1x512xf32>
    %c7 = arith.constant 7 : index
    %c0_14 = arith.constant 0 : index
    %c0_15 = arith.constant 0 : index
    %14 = vector.load %arg1[%c7, %c0_14, %c0_15] : memref<9x1x512xf32, #tpu.memory_space<vmem>>, vector<1x1x512xf32>
    %15 = vector.shape_cast %14 : vector<1x1x512xf32> to vector<1x512xf32>
    %c8 = arith.constant 8 : index
    %c0_16 = arith.constant 0 : index
    %c0_17 = arith.constant 0 : index
    %16 = vector.load %arg1[%c8, %c0_16, %c0_17] : memref<9x1x512xf32, #tpu.memory_space<vmem>>, vector<1x1x512xf32>
    %17 = vector.shape_cast %16 : vector<1x1x512xf32> to vector<1x512xf32>
    %c0_18 = arith.constant 0 : index
    %c0_19 = arith.constant 0 : index
    %c0_20 = arith.constant 0 : index
    %18 = vector.load %arg2[%c0_18, %c0_19, %c0_20] : memref<2x8x256xf32, #tpu.memory_space<vmem>>, vector<1x8x256xf32>
    %19 = vector.shape_cast %18 : vector<1x8x256xf32> to vector<8x256xf32>
    %c1_21 = arith.constant 1 : index
    %c0_22 = arith.constant 0 : index
    %c0_23 = arith.constant 0 : index
    %20 = vector.load %arg2[%c1_21, %c0_22, %c0_23] : memref<2x8x256xf32, #tpu.memory_space<vmem>>, vector<1x8x256xf32>
    %21 = vector.shape_cast %20 : vector<1x8x256xf32> to vector<8x256xf32>
    %22 = tpu.concatenate %19, %21 in 1 : vector<8x256xf32>, vector<8x256xf32> -> vector<8x512xf32>
    %c17_i32 = arith.constant 17 : i32
    %23 = tpu.dynamic_rotate %22 by %c17_i32 dim 1 : vector<8x512xf32>, i32 -> vector<8x512xf32>
    %24 = vector.broadcast %3 : vector<1x512xf32> to vector<8x512xf32>
    %25 = arith.mulf %23, %24 : vector<8x512xf32>
    %c0_24 = arith.constant 0 : index
    %c0_25 = arith.constant 0 : index
    %26 = vector.load %arg8[%c0_24, %c0_25] : memref<288x512xf32, #tpu.memory_space<vmem>>, vector<8x512xf32>
    tpu.vector_store %arg8[%c0_24, %c0_25], %25 {strides = array<i32>} : memref<288x512xf32, #tpu.memory_space<vmem>>, vector<8x512xf32>,
    %c16_i32 = arith.constant 16 : i32
    %27 = tpu.dynamic_rotate %22 by %c16_i32 dim 1 : vector<8x512xf32>, i32 -> vector<8x512xf32>
    %28 = vector.broadcast %5 : vector<1x512xf32> to vector<8x512xf32>
    %29 = arith.mulf %27, %28 : vector<8x512xf32>
    %c32 = arith.constant 32 : index
    %c0_26 = arith.constant 0 : index
    %30 = vector.load %arg8[%c32, %c0_26] : memref<288x512xf32, #tpu.memory_space<vmem>>, vector<8x512xf32>
    tpu.vector_store %arg8[%c32, %c0_26], %29 {strides = array<i32>} : memref<288x512xf32, #tpu.memory_space<vmem>>, vector<8x512xf32>,
    %c15_i32 = arith.constant 15 : i32
    %31 = tpu.dynamic_rotate %22 by %c15_i32 dim 1 : vector<8x512xf32>, i32 -> vector<8x512xf32>
    %32 = vector.broadcast %7 : vector<1x512xf32> to vector<8x512xf32>
    %33 = arith.mulf %31, %32 : vector<8x512xf32>
    %c64 = arith.constant 64 : index
    %c0_27 = arith.constant 0 : index
    %34 = vector.load %arg8[%c64, %c0_27] : memref<288x512xf32, #tpu.memory_space<vmem>>, vector<8x512xf32>
    tpu.vector_store %arg8[%c64, %c0_27], %33 {strides = array<i32>} : memref<288x512xf32, #tpu.memory_space<vmem>>, vector<8x512xf32>,
    %c1_i32 = arith.constant 1 : i32
    %35 = tpu.dynamic_rotate %22 by %c1_i32 dim 1 : vector<8x512xf32>, i32 -> vector<8x512xf32>
    %36 = vector.broadcast %9 : vector<1x512xf32> to vector<8x512xf32>
    %37 = arith.mulf %35, %36 : vector<8x512xf32>
    %c96 = arith.constant 96 : index
    %c0_28 = arith.constant 0 : index
    %38 = vector.load %arg8[%c96, %c0_28] : memref<288x512xf32, #tpu.memory_space<vmem>>, vector<8x512xf32>
    tpu.vector_store %arg8[%c96, %c0_28], %37 {strides = array<i32>} : memref<288x512xf32, #tpu.memory_space<vmem>>, vector<8x512xf32>,
    %c128 = arith.constant 128 : index
    %c0_29 = arith.constant 0 : index
    %39 = vector.load %arg8[%c128, %c0_29] : memref<288x512xf32, #tpu.memory_space<vmem>>, vector<8x512xf32>
    tpu.vector_store %arg8[%c128, %c0_29], %22 {strides = array<i32>} : memref<288x512xf32, #tpu.memory_space<vmem>>, vector<8x512xf32>,
    %c511_i32 = arith.constant 511 : i32
    %40 = tpu.dynamic_rotate %22 by %c511_i32 dim 1 : vector<8x512xf32>, i32 -> vector<8x512xf32>
    %41 = vector.broadcast %11 : vector<1x512xf32> to vector<8x512xf32>
    %42 = arith.mulf %40, %41 : vector<8x512xf32>
    %c160 = arith.constant 160 : index
    %c0_30 = arith.constant 0 : index
    %43 = vector.load %arg8[%c160, %c0_30] : memref<288x512xf32, #tpu.memory_space<vmem>>, vector<8x512xf32>
    tpu.vector_store %arg8[%c160, %c0_30], %42 {strides = array<i32>} : memref<288x512xf32, #tpu.memory_space<vmem>>, vector<8x512xf32>,
    %c497_i32 = arith.constant 497 : i32
    %44 = tpu.dynamic_rotate %22 by %c497_i32 dim 1 : vector<8x512xf32>, i32 -> vector<8x512xf32>
    %45 = vector.broadcast %13 : vector<1x512xf32> to vector<8x512xf32>
    %46 = arith.mulf %44, %45 : vector<8x512xf32>
    %c192 = arith.constant 192 : index
    %c0_31 = arith.constant 0 : index
    %47 = vector.load %arg8[%c192, %c0_31] : memref<288x512xf32, #tpu.memory_space<vmem>>, vector<8x512xf32>
    tpu.vector_store %arg8[%c192, %c0_31], %46 {strides = array<i32>} : memref<288x512xf32, #tpu.memory_space<vmem>>, vector<8x512xf32>,
    %c496_i32 = arith.constant 496 : i32
    %48 = tpu.dynamic_rotate %22 by %c496_i32 dim 1 : vector<8x512xf32>, i32 -> vector<8x512xf32>
    %49 = vector.broadcast %15 : vector<1x512xf32> to vector<8x512xf32>
    %50 = arith.mulf %48, %49 : vector<8x512xf32>
    %c224 = arith.constant 224 : index
    %c0_32 = arith.constant 0 : index
    %51 = vector.load %arg8[%c224, %c0_32] : memref<288x512xf32, #tpu.memory_space<vmem>>, vector<8x512xf32>
    tpu.vector_store %arg8[%c224, %c0_32], %50 {strides = array<i32>} : memref<288x512xf32, #tpu.memory_space<vmem>>, vector<8x512xf32>,
    %c495_i32 = arith.constant 495 : i32
    %52 = tpu.dynamic_rotate %22 by %c495_i32 dim 1 : vector<8x512xf32>, i32 -> vector<8x512xf32>
    %53 = vector.broadcast %17 : vector<1x512xf32> to vector<8x512xf32>
    %54 = arith.mulf %52, %53 : vector<8x512xf32>
    %c256 = arith.constant 256 : index
    %c0_33 = arith.constant 0 : index
    %55 = vector.load %arg8[%c256, %c0_33] : memref<288x512xf32, #tpu.memory_space<vmem>>, vector<8x512xf32>
    tpu.vector_store %arg8[%c256, %c0_33], %54 {strides = array<i32>} : memref<288x512xf32, #tpu.memory_space<vmem>>, vector<8x512xf32>,
    %c0_34 = arith.constant 0 : index
    %c0_35 = arith.constant 0 : index
    %c0_36 = arith.constant 0 : index
    %56 = vector.load %arg3[%c0_34, %c0_35, %c0_36] : memref<3x8x288xf32, #tpu.memory_space<vmem>>, vector<1x8x288xf32>
    %57 = vector.shape_cast %56 : vector<1x8x288xf32> to vector<8x288xf32>
    %c0_37 = arith.constant 0 : index
    %c0_38 = arith.constant 0 : index
    %58 = vector.load %arg8[%c0_37, %c0_38] : memref<288x512xf32, #tpu.memory_space<vmem>>, vector<288x512xf32>
    %cst_39 = arith.constant dense<0.000000e+00> : vector<8x512xf32>
    %59 = tpu.matmul %57, %58, %cst_39 {dimension_numbers = #tpu.dot_dimension_numbers<[1], [0], [0], [1], [0, 0, 1, 1], [], []>} : vector<8x288xf32>, vector<288x512xf32>, vector<8x512xf32> -> vector<8x512xf32>
    %c0_40 = arith.constant 0 : index
    %c0_41 = arith.constant 0 : index
    %c0_42 = arith.constant 0 : index
    %60 = vector.load %arg4[%c0_40, %c0_41, %c0_42] : memref<3x8x1xf32, #tpu.memory_space<vmem>>, vector<1x8x1xf32>
    %61 = vector.shape_cast %60 : vector<1x8x1xf32> to vector<8x1xf32>
    %62 = vector.broadcast %61 : vector<8x1xf32> to vector<8x512xf32>
    %63 = arith.addf %59, %62 : vector<8x512xf32>
    %cst_43 = arith.constant 0.000000e+00 : f32
    %64 = vector.broadcast %cst_43 : f32 to vector<8x512xf32>
    %65 = arith.maximumf %63, %64 : vector<8x512xf32>
    %c17_i32_44 = arith.constant 17 : i32
    %66 = tpu.dynamic_rotate %65 by %c17_i32_44 dim 1 : vector<8x512xf32>, i32 -> vector<8x512xf32>
    %67 = vector.broadcast %3 : vector<1x512xf32> to vector<8x512xf32>
    %68 = arith.mulf %66, %67 : vector<8x512xf32>
    %c8_45 = arith.constant 8 : index
    %c0_46 = arith.constant 0 : index
    %69 = vector.load %arg8[%c8_45, %c0_46] : memref<288x512xf32, #tpu.memory_space<vmem>>, vector<8x512xf32>
    tpu.vector_store %arg8[%c8_45, %c0_46], %68 {strides = array<i32>} : memref<288x512xf32, #tpu.memory_space<vmem>>, vector<8x512xf32>,
    %c16_i32_47 = arith.constant 16 : i32
    %70 = tpu.dynamic_rotate %65 by %c16_i32_47 dim 1 : vector<8x512xf32>, i32 -> vector<8x512xf32>
    %71 = vector.broadcast %5 : vector<1x512xf32> to vector<8x512xf32>
    %72 = arith.mulf %70, %71 : vector<8x512xf32>
    %c40 = arith.constant 40 : index
    %c0_48 = arith.constant 0 : index
    %73 = vector.load %arg8[%c40, %c0_48] : memref<288x512xf32, #tpu.memory_space<vmem>>, vector<8x512xf32>
    tpu.vector_store %arg8[%c40, %c0_48], %72 {strides = array<i32>} : memref<288x512xf32, #tpu.memory_space<vmem>>, vector<8x512xf32>,
    %c15_i32_49 = arith.constant 15 : i32
    %74 = tpu.dynamic_rotate %65 by %c15_i32_49 dim 1 : vector<8x512xf32>, i32 -> vector<8x512xf32>
    %75 = vector.broadcast %7 : vector<1x512xf32> to vector<8x512xf32>
    %76 = arith.mulf %74, %75 : vector<8x512xf32>
    %c72 = arith.constant 72 : index
    %c0_50 = arith.constant 0 : index
    %77 = vector.load %arg8[%c72, %c0_50] : memref<288x512xf32, #tpu.memory_space<vmem>>, vector<8x512xf32>
    tpu.vector_store %arg8[%c72, %c0_50], %76 {strides = array<i32>} : memref<288x512xf32, #tpu.memory_space<vmem>>, vector<8x512xf32>,
    %c1_i32_51 = arith.constant 1 : i32
    %78 = tpu.dynamic_rotate %65 by %c1_i32_51 dim 1 : vector<8x512xf32>, i32 -> vector<8x512xf32>
    %79 = vector.broadcast %9 : vector<1x512xf32> to vector<8x512xf32>
    %80 = arith.mulf %78, %79 : vector<8x512xf32>
    %c104 = arith.constant 104 : index
    %c0_52 = arith.constant 0 : index
    %81 = vector.load %arg8[%c104, %c0_52] : memref<288x512xf32, #tpu.memory_space<vmem>>, vector<8x512xf32>
    tpu.vector_store %arg8[%c104, %c0_52], %80 {strides = array<i32>} : memref<288x512xf32, #tpu.memory_space<vmem>>, vector<8x512xf32>,
    %c136 = arith.constant 136 : index
    %c0_53 = arith.constant 0 : index
    %82 = vector.load %arg8[%c136, %c0_53] : memref<288x512xf32, #tpu.memory_space<vmem>>, vector<8x512xf32>
    tpu.vector_store %arg8[%c136, %c0_53], %65 {strides = array<i32>} : memref<288x512xf32, #tpu.memory_space<vmem>>, vector<8x512xf32>,
    %c511_i32_54 = arith.constant 511 : i32
    %83 = tpu.dynamic_rotate %65 by %c511_i32_54 dim 1 : vector<8x512xf32>, i32 -> vector<8x512xf32>
    %84 = vector.broadcast %11 : vector<1x512xf32> to vector<8x512xf32>
    %85 = arith.mulf %83, %84 : vector<8x512xf32>
    %c168 = arith.constant 168 : index
    %c0_55 = arith.constant 0 : index
    %86 = vector.load %arg8[%c168, %c0_55] : memref<288x512xf32, #tpu.memory_space<vmem>>, vector<8x512xf32>
    tpu.vector_store %arg8[%c168, %c0_55], %85 {strides = array<i32>} : memref<288x512xf32, #tpu.memory_space<vmem>>, vector<8x512xf32>,
    %c497_i32_56 = arith.constant 497 : i32
    %87 = tpu.dynamic_rotate %65 by %c497_i32_56 dim 1 : vector<8x512xf32>, i32 -> vector<8x512xf32>
    %88 = vector.broadcast %13 : vector<1x512xf32> to vector<8x512xf32>
    %89 = arith.mulf %87, %88 : vector<8x512xf32>
    %c200 = arith.constant 200 : index
    %c0_57 = arith.constant 0 : index
    %90 = vector.load %arg8[%c200, %c0_57] : memref<288x512xf32, #tpu.memory_space<vmem>>, vector<8x512xf32>
    tpu.vector_store %arg8[%c200, %c0_57], %89 {strides = array<i32>} : memref<288x512xf32, #tpu.memory_space<vmem>>, vector<8x512xf32>,
    %c496_i32_58 = arith.constant 496 : i32
    %91 = tpu.dynamic_rotate %65 by %c496_i32_58 dim 1 : vector<8x512xf32>, i32 -> vector<8x512xf32>
    %92 = vector.broadcast %15 : vector<1x512xf32> to vector<8x512xf32>
    %93 = arith.mulf %91, %92 : vector<8x512xf32>
    %c232 = arith.constant 232 : index
    %c0_59 = arith.constant 0 : index
    %94 = vector.load %arg8[%c232, %c0_59] : memref<288x512xf32, #tpu.memory_space<vmem>>, vector<8x512xf32>
    tpu.vector_store %arg8[%c232, %c0_59], %93 {strides = array<i32>} : memref<288x512xf32, #tpu.memory_space<vmem>>, vector<8x512xf32>,
    %c495_i32_60 = arith.constant 495 : i32
    %95 = tpu.dynamic_rotate %65 by %c495_i32_60 dim 1 : vector<8x512xf32>, i32 -> vector<8x512xf32>
    %96 = vector.broadcast %17 : vector<1x512xf32> to vector<8x512xf32>
    %97 = arith.mulf %95, %96 : vector<8x512xf32>
    %c264 = arith.constant 264 : index
    %c0_61 = arith.constant 0 : index
    %98 = vector.load %arg8[%c264, %c0_61] : memref<288x512xf32, #tpu.memory_space<vmem>>, vector<8x512xf32>
    tpu.vector_store %arg8[%c264, %c0_61], %97 {strides = array<i32>} : memref<288x512xf32, #tpu.memory_space<vmem>>, vector<8x512xf32>,
    %c1_62 = arith.constant 1 : index
    %c0_63 = arith.constant 0 : index
    %c0_64 = arith.constant 0 : index
    %99 = vector.load %arg3[%c1_62, %c0_63, %c0_64] : memref<3x8x288xf32, #tpu.memory_space<vmem>>, vector<1x8x288xf32>
    %100 = vector.shape_cast %99 : vector<1x8x288xf32> to vector<8x288xf32>
    %c0_65 = arith.constant 0 : index
    %c0_66 = arith.constant 0 : index
    %101 = vector.load %arg8[%c0_65, %c0_66] : memref<288x512xf32, #tpu.memory_space<vmem>>, vector<288x512xf32>
    %cst_67 = arith.constant dense<0.000000e+00> : vector<8x512xf32>
    %102 = tpu.matmul %100, %101, %cst_67 {dimension_numbers = #tpu.dot_dimension_numbers<[1], [0], [0], [1], [0, 0, 1, 1], [], []>} : vector<8x288xf32>, vector<288x512xf32>, vector<8x512xf32> -> vector<8x512xf32>
    %c1_68 = arith.constant 1 : index
    %c0_69 = arith.constant 0 : index
    %c0_70 = arith.constant 0 : index
    %103 = vector.load %arg4[%c1_68, %c0_69, %c0_70] : memref<3x8x1xf32, #tpu.memory_space<vmem>>, vector<1x8x1xf32>
    %104 = vector.shape_cast %103 : vector<1x8x1xf32> to vector<8x1xf32>
    %105 = vector.broadcast %104 : vector<8x1xf32> to vector<8x512xf32>
    %106 = arith.addf %102, %105 : vector<8x512xf32>
    %cst_71 = arith.constant 0.000000e+00 : f32
    %107 = vector.broadcast %cst_71 : f32 to vector<8x512xf32>
    %108 = arith.maximumf %106, %107 : vector<8x512xf32>
    %c17_i32_72 = arith.constant 17 : i32
    %109 = tpu.dynamic_rotate %108 by %c17_i32_72 dim 1 : vector<8x512xf32>, i32 -> vector<8x512xf32>
    %110 = vector.broadcast %3 : vector<1x512xf32> to vector<8x512xf32>
    %111 = arith.mulf %109, %110 : vector<8x512xf32>
    %c16 = arith.constant 16 : index
    %c0_73 = arith.constant 0 : index
    %112 = vector.load %arg8[%c16, %c0_73] : memref<288x512xf32, #tpu.memory_space<vmem>>, vector<8x512xf32>
    tpu.vector_store %arg8[%c16, %c0_73], %111 {strides = array<i32>} : memref<288x512xf32, #tpu.memory_space<vmem>>, vector<8x512xf32>,
    %c16_i32_74 = arith.constant 16 : i32
    %113 = tpu.dynamic_rotate %108 by %c16_i32_74 dim 1 : vector<8x512xf32>, i32 -> vector<8x512xf32>
    %114 = vector.broadcast %5 : vector<1x512xf32> to vector<8x512xf32>
    %115 = arith.mulf %113, %114 : vector<8x512xf32>
    %c48 = arith.constant 48 : index
    %c0_75 = arith.constant 0 : index
    %116 = vector.load %arg8[%c48, %c0_75] : memref<288x512xf32, #tpu.memory_space<vmem>>, vector<8x512xf32>
    tpu.vector_store %arg8[%c48, %c0_75], %115 {strides = array<i32>} : memref<288x512xf32, #tpu.memory_space<vmem>>, vector<8x512xf32>,
    %c15_i32_76 = arith.constant 15 : i32
    %117 = tpu.dynamic_rotate %108 by %c15_i32_76 dim 1 : vector<8x512xf32>, i32 -> vector<8x512xf32>
    %118 = vector.broadcast %7 : vector<1x512xf32> to vector<8x512xf32>
    %119 = arith.mulf %117, %118 : vector<8x512xf32>
    %c80 = arith.constant 80 : index
    %c0_77 = arith.constant 0 : index
    %120 = vector.load %arg8[%c80, %c0_77] : memref<288x512xf32, #tpu.memory_space<vmem>>, vector<8x512xf32>
    tpu.vector_store %arg8[%c80, %c0_77], %119 {strides = array<i32>} : memref<288x512xf32, #tpu.memory_space<vmem>>, vector<8x512xf32>,
    %c1_i32_78 = arith.constant 1 : i32
    %121 = tpu.dynamic_rotate %108 by %c1_i32_78 dim 1 : vector<8x512xf32>, i32 -> vector<8x512xf32>
    %122 = vector.broadcast %9 : vector<1x512xf32> to vector<8x512xf32>
    %123 = arith.mulf %121, %122 : vector<8x512xf32>
    %c112 = arith.constant 112 : index
    %c0_79 = arith.constant 0 : index
    %124 = vector.load %arg8[%c112, %c0_79] : memref<288x512xf32, #tpu.memory_space<vmem>>, vector<8x512xf32>
    tpu.vector_store %arg8[%c112, %c0_79], %123 {strides = array<i32>} : memref<288x512xf32, #tpu.memory_space<vmem>>, vector<8x512xf32>,
    %c144 = arith.constant 144 : index
    %c0_80 = arith.constant 0 : index
    %125 = vector.load %arg8[%c144, %c0_80] : memref<288x512xf32, #tpu.memory_space<vmem>>, vector<8x512xf32>
    tpu.vector_store %arg8[%c144, %c0_80], %108 {strides = array<i32>} : memref<288x512xf32, #tpu.memory_space<vmem>>, vector<8x512xf32>,
    %c511_i32_81 = arith.constant 511 : i32
    %126 = tpu.dynamic_rotate %108 by %c511_i32_81 dim 1 : vector<8x512xf32>, i32 -> vector<8x512xf32>
    %127 = vector.broadcast %11 : vector<1x512xf32> to vector<8x512xf32>
    %128 = arith.mulf %126, %127 : vector<8x512xf32>
    %c176 = arith.constant 176 : index
    %c0_82 = arith.constant 0 : index
    %129 = vector.load %arg8[%c176, %c0_82] : memref<288x512xf32, #tpu.memory_space<vmem>>, vector<8x512xf32>
    tpu.vector_store %arg8[%c176, %c0_82], %128 {strides = array<i32>} : memref<288x512xf32, #tpu.memory_space<vmem>>, vector<8x512xf32>,
    %c497_i32_83 = arith.constant 497 : i32
    %130 = tpu.dynamic_rotate %108 by %c497_i32_83 dim 1 : vector<8x512xf32>, i32 -> vector<8x512xf32>
    %131 = vector.broadcast %13 : vector<1x512xf32> to vector<8x512xf32>
    %132 = arith.mulf %130, %131 : vector<8x512xf32>
    %c208 = arith.constant 208 : index
    %c0_84 = arith.constant 0 : index
    %133 = vector.load %arg8[%c208, %c0_84] : memref<288x512xf32, #tpu.memory_space<vmem>>, vector<8x512xf32>
    tpu.vector_store %arg8[%c208, %c0_84], %132 {strides = array<i32>} : memref<288x512xf32, #tpu.memory_space<vmem>>, vector<8x512xf32>,
    %c496_i32_85 = arith.constant 496 : i32
    %134 = tpu.dynamic_rotate %108 by %c496_i32_85 dim 1 : vector<8x512xf32>, i32 -> vector<8x512xf32>
    %135 = vector.broadcast %15 : vector<1x512xf32> to vector<8x512xf32>
    %136 = arith.mulf %134, %135 : vector<8x512xf32>
    %c240 = arith.constant 240 : index
    %c0_86 = arith.constant 0 : index
    %137 = vector.load %arg8[%c240, %c0_86] : memref<288x512xf32, #tpu.memory_space<vmem>>, vector<8x512xf32>
    tpu.vector_store %arg8[%c240, %c0_86], %136 {strides = array<i32>} : memref<288x512xf32, #tpu.memory_space<vmem>>, vector<8x512xf32>,
    %c495_i32_87 = arith.constant 495 : i32
    %138 = tpu.dynamic_rotate %108 by %c495_i32_87 dim 1 : vector<8x512xf32>, i32 -> vector<8x512xf32>
    %139 = vector.broadcast %17 : vector<1x512xf32> to vector<8x512xf32>
    %140 = arith.mulf %138, %139 : vector<8x512xf32>
    %c272 = arith.constant 272 : index
    %c0_88 = arith.constant 0 : index
    %141 = vector.load %arg8[%c272, %c0_88] : memref<288x512xf32, #tpu.memory_space<vmem>>, vector<8x512xf32>
    tpu.vector_store %arg8[%c272, %c0_88], %140 {strides = array<i32>} : memref<288x512xf32, #tpu.memory_space<vmem>>, vector<8x512xf32>,
    %c2_89 = arith.constant 2 : index
    %c0_90 = arith.constant 0 : index
    %c0_91 = arith.constant 0 : index
    %142 = vector.load %arg3[%c2_89, %c0_90, %c0_91] : memref<3x8x288xf32, #tpu.memory_space<vmem>>, vector<1x8x288xf32>
    %143 = vector.shape_cast %142 : vector<1x8x288xf32> to vector<8x288xf32>
    %c0_92 = arith.constant 0 : index
    %c0_93 = arith.constant 0 : index
    %144 = vector.load %arg8[%c0_92, %c0_93] : memref<288x512xf32, #tpu.memory_space<vmem>>, vector<288x512xf32>
    %cst_94 = arith.constant dense<0.000000e+00> : vector<8x512xf32>
    %145 = tpu.matmul %143, %144, %cst_94 {dimension_numbers = #tpu.dot_dimension_numbers<[1], [0], [0], [1], [0, 0, 1, 1], [], []>} : vector<8x288xf32>, vector<288x512xf32>, vector<8x512xf32> -> vector<8x512xf32>
    %c2_95 = arith.constant 2 : index
    %c0_96 = arith.constant 0 : index
    %c0_97 = arith.constant 0 : index
    %146 = vector.load %arg4[%c2_95, %c0_96, %c0_97] : memref<3x8x1xf32, #tpu.memory_space<vmem>>, vector<1x8x1xf32>
    %147 = vector.shape_cast %146 : vector<1x8x1xf32> to vector<8x1xf32>
    %148 = vector.broadcast %147 : vector<8x1xf32> to vector<8x512xf32>
    %149 = arith.addf %145, %148 : vector<8x512xf32>
    %cst_98 = arith.constant 0.000000e+00 : f32
    %150 = vector.broadcast %cst_98 : f32 to vector<8x512xf32>
    %151 = arith.maximumf %149, %150 : vector<8x512xf32>
    %c17_i32_99 = arith.constant 17 : i32
    %152 = tpu.dynamic_rotate %151 by %c17_i32_99 dim 1 : vector<8x512xf32>, i32 -> vector<8x512xf32>
    %153 = vector.broadcast %3 : vector<1x512xf32> to vector<8x512xf32>
    %154 = arith.mulf %152, %153 : vector<8x512xf32>
    %c24 = arith.constant 24 : index
    %c0_100 = arith.constant 0 : index
    %155 = vector.load %arg8[%c24, %c0_100] : memref<288x512xf32, #tpu.memory_space<vmem>>, vector<8x512xf32>
    tpu.vector_store %arg8[%c24, %c0_100], %154 {strides = array<i32>} : memref<288x512xf32, #tpu.memory_space<vmem>>, vector<8x512xf32>,
    %c16_i32_101 = arith.constant 16 : i32
    %156 = tpu.dynamic_rotate %151 by %c16_i32_101 dim 1 : vector<8x512xf32>, i32 -> vector<8x512xf32>
    %157 = vector.broadcast %5 : vector<1x512xf32> to vector<8x512xf32>
    %158 = arith.mulf %156, %157 : vector<8x512xf32>
    %c56 = arith.constant 56 : index
    %c0_102 = arith.constant 0 : index
    %159 = vector.load %arg8[%c56, %c0_102] : memref<288x512xf32, #tpu.memory_space<vmem>>, vector<8x512xf32>
    tpu.vector_store %arg8[%c56, %c0_102], %158 {strides = array<i32>} : memref<288x512xf32, #tpu.memory_space<vmem>>, vector<8x512xf32>,
    %c15_i32_103 = arith.constant 15 : i32
    %160 = tpu.dynamic_rotate %151 by %c15_i32_103 dim 1 : vector<8x512xf32>, i32 -> vector<8x512xf32>
    %161 = vector.broadcast %7 : vector<1x512xf32> to vector<8x512xf32>
    %162 = arith.mulf %160, %161 : vector<8x512xf32>
    %c88 = arith.constant 88 : index
    %c0_104 = arith.constant 0 : index
    %163 = vector.load %arg8[%c88, %c0_104] : memref<288x512xf32, #tpu.memory_space<vmem>>, vector<8x512xf32>
    tpu.vector_store %arg8[%c88, %c0_104], %162 {strides = array<i32>} : memref<288x512xf32, #tpu.memory_space<vmem>>, vector<8x512xf32>,
    %c1_i32_105 = arith.constant 1 : i32
    %164 = tpu.dynamic_rotate %151 by %c1_i32_105 dim 1 : vector<8x512xf32>, i32 -> vector<8x512xf32>
    %165 = vector.broadcast %9 : vector<1x512xf32> to vector<8x512xf32>
    %166 = arith.mulf %164, %165 : vector<8x512xf32>
    %c120 = arith.constant 120 : index
    %c0_106 = arith.constant 0 : index
    %167 = vector.load %arg8[%c120, %c0_106] : memref<288x512xf32, #tpu.memory_space<vmem>>, vector<8x512xf32>
    tpu.vector_store %arg8[%c120, %c0_106], %166 {strides = array<i32>} : memref<288x512xf32, #tpu.memory_space<vmem>>, vector<8x512xf32>,
    %c152 = arith.constant 152 : index
    %c0_107 = arith.constant 0 : index
    %168 = vector.load %arg8[%c152, %c0_107] : memref<288x512xf32, #tpu.memory_space<vmem>>, vector<8x512xf32>
    tpu.vector_store %arg8[%c152, %c0_107], %151 {strides = array<i32>} : memref<288x512xf32, #tpu.memory_space<vmem>>, vector<8x512xf32>,
    %c511_i32_108 = arith.constant 511 : i32
    %169 = tpu.dynamic_rotate %151 by %c511_i32_108 dim 1 : vector<8x512xf32>, i32 -> vector<8x512xf32>
    %170 = vector.broadcast %11 : vector<1x512xf32> to vector<8x512xf32>
    %171 = arith.mulf %169, %170 : vector<8x512xf32>
    %c184 = arith.constant 184 : index
    %c0_109 = arith.constant 0 : index
    %172 = vector.load %arg8[%c184, %c0_109] : memref<288x512xf32, #tpu.memory_space<vmem>>, vector<8x512xf32>
    tpu.vector_store %arg8[%c184, %c0_109], %171 {strides = array<i32>} : memref<288x512xf32, #tpu.memory_space<vmem>>, vector<8x512xf32>,
    %c497_i32_110 = arith.constant 497 : i32
    %173 = tpu.dynamic_rotate %151 by %c497_i32_110 dim 1 : vector<8x512xf32>, i32 -> vector<8x512xf32>
    %174 = vector.broadcast %13 : vector<1x512xf32> to vector<8x512xf32>
    %175 = arith.mulf %173, %174 : vector<8x512xf32>
    %c216 = arith.constant 216 : index
    %c0_111 = arith.constant 0 : index
    %176 = vector.load %arg8[%c216, %c0_111] : memref<288x512xf32, #tpu.memory_space<vmem>>, vector<8x512xf32>
    tpu.vector_store %arg8[%c216, %c0_111], %175 {strides = array<i32>} : memref<288x512xf32, #tpu.memory_space<vmem>>, vector<8x512xf32>,
    %c496_i32_112 = arith.constant 496 : i32
    %177 = tpu.dynamic_rotate %151 by %c496_i32_112 dim 1 : vector<8x512xf32>, i32 -> vector<8x512xf32>
    %178 = vector.broadcast %15 : vector<1x512xf32> to vector<8x512xf32>
    %179 = arith.mulf %177, %178 : vector<8x512xf32>
    %c248 = arith.constant 248 : index
    %c0_113 = arith.constant 0 : index
    %180 = vector.load %arg8[%c248, %c0_113] : memref<288x512xf32, #tpu.memory_space<vmem>>, vector<8x512xf32>
    tpu.vector_store %arg8[%c248, %c0_113], %179 {strides = array<i32>} : memref<288x512xf32, #tpu.memory_space<vmem>>, vector<8x512xf32>,
    %c495_i32_114 = arith.constant 495 : i32
    %181 = tpu.dynamic_rotate %151 by %c495_i32_114 dim 1 : vector<8x512xf32>, i32 -> vector<8x512xf32>
    %182 = vector.broadcast %17 : vector<1x512xf32> to vector<8x512xf32>
    %183 = arith.mulf %181, %182 : vector<8x512xf32>
    %c280 = arith.constant 280 : index
    %c0_115 = arith.constant 0 : index
    %184 = vector.load %arg8[%c280, %c0_115] : memref<288x512xf32, #tpu.memory_space<vmem>>, vector<8x512xf32>
    tpu.vector_store %arg8[%c280, %c0_115], %183 {strides = array<i32>} : memref<288x512xf32, #tpu.memory_space<vmem>>, vector<8x512xf32>,
    %c128_116 = arith.constant 128 : index
    %c0_117 = arith.constant 0 : index
    %185 = vector.load %arg8[%c128_116, %c0_117] : memref<288x512xf32, #tpu.memory_space<vmem>>, vector<32x512xf32>
    %c0_118 = arith.constant 0 : index
    %c0_119 = arith.constant 0 : index
    %186 = vector.load %arg5[%c0_118, %c0_119] : memref<8x32xf32, #tpu.memory_space<vmem>>, vector<8x32xf32>
    %cst_120 = arith.constant dense<0.000000e+00> : vector<8x512xf32>
    %187 = tpu.matmul %186, %185, %cst_120 {dimension_numbers = #tpu.dot_dimension_numbers<[1], [0], [0], [1], [0, 0, 1, 1], [], []>} : vector<8x32xf32>, vector<32x512xf32>, vector<8x512xf32> -> vector<8x512xf32>
    %c0_121 = arith.constant 0 : index
    %c0_122 = arith.constant 0 : index
    %188 = vector.load %arg6[%c0_121, %c0_122] : memref<8x1xf32, #tpu.memory_space<vmem>>, vector<8x1xf32>
    %189 = vector.broadcast %188 : vector<8x1xf32> to vector<8x512xf32>
    %190 = arith.addf %187, %189 : vector<8x512xf32>
    %191 = arith.addf %190, %22 : vector<8x512xf32>
    %192 = vector.extract_strided_slice %191 {offsets = [0, 0], sizes = [8, 256], strides = [1, 1]} : vector<8x512xf32> to vector<8x256xf32>
    %c0_123 = arith.constant 0 : index
    %c0_124 = arith.constant 0 : index
    %c0_125 = arith.constant 0 : index
    %193 = vector.load %arg7[%c0_123, %c0_124, %c0_125] : memref<2x8x256xf32, #tpu.memory_space<vmem>>, vector<1x8x256xf32>
    %194 = vector.shape_cast %193 : vector<1x8x256xf32> to vector<8x256xf32>
    %195 = vector.shape_cast %192 : vector<8x256xf32> to vector<1x8x256xf32>
    tpu.vector_store %arg7[%c0_123, %c0_124, %c0_125], %195 {strides = array<i32>} : memref<2x8x256xf32, #tpu.memory_space<vmem>>, vector<1x8x256xf32>,
    %196 = vector.extract_strided_slice %191 {offsets = [0, 256], sizes = [8, 256], strides = [1, 1]} : vector<8x512xf32> to vector<8x256xf32>
    %c1_126 = arith.constant 1 : index
    %c0_127 = arith.constant 0 : index
    %c0_128 = arith.constant 0 : index
    %197 = vector.load %arg7[%c1_126, %c0_127, %c0_128] : memref<2x8x256xf32, #tpu.memory_space<vmem>>, vector<1x8x256xf32>
    %198 = vector.shape_cast %197 : vector<1x8x256xf32> to vector<8x256xf32>
    %199 = vector.shape_cast %196 : vector<8x256xf32> to vector<1x8x256xf32>
    tpu.vector_store %arg7[%c1_126, %c0_127, %c0_128], %199 {strides = array<i32>} : memref<2x8x256xf32, #tpu.memory_space<vmem>>, vector<1x8x256xf32>,
    return
  }
  func.func @transform_0(%arg0: i32) -> (i32, i32, i32) {
    %c0_i32 = arith.constant 0 : i32
    %c0_i32_0 = arith.constant 0 : i32
    %c0_i32_1 = arith.constant 0 : i32
    %c0_i32_2 = arith.constant 0 : i32
    return %c0_i32, %c0_i32_0, %c0_i32_1 : i32, i32, i32
  }
  func.func @transform_1(%arg0: i32) -> (i32, i32, i32) {
    %c0_i32 = arith.constant 0 : i32
    %c0_i32_0 = arith.constant 0 : i32
    %c0_i32_1 = arith.constant 0 : i32
    return %arg0, %c0_i32, %c0_i32_0 : i32, i32, i32
  }
  func.func @transform_2(%arg0: i32) -> (i32, i32, i32) {
    %c0_i32 = arith.constant 0 : i32
    %c0_i32_0 = arith.constant 0 : i32
    %c0_i32_1 = arith.constant 0 : i32
    %c0_i32_2 = arith.constant 0 : i32
    return %c0_i32, %c0_i32_0, %c0_i32_1 : i32, i32, i32
  }
  func.func @transform_3(%arg0: i32) -> (i32, i32, i32) {
    %c0_i32 = arith.constant 0 : i32
    %c0_i32_0 = arith.constant 0 : i32
    %c0_i32_1 = arith.constant 0 : i32
    %c0_i32_2 = arith.constant 0 : i32
    return %c0_i32, %c0_i32_0, %c0_i32_1 : i32, i32, i32
  }
  func.func @transform_4(%arg0: i32) -> (i32, i32) {
    %c0_i32 = arith.constant 0 : i32
    %c0_i32_0 = arith.constant 0 : i32
    %c0_i32_1 = arith.constant 0 : i32
    return %c0_i32, %c0_i32_0 : i32, i32
  }
  func.func @transform_5(%arg0: i32) -> (i32, i32) {
    %c0_i32 = arith.constant 0 : i32
    %c0_i32_0 = arith.constant 0 : i32
    %c0_i32_1 = arith.constant 0 : i32
    return %c0_i32, %c0_i32_0 : i32, i32
  }
  func.func @transform_6(%arg0: i32) -> (i32, i32, i32) {
    %c0_i32 = arith.constant 0 : i32
    %c0_i32_0 = arith.constant 0 : i32
    %c0_i32_1 = arith.constant 0 : i32
    return %arg0, %c0_i32, %c0_i32_0 : i32, i32, i32
  }
}

</mosaic_0001>

<llo_original>
// kernel: rdb_forward.1
$region0: #{rdb_forward.1}
  #allocation0 [shape = 'u32[]', space=smem, size = 0x4, offset = 0x4, fixed_abs, tag = 'smem constant byte address 0x4 - core index']
  #allocation1 [shape = 'u32[72,128]{1,0:T(1,128)}', space=vmem, size = 0x9000, scoped, tag = 'internal scratch']
  #allocation2 [shape = 'f32[288,512]{1,0:T(8,128)}', space=vmem, size = 0x90000, scoped, tag = 'scratch operand']
  %s0 = inlined_call_operand.vmem [shape: f32[9,1,512], index: 0, kind: input, shape index: {}]
  %s1 = inlined_call_operand.vmem [shape: f32[2,8,256], index: 1, kind: input, shape index: {}]
  %s2 = inlined_call_operand.vmem [shape: f32[3,8,288], index: 2, kind: input, shape index: {}]
  %s3 = inlined_call_operand.vmem [shape: f32[3,8,1], index: 3, kind: input, shape index: {}]
  %s4 = inlined_call_operand.vmem [shape: f32[8,32], index: 4, kind: input, shape index: {}]
  %s5 = inlined_call_operand.vmem [shape: f32[8,1], index: 5, kind: input, shape index: {}]
  %s6 = inlined_call_operand.vmem [shape: f32[2,8,256], index: 6, kind: output, shape index: {}]
  %s7 = sld [smem:[#allocation0]]
  $region34: #{rdb_forward.1} parent=0
    _
  %s9 = ssub.s32 1, %s7
  %s10 = scalar_select 0, %s9, %s7
  // Predicated region
  $region2: #{rdb_forward.1} parent=0 // pred_check
    _
  $region3: #{rdb_forward.1} parent=0 // pred_check_branch
    %12 = sbr.rel (0) target = $region5
  $region4: #{rdb_forward.1} parent=0 // pred_region
    _
  $region5: #{rdb_forward.1} parent=0 // pred_fallthru
    _
  // Predicated region
  $region6: #{rdb_forward.1} parent=0 // pred_check
    _
  $region7: #{rdb_forward.1} parent=0 // pred_check_branch
    %14 = sbr.rel (0) target = $region9
  $region8: #{rdb_forward.1} parent=0 // pred_region
    _
  $region9: #{rdb_forward.1} parent=0 // pred_fallthru
    _
  // Predicated region
  $region10: #{rdb_forward.1} parent=0 // pred_check
    _
  $region11: #{rdb_forward.1} parent=0 // pred_check_branch
    %16 = sbr.rel (0) target = $region13
  $region12: #{rdb_forward.1} parent=0 // pred_region
    _
  $region13: #{rdb_forward.1} parent=0 // pred_fallthru
    _
  // Predicated region
  $region14: #{rdb_forward.1} parent=0 // pred_check
    _
  $region15: #{rdb_forward.1} parent=0 // pred_check_branch
    %18 = sbr.rel (0) target = $region17
  $region16: #{rdb_forward.1} parent=0 // pred_region
    _
  $region17: #{rdb_forward.1} parent=0 // pred_fallthru
    _
  // Predicated region
  $region18: #{rdb_forward.1} parent=0 // pred_check
    _
  $region19: #{rdb_forward.1} parent=0 // pred_check_branch
    %20 = sbr.rel (0) target = $region21
  $region20: #{rdb_forward.1} parent=0 // pred_region
    _
  $region21: #{rdb_forward.1} parent=0 // pred_fallthru
    _
  // Predicated region
  $region22: #{rdb_forward.1} parent=0 // pred_check
    _
  $region23: #{rdb_forward.1} parent=0 // pred_check_branch
    %22 = sbr.rel (0) target = $region25
  $region24: #{rdb_forward.1} parent=0 // pred_region
    _
  $region25: #{rdb_forward.1} parent=0 // pred_fallthru
    _
  %23 = vst [vmem:[#allocation2] sm:$0xff] 0.0
  %24 = vst [vmem:[#allocation2 + $0x8] sm:$0xff] 0.0
  %25 = vst [vmem:[#allocation2 + $0x10] sm:$0xff] 0.0
  %26 = vst [vmem:[#allocation2 + $0x18] sm:$0xff] 0.0
  %27 = vst [vmem:[#allocation2 + $0x20] sm:$0xff] 0.0
  %28 = vst [vmem:[#allocation2 + $0x28] sm:$0xff] 0.0
  %29 = vst [vmem:[#allocation2 + $0x30] sm:$0xff] 0.0
  %30 = vst [vmem:[#allocation2 + $0x38] sm:$0xff] 0.0
  %31 = vst [vmem:[#allocation2 + $0x40] sm:$0xff] 0.0
  %32 = vst [vmem:[#allocation2 + $0x48] sm:$0xff] 0.0
  %33 = vst [vmem:[#allocation2 + $0x50] sm:$0xff] 0.0
  %34 = vst [vmem:[#allocation2 + $0x58] sm:$0xff] 0.0
  %35 = vst [vmem:[#allocation2 + $0x60] sm:$0xff] 0.0
  %36 = vst [vmem:[#allocation2 + $0x68] sm:$0xff] 0.0
  %37 = vst [vmem:[#allocation2 + $0x70] sm:$0xff] 0.0
  %38 = vst [vmem:[#allocation2 + $0x78] sm:$0xff] 0.0
  %39 = vst [vmem:[#allocation2 + $0x80] sm:$0xff] 0.0
  %40 = vst [vmem:[#allocation2 + $0x88] sm:$0xff] 0.0
  %41 = vst [vmem:[#allocation2 + $0x90] sm:$0xff] 0.0
  %42 = vst [vmem:[#allocation2 + $0x98] sm:$0xff] 0.0
  %43 = vst [vmem:[#allocation2 + $0xa0] sm:$0xff] 0.0
  %44 = vst [vmem:[#allocation2 + $0xa8] sm:$0xff] 0.0
  %45 = vst [vmem:[#allocation2 + $0xb0] sm:$0xff] 0.0
  %46 = vst [vmem:[#allocation2 + $0xb8] sm:$0xff] 0.0
  %47 = vst [vmem:[#allocation2 + $0xc0] sm:$0xff] 0.0
  %48 = vst [vmem:[#allocation2 + $0xc8] sm:$0xff] 0.0
  %49 = vst [vmem:[#allocation2 + $0xd0] sm:$0xff] 0.0
  %50 = vst [vmem:[#allocation2 + $0xd8] sm:$0xff] 0.0
  %51 = vst [vmem:[#allocation2 + $0xe0] sm:$0xff] 0.0
  %52 = vst [vmem:[#allocation2 + $0xe8] sm:$0xff] 0.0
  %53 = vst [vmem:[#allocation2 + $0xf0] sm:$0xff] 0.0
  %54 = vst [vmem:[#allocation2 + $0xf8] sm:$0xff] 0.0
  %55 = vst [vmem:[#allocation2 + $0x100] sm:$0xff] 0.0
  %56 = vst [vmem:[#allocation2 + $0x108] sm:$0xff] 0.0
  %57 = vst [vmem:[#allocation2 + $0x110] sm:$0xff] 0.0
  %58 = vst [vmem:[#allocation2 + $0x118] sm:$0xff] 0.0
  %59 = vst [vmem:[#allocation2 + $0x120] sm:$0xff] 0.0
  %60 = vst [vmem:[#allocation2 + $0x128] sm:$0xff] 0.0
  %61 = vst [vmem:[#allocation2 + $0x130] sm:$0xff] 0.0
  %62 = vst [vmem:[#allocation2 + $0x138] sm:$0xff] 0.0
  %63 = vst [vmem:[#allocation2 + $0x140] sm:$0xff] 0.0
  %64 = vst [vmem:[#allocation2 + $0x148] sm:$0xff] 0.0
  %65 = vst [vmem:[#allocation2 + $0x150] sm:$0xff] 0.0
  %66 = vst [vmem:[#allocation2 + $0x158] sm:$0xff] 0.0
  %67 = vst [vmem:[#allocation2 + $0x160] sm:$0xff] 0.0
  %68 = vst [vmem:[#allocation2 + $0x168] sm:$0xff] 0.0
  %69 = vst [vmem:[#allocation2 + $0x170] sm:$0xff] 0.0
  %70 = vst [vmem:[#allocation2 + $0x178] sm:$0xff] 0.0
  %71 = vst [vmem:[#allocation2 + $0x180] sm:$0xff] 0.0
  %72 = vst [vmem:[#allocation2 + $0x188] sm:$0xff] 0.0
  %73 = vst [vmem:[#allocation2 + $0x190] sm:$0xff] 0.0
  %74 = vst [vmem:[#allocation2 + $0x198] sm:$0xff] 0.0
  %75 = vst [vmem:[#allocation2 + $0x1a0] sm:$0xff] 0.0
  %76 = vst [vmem:[#allocation2 + $0x1a8] sm:$0xff] 0.0
  %77 = vst [vmem:[#allocation2 + $0x1b0] sm:$0xff] 0.0
  %78 = vst [vmem:[#allocation2 + $0x1b8] sm:$0xff] 0.0
  %79 = vst [vmem:[#allocation2 + $0x1c0] sm:$0xff] 0.0
  %80 = vst [vmem:[#allocation2 + $0x1c8] sm:$0xff] 0.0
  %81 = vst [vmem:[#allocation2 + $0x1d0] sm:$0xff] 0.0
  %82 = vst [vmem:[#allocation2 + $0x1d8] sm:$0xff] 0.0
  %83 = vst [vmem:[#allocation2 + $0x1e0] sm:$0xff] 0.0
  %84 = vst [vmem:[#allocation2 + $0x1e8] sm:$0xff] 0.0
  %85 = vst [vmem:[#allocation2 + $0x1f0] sm:$0xff] 0.0
  %86 = vst [vmem:[#allocation2 + $0x1f8] sm:$0xff] 0.0
  %87 = vst [vmem:[#allocation2 + $0x200] sm:$0xff] 0.0
  %88 = vst [vmem:[#allocation2 + $0x208] sm:$0xff] 0.0
  %89 = vst [vmem:[#allocation2 + $0x210] sm:$0xff] 0.0
  %90 = vst [vmem:[#allocation2 + $0x218] sm:$0xff] 0.0
  %91 = vst [vmem:[#allocation2 + $0x220] sm:$0xff] 0.0
  %92 = vst [vmem:[#allocation2 + $0x228] sm:$0xff] 0.0
  %93 = vst [vmem:[#allocation2 + $0x230] sm:$0xff] 0.0
  %94 = vst [vmem:[#allocation2 + $0x238] sm:$0xff] 0.0
  %95 = vst [vmem:[#allocation2 + $0x240] sm:$0xff] 0.0
  %96 = vst [vmem:[#allocation2 + $0x248] sm:$0xff] 0.0
  %97 = vst [vmem:[#allocation2 + $0x250] sm:$0xff] 0.0
  %98 = vst [vmem:[#allocation2 + $0x258] sm:$0xff] 0.0
  %99 = vst [vmem:[#allocation2 + $0x260] sm:$0xff] 0.0
  %100 = vst [vmem:[#allocation2 + $0x268] sm:$0xff] 0.0
  %101 = vst [vmem:[#allocation2 + $0x270] sm:$0xff] 0.0
  %102 = vst [vmem:[#allocation2 + $0x278] sm:$0xff] 0.0
  %103 = vst [vmem:[#allocation2 + $0x280] sm:$0xff] 0.0
  %104 = vst [vmem:[#allocation2 + $0x288] sm:$0xff] 0.0
  %105 = vst [vmem:[#allocation2 + $0x290] sm:$0xff] 0.0
  %106 = vst [vmem:[#allocation2 + $0x298] sm:$0xff] 0.0
  %107 = vst [vmem:[#allocation2 + $0x2a0] sm:$0xff] 0.0
  %108 = vst [vmem:[#allocation2 + $0x2a8] sm:$0xff] 0.0
  %109 = vst [vmem:[#allocation2 + $0x2b0] sm:$0xff] 0.0
  %110 = vst [vmem:[#allocation2 + $0x2b8] sm:$0xff] 0.0
  %111 = vst [vmem:[#allocation2 + $0x2c0] sm:$0xff] 0.0
  %112 = vst [vmem:[#allocation2 + $0x2c8] sm:$0xff] 0.0
  %113 = vst [vmem:[#allocation2 + $0x2d0] sm:$0xff] 0.0
  %114 = vst [vmem:[#allocation2 + $0x2d8] sm:$0xff] 0.0
  %115 = vst [vmem:[#allocation2 + $0x2e0] sm:$0xff] 0.0
  %116 = vst [vmem:[#allocation2 + $0x2e8] sm:$0xff] 0.0
  %117 = vst [vmem:[#allocation2 + $0x2f0] sm:$0xff] 0.0
  %118 = vst [vmem:[#allocation2 + $0x2f8] sm:$0xff] 0.0
  %119 = vst [vmem:[#allocation2 + $0x300] sm:$0xff] 0.0
  %120 = vst [vmem:[#allocation2 + $0x308] sm:$0xff] 0.0
  %121 = vst [vmem:[#allocation2 + $0x310] sm:$0xff] 0.0
  %122 = vst [vmem:[#allocation2 + $0x318] sm:$0xff] 0.0
  %123 = vst [vmem:[#allocation2 + $0x320] sm:$0xff] 0.0
  %124 = vst [vmem:[#allocation2 + $0x328] sm:$0xff] 0.0
  %125 = vst [vmem:[#allocation2 + $0x330] sm:$0xff] 0.0
  %126 = vst [vmem:[#allocation2 + $0x338] sm:$0xff] 0.0
  %127 = vst [vmem:[#allocation2 + $0x340] sm:$0xff] 0.0
  %128 = vst [vmem:[#allocation2 + $0x348] sm:$0xff] 0.0
  %129 = vst [vmem:[#allocation2 + $0x350] sm:$0xff] 0.0
  %130 = vst [vmem:[#allocation2 + $0x358] sm:$0xff] 0.0
  %131 = vst [vmem:[#allocation2 + $0x360] sm:$0xff] 0.0
  %132 = vst [vmem:[#allocation2 + $0x368] sm:$0xff] 0.0
  %133 = vst [vmem:[#allocation2 + $0x370] sm:$0xff] 0.0
  %134 = vst [vmem:[#allocation2 + $0x378] sm:$0xff] 0.0
  %135 = vst [vmem:[#allocation2 + $0x380] sm:$0xff] 0.0
  %136 = vst [vmem:[#allocation2 + $0x388] sm:$0xff] 0.0
  %137 = vst [vmem:[#allocation2 + $0x390] sm:$0xff] 0.0
  %138 = vst [vmem:[#allocation2 + $0x398] sm:$0xff] 0.0
  %139 = vst [vmem:[#allocation2 + $0x3a0] sm:$0xff] 0.0
  %140 = vst [vmem:[#allocation2 + $0x3a8] sm:$0xff] 0.0
  %141 = vst [vmem:[#allocation2 + $0x3b0] sm:$0xff] 0.0
  %142 = vst [vmem:[#allocation2 + $0x3b8] sm:$0xff] 0.0
  %143 = vst [vmem:[#allocation2 + $0x3c0] sm:$0xff] 0.0
  %144 = vst [vmem:[#allocation2 + $0x3c8] sm:$0xff] 0.0
  %145 = vst [vmem:[#allocation2 + $0x3d0] sm:$0xff] 0.0
  %146 = vst [vmem:[#allocation2 + $0x3d8] sm:$0xff] 0.0
  %147 = vst [vmem:[#allocation2 + $0x3e0] sm:$0xff] 0.0
  %148 = vst [vmem:[#allocation2 + $0x3e8] sm:$0xff] 0.0
  %149 = vst [vmem:[#allocation2 + $0x3f0] sm:$0xff] 0.0
  %150 = vst [vmem:[#allocation2 + $0x3f8] sm:$0xff] 0.0
  %151 = vst [vmem:[#allocation2 + $0x400] sm:$0xff] 0.0
  %152 = vst [vmem:[#allocation2 + $0x408] sm:$0xff] 0.0
  %153 = vst [vmem:[#allocation2 + $0x410] sm:$0xff] 0.0
  %154 = vst [vmem:[#allocation2 + $0x418] sm:$0xff] 0.0
  %155 = vst [vmem:[#allocation2 + $0x420] sm:$0xff] 0.0
  %156 = vst [vmem:[#allocation2 + $0x428] sm:$0xff] 0.0
  %157 = vst [vmem:[#allocation2 + $0x430] sm:$0xff] 0.0
  %158 = vst [vmem:[#allocation2 + $0x438] sm:$0xff] 0.0
  %159 = vst [vmem:[#allocation2 + $0x440] sm:$0xff] 0.0
  %160 = vst [vmem:[#allocation2 + $0x448] sm:$0xff] 0.0
  %161 = vst [vmem:[#allocation2 + $0x450] sm:$0xff] 0.0
  %162 = vst [vmem:[#allocation2 + $0x458] sm:$0xff] 0.0
  %163 = vst [vmem:[#allocation2 + $0x460] sm:$0xff] 0.0
  %164 = vst [vmem:[#allocation2 + $0x468] sm:$0xff] 0.0
  %165 = vst [vmem:[#allocation2 + $0x470] sm:$0xff] 0.0
  %166 = vst [vmem:[#allocation2 + $0x478] sm:$0xff] 0.0
  %v167 = vld [vmem:[%s0] sm:$0xf]
  %s168 = scalar_lea.vmem %s0, 4
  %v169 = vld [vmem:[%s168] sm:$0xf]
  %s170 = scalar_lea.vmem %s0, 8
  %v171 = vld [vmem:[%s170] sm:$0xf]
  %s172 = scalar_lea.vmem %s0, 12
  %v173 = vld [vmem:[%s172] sm:$0xf]
  %s174 = scalar_lea.vmem %s0, 20
  %v175 = vld [vmem:[%s174] sm:$0xf]
  %s176 = scalar_lea.vmem %s0, 24
  %v177 = vld [vmem:[%s176] sm:$0xf]
  %s178 = scalar_lea.vmem %s0, 28
  %v179 = vld [vmem:[%s178] sm:$0xf]
  %s180 = scalar_lea.vmem %s0, 32
  %v181 = vld [vmem:[%s180] sm:$0xf]
  %v182 = vld [vmem:[%s1] sm:$0xff]
  %v183 = vld [vmem:[%s1 + $0x8] sm:$0xff]
  %s184 = scalar_lea.vmem %s1, 16
  %v185 = vld [vmem:[%s184] sm:$0xff]
  %v186 = vld [vmem:[%s184 + $0x8] sm:$0xff]
  %187 = vrot.lane.b32.xlu0 %v182, 17
  %v188 = vpop.permute.xlu0 %187
  %189 = vrot.lane.b32.xlu0 %v183, 17
  %v190 = vpop.permute.xlu0 %189
  %191 = vrot.lane.b32.xlu0 %v185, 17
  %v192 = vpop.permute.xlu0 %191
  %193 = vrot.lane.b32.xlu0 %v186, 17
  %v194 = vpop.permute.xlu0 %193
  %v195 = vlaneseq
  %v196 = vand.u32 %v195, 127
  %vm197 = vcmp.lt.s32.totalorder %v196, 17
  %v198 = vsel %vm197, %v192, %v194
  %v199 = vsel %vm197, %v190, %v192
  %v200 = vsel %vm197, %v188, %v190
  %v201 = vsel %vm197, %v194, %v188
  %v203 = vperm.slane %v167, 0
  %v204 = vperm.slane %v167, 1
  %v205 = vperm.slane %v167, 2
  %v206 = vperm.slane %v167, 3
  %v211 = vmul.f32 %v201, %v203
  %v212 = vmul.f32 %v200, %v204
  %v213 = vmul.f32 %v199, %v205
  %v214 = vmul.f32 %v198, %v206
  %215 = vst [vmem:[#allocation2] sm:$0xff] %v211
  %216 = vst [vmem:[#allocation2 + $0x8] sm:$0xff] %v212
  %217 = vst [vmem:[#allocation2 + $0x10] sm:$0xff] %v213
  %218 = vst [vmem:[#allocation2 + $0x18] sm:$0xff] %v214
  %219 = vrot.lane.b32.xlu0 %v182, 16
  %v220 = vpop.permute.xlu0 %219
  %221 = vrot.lane.b32.xlu0 %v183, 16
  %v222 = vpop.permute.xlu0 %221
  %223 = vrot.lane.b32.xlu0 %v185, 16
  %v224 = vpop.permute.xlu0 %223
  %225 = vrot.lane.b32.xlu0 %v186, 16
  %v226 = vpop.permute.xlu0 %225
  %vm227 = vcmp.lt.s32.totalorder %v196, 16
  %v228 = vsel %vm227, %v224, %v226
  %v229 = vsel %vm227, %v222, %v224
  %v230 = vsel %vm227, %v220, %v222
  %v231 = vsel %vm227, %v226, %v220
  %v233 = vperm.slane %v169, 0
  %v234 = vperm.slane %v169, 1
  %v235 = vperm.slane %v169, 2
  %v236 = vperm.slane %v169, 3
  %v241 = vmul.f32 %v231, %v233
  %v242 = vmul.f32 %v230, %v234
  %v243 = vmul.f32 %v229, %v235
  %v244 = vmul.f32 %v228, %v236
  %245 = vst [vmem:[#allocation2 + $0x80] sm:$0xff] %v241
  %246 = vst [vmem:[#allocation2 + $0x88] sm:$0xff] %v242
  %247 = vst [vmem:[#allocation2 + $0x90] sm:$0xff] %v243
  %248 = vst [vmem:[#allocation2 + $0x98] sm:$0xff] %v244
  %249 = vrot.lane.b32.xlu0 %v182, 15
  %v250 = vpop.permute.xlu0 %249
  %251 = vrot.lane.b32.xlu0 %v183, 15
  %v252 = vpop.permute.xlu0 %251
  %253 = vrot.lane.b32.xlu0 %v185, 15
  %v254 = vpop.permute.xlu0 %253
  %255 = vrot.lane.b32.xlu0 %v186, 15
  %v256 = vpop.permute.xlu0 %255
  %vm257 = vcmp.lt.s32.totalorder %v196, 15
  %v258 = vsel %vm257, %v254, %v256
  %v259 = vsel %vm257, %v252, %v254
  %v260 = vsel %vm257, %v250, %v252
  %v261 = vsel %vm257, %v256, %v250
  %v263 = vperm.slane %v171, 0
  %v264 = vperm.slane %v171, 1
  %v265 = vperm.slane %v171, 2
  %v266 = vperm.slane %v171, 3
  %v271 = vmul.f32 %v261, %v263
  %v272 = vmul.f32 %v260, %v264
  %v273 = vmul.f32 %v259, %v265
  %v274 = vmul.f32 %v258, %v266
  %275 = vst [vmem:[#allocation2 + $0x100] sm:$0xff] %v271
  %276 = vst [vmem:[#allocation2 + $0x108] sm:$0xff] %v272
  %277 = vst [vmem:[#allocation2 + $0x110] sm:$0xff] %v273
  %278 = vst [vmem:[#allocation2 + $0x118] sm:$0xff] %v274
  %279 = vrot.lane.b32.xlu0 %v182, 1
  %v280 = vpop.permute.xlu0 %279
  %281 = vrot.lane.b32.xlu0 %v183, 1
  %v282 = vpop.permute.xlu0 %281
  %283 = vrot.lane.b32.xlu0 %v185, 1
  %v284 = vpop.permute.xlu0 %283
  %285 = vrot.lane.b32.xlu0 %v186, 1
  %v286 = vpop.permute.xlu0 %285
  %vm287 = vcmp.lt.s32.totalorder %v196, 1
  %v288 = vsel %vm287, %v284, %v286
  %v289 = vsel %vm287, %v282, %v284
  %v290 = vsel %vm287, %v280, %v282
  %v291 = vsel %vm287, %v286, %v280
  %v293 = vperm.slane %v173, 0
  %v294 = vperm.slane %v173, 1
  %v295 = vperm.slane %v173, 2
  %v296 = vperm.slane %v173, 3
  %v301 = vmul.f32 %v291, %v293
  %v302 = vmul.f32 %v290, %v294
  %v303 = vmul.f32 %v289, %v295
  %v304 = vmul.f32 %v288, %v296
  %305 = vst [vmem:[#allocation2 + $0x180] sm:$0xff] %v301
  %306 = vst [vmem:[#allocation2 + $0x188] sm:$0xff] %v302
  %307 = vst [vmem:[#allocation2 + $0x190] sm:$0xff] %v303
  %308 = vst [vmem:[#allocation2 + $0x198] sm:$0xff] %v304
  %309 = vst [vmem:[#allocation2 + $0x200] sm:$0xff] %v182
  %310 = vst [vmem:[#allocation2 + $0x208] sm:$0xff] %v183
  %311 = vst [vmem:[#allocation2 + $0x210] sm:$0xff] %v185
  %312 = vst [vmem:[#allocation2 + $0x218] sm:$0xff] %v186
  %313 = vrot.lane.b32.xlu0 %v182, 127
  %v314 = vpop.permute.xlu0 %313
  %315 = vrot.lane.b32.xlu0 %v183, 127
  %v316 = vpop.permute.xlu0 %315
  %317 = vrot.lane.b32.xlu0 %v185, 127
  %v318 = vpop.permute.xlu0 %317
  %319 = vrot.lane.b32.xlu0 %v186, 127
  %v320 = vpop.permute.xlu0 %319
  %vm321 = vcmp.lt.s32.totalorder %v196, 127
  %v322 = vsel %vm321, %v318, %v320
  %v323 = vsel %vm321, %v316, %v318
  %v324 = vsel %vm321, %v314, %v316
  %v325 = vsel %vm321, %v320, %v314
  %v327 = vperm.slane %v175, 0
  %v328 = vperm.slane %v175, 1
  %v329 = vperm.slane %v175, 2
  %v330 = vperm.slane %v175, 3
  %v335 = vmul.f32 %v324, %v327
  %v336 = vmul.f32 %v323, %v328
  %v337 = vmul.f32 %v322, %v329
  %v338 = vmul.f32 %v325, %v330
  %339 = vst [vmem:[#allocation2 + $0x280] sm:$0xff] %v335
  %340 = vst [vmem:[#allocation2 + $0x288] sm:$0xff] %v336
  %341 = vst [vmem:[#allocation2 + $0x290] sm:$0xff] %v337
  %342 = vst [vmem:[#allocation2 + $0x298] sm:$0xff] %v338
  %343 = vrot.lane.b32.xlu0 %v182, 113
  %v344 = vpop.permute.xlu0 %343
  %345 = vrot.lane.b32.xlu0 %v183, 113
  %v346 = vpop.permute.xlu0 %345
  %347 = vrot.lane.b32.xlu0 %v185, 113
  %v348 = vpop.permute.xlu0 %347
  %349 = vrot.lane.b32.xlu0 %v186, 113
  %v350 = vpop.permute.xlu0 %349
  %vm351 = vcmp.lt.s32.totalorder %v196, 113
  %v352 = vsel %vm351, %v348, %v350
  %v353 = vsel %vm351, %v346, %v348
  %v354 = vsel %vm351, %v344, %v346
  %v355 = vsel %vm351, %v350, %v344
  %v357 = vperm.slane %v177, 0
  %v358 = vperm.slane %v177, 1
  %v359 = vperm.slane %v177, 2
  %v360 = vperm.slane %v177, 3
  %v365 = vmul.f32 %v354, %v357
  %v366 = vmul.f32 %v353, %v358
  %v367 = vmul.f32 %v352, %v359
  %v368 = vmul.f32 %v355, %v360
  %369 = vst [vmem:[#allocation2 + $0x300] sm:$0xff] %v365
  %370 = vst [vmem:[#allocation2 + $0x308] sm:$0xff] %v366
  %371 = vst [vmem:[#allocation2 + $0x310] sm:$0xff] %v367
  %372 = vst [vmem:[#allocation2 + $0x318] sm:$0xff] %v368
  %373 = vrot.lane.b32.xlu0 %v182, 112
  %v374 = vpop.permute.xlu0 %373
  %375 = vrot.lane.b32.xlu0 %v183, 112
  %v376 = vpop.permute.xlu0 %375
  %377 = vrot.lane.b32.xlu0 %v185, 112
  %v378 = vpop.permute.xlu0 %377
  %379 = vrot.lane.b32.xlu0 %v186, 112
  %v380 = vpop.permute.xlu0 %379
  %vm381 = vcmp.lt.s32.totalorder %v196, 112
  %v382 = vsel %vm381, %v378, %v380
  %v383 = vsel %vm381, %v376, %v378
  %v384 = vsel %vm381, %v374, %v376
  %v385 = vsel %vm381, %v380, %v374
  %v387 = vperm.slane %v179, 0
  %v388 = vperm.slane %v179, 1
  %v389 = vperm.slane %v179, 2
  %v390 = vperm.slane %v179, 3
  %v395 = vmul.f32 %v384, %v387
  %v396 = vmul.f32 %v383, %v388
  %v397 = vmul.f32 %v382, %v389
  %v398 = vmul.f32 %v385, %v390
  %399 = vst [vmem:[#allocation2 + $0x380] sm:$0xff] %v395
  %400 = vst [vmem:[#allocation2 + $0x388] sm:$0xff] %v396
  %401 = vst [vmem:[#allocation2 + $0x390] sm:$0xff] %v397
  %402 = vst [vmem:[#allocation2 + $0x398] sm:$0xff] %v398
  %403 = vrot.lane.b32.xlu0 %v182, 111
  %v404 = vpop.permute.xlu0 %403
  %405 = vrot.lane.b32.xlu0 %v183, 111
  %v406 = vpop.permute.xlu0 %405
  %407 = vrot.lane.b32.xlu0 %v185, 111
  %v408 = vpop.permute.xlu0 %407
  %409 = vrot.lane.b32.xlu0 %v186, 111
  %v410 = vpop.permute.xlu0 %409
  %vm411 = vcmp.lt.s32.totalorder %v196, 111
  %v412 = vsel %vm411, %v408, %v410
  %v413 = vsel %vm411, %v406, %v408
  %v414 = vsel %vm411, %v404, %v406
  %v415 = vsel %vm411, %v410, %v404
  %v417 = vperm.slane %v181, 0
  %v418 = vperm.slane %v181, 1
  %v419 = vperm.slane %v181, 2
  %v420 = vperm.slane %v181, 3
  %v425 = vmul.f32 %v414, %v417
  %v426 = vmul.f32 %v413, %v418
  %v427 = vmul.f32 %v412, %v419
  %v428 = vmul.f32 %v415, %v420
  %429 = vst [vmem:[#allocation2 + $0x400] sm:$0xff] %v425
  %430 = vst [vmem:[#allocation2 + $0x408] sm:$0xff] %v426
  %431 = vst [vmem:[#allocation2 + $0x410] sm:$0xff] %v427
  %432 = vst [vmem:[#allocation2 + $0x418] sm:$0xff] %v428
  %v433 = vld [vmem:[%s2] sm:$0xff]
  %v434 = vld [vmem:[%s2 + $0x8] sm:$0xff]
  %v435 = vld [vmem:[%s2 + $0x10] sm:$0xff]
  %v436 = vld [vmem:[#allocation2] sm:$0xff]
  %v437 = vld [vmem:[#allocation2 + $0x8] sm:$0xff]
  %v438 = vld [vmem:[#allocation2 + $0x10] sm:$0xff]
  %v439 = vld [vmem:[#allocation2 + $0x18] sm:$0xff]
  %v440 = vld [vmem:[#allocation2 + $0x20] sm:$0xff]
  %v441 = vld [vmem:[#allocation2 + $0x28] sm:$0xff]
  %v442 = vld [vmem:[#allocation2 + $0x30] sm:$0xff]
  %v443 = vld [vmem:[#allocation2 + $0x38] sm:$0xff]
  %v444 = vld [vmem:[#allocation2 + $0x40] sm:$0xff]
  %v445 = vld [vmem:[#allocation2 + $0x48] sm:$0xff]
  %v446 = vld [vmem:[#allocation2 + $0x50] sm:$0xff]
  %v447 = vld [vmem:[#allocation2 + $0x58] sm:$0xff]
  %v448 = vld [vmem:[#allocation2 + $0x60] sm:$0xff]
  %v449 = vld [vmem:[#allocation2 + $0x68] sm:$0xff]
  %v450 = vld [vmem:[#allocation2 + $0x70] sm:$0xff]
  %v451 = vld [vmem:[#allocation2 + $0x78] sm:$0xff]
  %v452 = vld [vmem:[#allocation2 + $0x80] sm:$0xff]
  %v453 = vld [vmem:[#allocation2 + $0x88] sm:$0xff]
  %v454 = vld [vmem:[#allocation2 + $0x90] sm:$0xff]
  %v455 = vld [vmem:[#allocation2 + $0x98] sm:$0xff]
  %v456 = vld [vmem:[#allocation2 + $0xa0] sm:$0xff]
  %v457 = vld [vmem:[#allocation2 + $0xa8] sm:$0xff]
  %v458 = vld [vmem:[#allocation2 + $0xb0] sm:$0xff]
  %v459 = vld [vmem:[#allocation2 + $0xb8] sm:$0xff]
  %v460 = vld [vmem:[#allocation2 + $0xc0] sm:$0xff]
  %v461 = vld [vmem:[#allocation2 + $0xc8] sm:$0xff]
  %v462 = vld [vmem:[#allocation2 + $0xd0] sm:$0xff]
  %v463 = vld [vmem:[#allocation2 + $0xd8] sm:$0xff]
  %v464 = vld [vmem:[#allocation2 + $0xe0] sm:$0xff]
  %v465 = vld [vmem:[#allocation2 + $0xe8] sm:$0xff]
  %v466 = vld [vmem:[#allocation2 + $0xf0] sm:$0xff]
  %v467 = vld [vmem:[#allocation2 + $0xf8] sm:$0xff]
  %v468 = vld [vmem:[#allocation2 + $0x100] sm:$0xff]
  %v469 = vld [vmem:[#allocation2 + $0x108] sm:$0xff]
  %v470 = vld [vmem:[#allocation2 + $0x110] sm:$0xff]
  %v471 = vld [vmem:[#allocation2 + $0x118] sm:$0xff]
  %v472 = vld [vmem:[#allocation2 + $0x120] sm:$0xff]
  %v473 = vld [vmem:[#allocation2 + $0x128] sm:$0xff]
  %v474 = vld [vmem:[#allocation2 + $0x130] sm:$0xff]
  %v475 = vld [vmem:[#allocation2 + $0x138] sm:$0xff]
  %v476 = vld [vmem:[#allocation2 + $0x140] sm:$0xff]
  %v477 = vld [vmem:[#allocation2 + $0x148] sm:$0xff]
  %v478 = vld [vmem:[#allocation2 + $0x150] sm:$0xff]
  %v479 = vld [vmem:[#allocation2 + $0x158] sm:$0xff]
  %v480 = vld [vmem:[#allocation2 + $0x160] sm:$0xff]
  %v481 = vld [vmem:[#allocation2 + $0x168] sm:$0xff]
  %v482 = vld [vmem:[#allocation2 + $0x170] sm:$0xff]
  %v483 = vld [vmem:[#allocation2 + $0x178] sm:$0xff]
  %v484 = vld [vmem:[#allocation2 + $0x180] sm:$0xff]
  %v485 = vld [vmem:[#allocation2 + $0x188] sm:$0xff]
  %v486 = vld [vmem:[#allocation2 + $0x190] sm:$0xff]
  %v487 = vld [vmem:[#allocation2 + $0x198] sm:$0xff]
  %v488 = vld [vmem:[#allocation2 + $0x1a0] sm:$0xff]
  %v489 = vld [vmem:[#allocation2 + $0x1a8] sm:$0xff]
  %v490 = vld [vmem:[#allocation2 + $0x1b0] sm:$0xff]
  %v491 = vld [vmem:[#allocation2 + $0x1b8] sm:$0xff]
  %v492 = vld [vmem:[#allocation2 + $0x1c0] sm:$0xff]
  %v493 = vld [vmem:[#allocation2 + $0x1c8] sm:$0xff]
  %v494 = vld [vmem:[#allocation2 + $0x1d0] sm:$0xff]
  %v495 = vld [vmem:[#allocation2 + $0x1d8] sm:$0xff]
  %v496 = vld [vmem:[#allocation2 + $0x1e0] sm:$0xff]
  %v497 = vld [vmem:[#allocation2 + $0x1e8] sm:$0xff]
  %v498 = vld [vmem:[#allocation2 + $0x1f0] sm:$0xff]
  %v499 = vld [vmem:[#allocation2 + $0x1f8] sm:$0xff]
  %v500 = vld [vmem:[#allocation2 + $0x200] sm:$0xff]
  %v501 = vld [vmem:[#allocation2 + $0x208] sm:$0xff]
  %v502 = vld [vmem:[#allocation2 + $0x210] sm:$0xff]
  %v503 = vld [vmem:[#allocation2 + $0x218] sm:$0xff]
  %v504 = vld [vmem:[#allocation2 + $0x220] sm:$0xff]
  %v505 = vld [vmem:[#allocation2 + $0x228] sm:$0xff]
  %v506 = vld [vmem:[#allocation2 + $0x230] sm:$0xff]
  %v507 = vld [vmem:[#allocation2 + $0x238] sm:$0xff]
  %v508 = vld [vmem:[#allocation2 + $0x240] sm:$0xff]
  %v509 = vld [vmem:[#allocation2 + $0x248] sm:$0xff]
  %v510 = vld [vmem:[#allocation2 + $0x250] sm:$0xff]
  %v511 = vld [vmem:[#allocation2 + $0x258] sm:$0xff]
  %v512 = vld [vmem:[#allocation2 + $0x260] sm:$0xff]
  %v513 = vld [vmem:[#allocation2 + $0x268] sm:$0xff]
  %v514 = vld [vmem:[#allocation2 + $0x270] sm:$0xff]
  %v515 = vld [vmem:[#allocation2 + $0x278] sm:$0xff]
  %v516 = vld [vmem:[#allocation2 + $0x280] sm:$0xff]
  %v517 = vld [vmem:[#allocation2 + $0x288] sm:$0xff]
  %v518 = vld [vmem:[#allocation2 + $0x290] sm:$0xff]
  %v519 = vld [vmem:[#allocation2 + $0x298] sm:$0xff]
  %v520 = vld [vmem:[#allocation2 + $0x2a0] sm:$0xff]
  %v521 = vld [vmem:[#allocation2 + $0x2a8] sm:$0xff]
  %v522 = vld [vmem:[#allocation2 + $0x2b0] sm:$0xff]
  %v523 = vld [vmem:[#allocation2 + $0x2b8] sm:$0xff]
  %v524 = vld [vmem:[#allocation2 + $0x2c0] sm:$0xff]
  %v525 = vld [vmem:[#allocation2 + $0x2c8] sm:$0xff]
  %v526 = vld [vmem:[#allocation2 + $0x2d0] sm:$0xff]
  %v527 = vld [vmem:[#allocation2 + $0x2d8] sm:$0xff]
  %v528 = vld [vmem:[#allocation2 + $0x2e0] sm:$0xff]
  %v529 = vld [vmem:[#allocation2 + $0x2e8] sm:$0xff]
  %v530 = vld [vmem:[#allocation2 + $0x2f0] sm:$0xff]
  %v531 = vld [vmem:[#allocation2 + $0x2f8] sm:$0xff]
  %v532 = vld [vmem:[#allocation2 + $0x300] sm:$0xff]
  %v533 = vld [vmem:[#allocation2 + $0x308] sm:$0xff]
  %v534 = vld [vmem:[#allocation2 + $0x310] sm:$0xff]
  %v535 = vld [vmem:[#allocation2 + $0x318] sm:$0xff]
  %v536 = vld [vmem:[#allocation2 + $0x320] sm:$0xff]
  %v537 = vld [vmem:[#allocation2 + $0x328] sm:$0xff]
  %v538 = vld [vmem:[#allocation2 + $0x330] sm:$0xff]
  %v539 = vld [vmem:[#allocation2 + $0x338] sm:$0xff]
  %v540 = vld [vmem:[#allocation2 + $0x340] sm:$0xff]
  %v541 = vld [vmem:[#allocation2 + $0x348] sm:$0xff]
  %v542 = vld [vmem:[#allocation2 + $0x350] sm:$0xff]
  %v543 = vld [vmem:[#allocation2 + $0x358] sm:$0xff]
  %v544 = vld [vmem:[#allocation2 + $0x360] sm:$0xff]
  %v545 = vld [vmem:[#allocation2 + $0x368] sm:$0xff]
  %v546 = vld [vmem:[#allocation2 + $0x370] sm:$0xff]
  %v547 = vld [vmem:[#allocation2 + $0x378] sm:$0xff]
  %v548 = vld [vmem:[#allocation2 + $0x380] sm:$0xff]
  %v549 = vld [vmem:[#allocation2 + $0x388] sm:$0xff]
  %v550 = vld [vmem:[#allocation2 + $0x390] sm:$0xff]
  %v551 = vld [vmem:[#allocation2 + $0x398] sm:$0xff]
  %v552 = vld [vmem:[#allocation2 + $0x3a0] sm:$0xff]
  %v553 = vld [vmem:[#allocation2 + $0x3a8] sm:$0xff]
  %v554 = vld [vmem:[#allocation2 + $0x3b0] sm:$0xff]
  %v555 = vld [vmem:[#allocation2 + $0x3b8] sm:$0xff]
  %v556 = vld [vmem:[#allocation2 + $0x3c0] sm:$0xff]
  %v557 = vld [vmem:[#allocation2 + $0x3c8] sm:$0xff]
  %v558 = vld [vmem:[#allocation2 + $0x3d0] sm:$0xff]
  %v559 = vld [vmem:[#allocation2 + $0x3d8] sm:$0xff]
  %v560 = vld [vmem:[#allocation2 + $0x3e0] sm:$0xff]
  %v561 = vld [vmem:[#allocation2 + $0x3e8] sm:$0xff]
  %v562 = vld [vmem:[#allocation2 + $0x3f0] sm:$0xff]
  %v563 = vld [vmem:[#allocation2 + $0x3f8] sm:$0xff]
  %v564 = vld [vmem:[#allocation2 + $0x400] sm:$0xff]
  %v565 = vld [vmem:[#allocation2 + $0x408] sm:$0xff]
  %v566 = vld [vmem:[#allocation2 + $0x410] sm:$0xff]
  %v567 = vld [vmem:[#allocation2 + $0x418] sm:$0xff]
  %v568 = vld [vmem:[#allocation2 + $0x420] sm:$0xff]
  %v569 = vld [vmem:[#allocation2 + $0x428] sm:$0xff]
  %v570 = vld [vmem:[#allocation2 + $0x430] sm:$0xff]
  %v571 = vld [vmem:[#allocation2 + $0x438] sm:$0xff]
  %v572 = vld [vmem:[#allocation2 + $0x440] sm:$0xff]
  %v573 = vld [vmem:[#allocation2 + $0x448] sm:$0xff]
  %v574 = vld [vmem:[#allocation2 + $0x450] sm:$0xff]
  %v575 = vld [vmem:[#allocation2 + $0x458] sm:$0xff]
  %v576 = vld [vmem:[#allocation2 + $0x460] sm:$0xff]
  %v577 = vld [vmem:[#allocation2 + $0x468] sm:$0xff]
  %v578 = vld [vmem:[#allocation2 + $0x470] sm:$0xff]
  %v579 = vld [vmem:[#allocation2 + $0x478] sm:$0xff]
  %v580 = vld [vmem:[%s3] sm:$0xff]
  %582 = vset.pattern.permute.xlu0 0
  %583 = vperm.xlu0 %582, %v580
  %v584 = vpop.permute.xlu0 %583
  %vm586 = vcmask 261120
  %v588 = vsel %vm586, %v435, 0
  %590 = vmatpush.msra.mxu0 %v496
  %591 = vmatpush.msra.mxu0 %v492
  %592 = vmatpush.msra.mxu0 %v488
  %593 = vmatpush.msra.mxu0 %v484
  %594 = vmatpush.msra.mxu0 %v480
  %595 = vmatpush.msra.mxu0 %v476
  %596 = vmatpush.msra.mxu0 %v472
  %597 = vmatpush.msra.mxu0 %v468
  %598 = vmatpush.msra.mxu0 %v464
  %599 = vmatpush.msra.mxu0 %v460
  %600 = vmatpush.msra.mxu0 %v456
  %601 = vmatpush.msra.mxu0 %v452
  %602 = vmatpush.msra.mxu0 %v448
  %603 = vmatpush.msra.mxu0 %v444
  %604 = vmatpush.msra.mxu0 %v440
  %605 = vmatpush.msra.mxu0 %v436
  %606 = vmatmul.f32.gmra.mxu0 %v433
  %v607 = vpop.f32.mrf.mxu0
  %v608 = vadd.f32 %v584, %v607
  %609 = vdwg.mxu0
  %610 = vmatpush.msra.mxu0 %v560
  %611 = vmatpush.msra.mxu0 %v556
  %612 = vmatpush.msra.mxu0 %v552
  %613 = vmatpush.msra.mxu0 %v548
  %614 = vmatpush.msra.mxu0 %v544
  %615 = vmatpush.msra.mxu0 %v540
  %616 = vmatpush.msra.mxu0 %v536
  %617 = vmatpush.msra.mxu0 %v532
  %618 = vmatpush.msra.mxu0 %v528
  %619 = vmatpush.msra.mxu0 %v524
  %620 = vmatpush.msra.mxu0 %v520
  %621 = vmatpush.msra.mxu0 %v516
  %622 = vmatpush.msra.mxu0 %v512
  %623 = vmatpush.msra.mxu0 %v508
  %624 = vmatpush.msra.mxu0 %v504
  %625 = vmatpush.msra.mxu0 %v500
  %626 = vmatmul.f32.gmra.mxu0 %v434
  %v627 = vpop.f32.mrf.mxu0
  %v628 = vadd.f32 %v608, %v627
  %629 = vdwg.mxu0
  %630 = vmatpush.msra.mxu0 0.0
  %631 = vmatpush.msra.mxu0 0.0
  %632 = vmatpush.msra.mxu0 0.0
  %633 = vmatpush.msra.mxu0 0.0
  %634 = vmatpush.msra.mxu0 0.0
  %635 = vmatpush.msra.mxu0 0.0
  %636 = vmatpush.msra.mxu0 0.0
  %637 = vmatpush.msra.mxu0 0.0
  %638 = vmatpush.msra.mxu0 0.0
  %639 = vmatpush.msra.mxu0 0.0
  %640 = vmatpush.msra.mxu0 0.0
  %641 = vmatpush.msra.mxu0 0.0
  %642 = vmatpush.msra.mxu0 %v576
  %643 = vmatpush.msra.mxu0 %v572
  %644 = vmatpush.msra.mxu0 %v568
  %645 = vmatpush.msra.mxu0 %v564
  %646 = vmatmul.f32.gmra.mxu0 %v588
  %v647 = vpop.f32.mrf.mxu0
  %v648 = vadd.f32 %v628, %v647
  %649 = vdwg.mxu0
  %650 = vmatpush.msra.mxu0 %v497
  %651 = vmatpush.msra.mxu0 %v493
  %652 = vmatpush.msra.mxu0 %v489
  %653 = vmatpush.msra.mxu0 %v485
  %654 = vmatpush.msra.mxu0 %v481
  %655 = vmatpush.msra.mxu0 %v477
  %656 = vmatpush.msra.mxu0 %v473
  %657 = vmatpush.msra.mxu0 %v469
  %658 = vmatpush.msra.mxu0 %v465
  %659 = vmatpush.msra.mxu0 %v461
  %660 = vmatpush.msra.mxu0 %v457
  %661 = vmatpush.msra.mxu0 %v453
  %662 = vmatpush.msra.mxu0 %v449
  %663 = vmatpush.msra.mxu0 %v445
  %664 = vmatpush.msra.mxu0 %v441
  %665 = vmatpush.msra.mxu0 %v437
  %666 = vmatmul.f32.gmra.mxu0 %v433
  %v667 = vpop.f32.mrf.mxu0
  %v668 = vadd.f32 %v584, %v667
  %669 = vdwg.mxu0
  %670 = vmatpush.msra.mxu0 %v561
  %671 = vmatpush.msra.mxu0 %v557
  %672 = vmatpush.msra.mxu0 %v553
  %673 = vmatpush.msra.mxu0 %v549
  %674 = vmatpush.msra.mxu0 %v545
  %675 = vmatpush.msra.mxu0 %v541
  %676 = vmatpush.msra.mxu0 %v537
  %677 = vmatpush.msra.mxu0 %v533
  %678 = vmatpush.msra.mxu0 %v529
  %679 = vmatpush.msra.mxu0 %v525
  %680 = vmatpush.msra.mxu0 %v521
  %681 = vmatpush.msra.mxu0 %v517
  %682 = vmatpush.msra.mxu0 %v513
  %683 = vmatpush.msra.mxu0 %v509
  %684 = vmatpush.msra.mxu0 %v505
  %685 = vmatpush.msra.mxu0 %v501
  %686 = vmatmul.f32.gmra.mxu0 %v434
  %v687 = vpop.f32.mrf.mxu0
  %v688 = vadd.f32 %v668, %v687
  %689 = vdwg.mxu0
  %690 = vmatpush.msra.mxu0 0.0
  %691 = vmatpush.msra.mxu0 0.0
  %692 = vmatpush.msra.mxu0 0.0
  %693 = vmatpush.msra.mxu0 0.0
  %694 = vmatpush.msra.mxu0 0.0
  %695 = vmatpush.msra.mxu0 0.0
  %696 = vmatpush.msra.mxu0 0.0
  %697 = vmatpush.msra.mxu0 0.0
  %698 = vmatpush.msra.mxu0 0.0
  %699 = vmatpush.msra.mxu0 0.0
  %700 = vmatpush.msra.mxu0 0.0
  %701 = vmatpush.msra.mxu0 0.0
  %702 = vmatpush.msra.mxu0 %v577
  %703 = vmatpush.msra.mxu0 %v573
  %704 = vmatpush.msra.mxu0 %v569
  %705 = vmatpush.msra.mxu0 %v565
  %706 = vmatmul.f32.gmra.mxu0 %v588
  %v707 = vpop.f32.mrf.mxu0
  %v708 = vadd.f32 %v688, %v707
  %709 = vdwg.mxu0
  %710 = vmatpush.msra.mxu0 %v498
  %711 = vmatpush.msra.mxu0 %v494
  %712 = vmatpush.msra.mxu0 %v490
  %713 = vmatpush.msra.mxu0 %v486
  %714 = vmatpush.msra.mxu0 %v482
  %715 = vmatpush.msra.mxu0 %v478
  %716 = vmatpush.msra.mxu0 %v474
  %717 = vmatpush.msra.mxu0 %v470
  %718 = vmatpush.msra.mxu0 %v466
  %719 = vmatpush.msra.mxu0 %v462
  %720 = vmatpush.msra.mxu0 %v458
  %721 = vmatpush.msra.mxu0 %v454
  %722 = vmatpush.msra.mxu0 %v450
  %723 = vmatpush.msra.mxu0 %v446
  %724 = vmatpush.msra.mxu0 %v442
  %725 = vmatpush.msra.mxu0 %v438
  %726 = vmatmul.f32.gmra.mxu0 %v433
  %v727 = vpop.f32.mrf.mxu0
  %v728 = vadd.f32 %v584, %v727
  %729 = vdwg.mxu0
  %730 = vmatpush.msra.mxu0 %v562
  %731 = vmatpush.msra.mxu0 %v558
  %732 = vmatpush.msra.mxu0 %v554
  %733 = vmatpush.msra.mxu0 %v550
  %734 = vmatpush.msra.mxu0 %v546
  %735 = vmatpush.msra.mxu0 %v542
  %736 = vmatpush.msra.mxu0 %v538
  %737 = vmatpush.msra.mxu0 %v534
  %738 = vmatpush.msra.mxu0 %v530
  %739 = vmatpush.msra.mxu0 %v526
  %740 = vmatpush.msra.mxu0 %v522
  %741 = vmatpush.msra.mxu0 %v518
  %742 = vmatpush.msra.mxu0 %v514
  %743 = vmatpush.msra.mxu0 %v510
  %744 = vmatpush.msra.mxu0 %v506
  %745 = vmatpush.msra.mxu0 %v502
  %746 = vmatmul.f32.gmra.mxu0 %v434
  %v747 = vpop.f32.mrf.mxu0
  %v748 = vadd.f32 %v728, %v747
  %749 = vdwg.mxu0
  %750 = vmatpush.msra.mxu0 0.0
  %751 = vmatpush.msra.mxu0 0.0
  %752 = vmatpush.msra.mxu0 0.0
  %753 = vmatpush.msra.mxu0 0.0
  %754 = vmatpush.msra.mxu0 0.0
  %755 = vmatpush.msra.mxu0 0.0
  %756 = vmatpush.msra.mxu0 0.0
  %757 = vmatpush.msra.mxu0 0.0
  %758 = vmatpush.msra.mxu0 0.0
  %759 = vmatpush.msra.mxu0 0.0
  %760 = vmatpush.msra.mxu0 0.0
  %761 = vmatpush.msra.mxu0 0.0
  %762 = vmatpush.msra.mxu0 %v578
  %763 = vmatpush.msra.mxu0 %v574
  %764 = vmatpush.msra.mxu0 %v570
  %765 = vmatpush.msra.mxu0 %v566
  %766 = vmatmul.f32.gmra.mxu0 %v588
  %v767 = vpop.f32.mrf.mxu0
  %v768 = vadd.f32 %v748, %v767
  %769 = vdwg.mxu0
  %770 = vmatpush.msra.mxu0 %v499
  %771 = vmatpush.msra.mxu0 %v495
  %772 = vmatpush.msra.mxu0 %v491
  %773 = vmatpush.msra.mxu0 %v487
  %774 = vmatpush.msra.mxu0 %v483
  %775 = vmatpush.msra.mxu0 %v479
  %776 = vmatpush.msra.mxu0 %v475
  %777 = vmatpush.msra.mxu0 %v471
  %778 = vmatpush.msra.mxu0 %v467
  %779 = vmatpush.msra.mxu0 %v463
  %780 = vmatpush.msra.mxu0 %v459
  %781 = vmatpush.msra.mxu0 %v455
  %782 = vmatpush.msra.mxu0 %v451
  %783 = vmatpush.msra.mxu0 %v447
  %784 = vmatpush.msra.mxu0 %v443
  %785 = vmatpush.msra.mxu0 %v439
  %786 = vmatmul.f32.gmra.mxu0 %v433
  %v787 = vpop.f32.mrf.mxu0
  %v788 = vadd.f32 %v584, %v787
  %789 = vdwg.mxu0
  %790 = vmatpush.msra.mxu0 %v563
  %791 = vmatpush.msra.mxu0 %v559
  %792 = vmatpush.msra.mxu0 %v555
  %793 = vmatpush.msra.mxu0 %v551
  %794 = vmatpush.msra.mxu0 %v547
  %795 = vmatpush.msra.mxu0 %v543
  %796 = vmatpush.msra.mxu0 %v539
  %797 = vmatpush.msra.mxu0 %v535
  %798 = vmatpush.msra.mxu0 %v531
  %799 = vmatpush.msra.mxu0 %v527
  %800 = vmatpush.msra.mxu0 %v523
  %801 = vmatpush.msra.mxu0 %v519
  %802 = vmatpush.msra.mxu0 %v515
  %803 = vmatpush.msra.mxu0 %v511
  %804 = vmatpush.msra.mxu0 %v507
  %805 = vmatpush.msra.mxu0 %v503
  %806 = vmatmul.f32.gmra.mxu0 %v434
  %v807 = vpop.f32.mrf.mxu0
  %v808 = vadd.f32 %v788, %v807
  %809 = vdwg.mxu0
  %810 = vmatpush.msra.mxu0 0.0
  %811 = vmatpush.msra.mxu0 0.0
  %812 = vmatpush.msra.mxu0 0.0
  %813 = vmatpush.msra.mxu0 0.0
  %814 = vmatpush.msra.mxu0 0.0
  %815 = vmatpush.msra.mxu0 0.0
  %816 = vmatpush.msra.mxu0 0.0
  %817 = vmatpush.msra.mxu0 0.0
  %818 = vmatpush.msra.mxu0 0.0
  %819 = vmatpush.msra.mxu0 0.0
  %820 = vmatpush.msra.mxu0 0.0
  %821 = vmatpush.msra.mxu0 0.0
  %822 = vmatpush.msra.mxu0 %v579
  %823 = vmatpush.msra.mxu0 %v575
  %824 = vmatpush.msra.mxu0 %v571
  %825 = vmatpush.msra.mxu0 %v567
  %826 = vmatmul.f32.gmra.mxu0 %v588
  %v827 = vpop.f32.mrf.mxu0
  %v828 = vadd.f32 %v808, %v827
  %829 = vdwg.mxu0
  %v830 = vmax.f32 %v648, 0.0
  %v831 = vmax.f32 %v708, 0.0
  %v832 = vmax.f32 %v768, 0.0
  %v833 = vmax.f32 %v828, 0.0
  %834 = vrot.lane.b32.xlu0 %v830, 17
  %v835 = vpop.permute.xlu0 %834
  %836 = vrot.lane.b32.xlu0 %v831, 17
  %v837 = vpop.permute.xlu0 %836
  %838 = vrot.lane.b32.xlu0 %v832, 17
  %v839 = vpop.permute.xlu0 %838
  %840 = vrot.lane.b32.xlu0 %v833, 17
  %v841 = vpop.permute.xlu0 %840
  %v842 = vsel %vm197, %v839, %v841
  %v843 = vsel %vm197, %v837, %v839
  %v844 = vsel %vm197, %v835, %v837
  %v845 = vsel %vm197, %v841, %v835
  %v846 = vmul.f32 %v845, %v203
  %v847 = vmul.f32 %v844, %v204
  %v848 = vmul.f32 %v843, %v205
  %v849 = vmul.f32 %v842, %v206
  %850 = vst [vmem:[#allocation2 + $0x20] sm:$0xff] %v846
  %851 = vst [vmem:[#allocation2 + $0x28] sm:$0xff] %v847
  %852 = vst [vmem:[#allocation2 + $0x30] sm:$0xff] %v848
  %853 = vst [vmem:[#allocation2 + $0x38] sm:$0xff] %v849
  %854 = vrot.lane.b32.xlu0 %v830, 16
  %v855 = vpop.permute.xlu0 %854
  %856 = vrot.lane.b32.xlu0 %v831, 16
  %v857 = vpop.permute.xlu0 %856
  %858 = vrot.lane.b32.xlu0 %v832, 16
  %v859 = vpop.permute.xlu0 %858
  %860 = vrot.lane.b32.xlu0 %v833, 16
  %v861 = vpop.permute.xlu0 %860
  %v862 = vsel %vm227, %v859, %v861
  %v863 = vsel %vm227, %v857, %v859
  %v864 = vsel %vm227, %v855, %v857
  %v865 = vsel %vm227, %v861, %v855
  %v866 = vmul.f32 %v865, %v233
  %v867 = vmul.f32 %v864, %v234
  %v868 = vmul.f32 %v863, %v235
  %v869 = vmul.f32 %v862, %v236
  %870 = vst [vmem:[#allocation2 + $0xa0] sm:$0xff] %v866
  %871 = vst [vmem:[#allocation2 + $0xa8] sm:$0xff] %v867
  %872 = vst [vmem:[#allocation2 + $0xb0] sm:$0xff] %v868
  %873 = vst [vmem:[#allocation2 + $0xb8] sm:$0xff] %v869
  %874 = vrot.lane.b32.xlu0 %v830, 15
  %v875 = vpop.permute.xlu0 %874
  %876 = vrot.lane.b32.xlu0 %v831, 15
  %v877 = vpop.permute.xlu0 %876
  %878 = vrot.lane.b32.xlu0 %v832, 15
  %v879 = vpop.permute.xlu0 %878
  %880 = vrot.lane.b32.xlu0 %v833, 15
  %v881 = vpop.permute.xlu0 %880
  %v882 = vsel %vm257, %v879, %v881
  %v883 = vsel %vm257, %v877, %v879
  %v884 = vsel %vm257, %v875, %v877
  %v885 = vsel %vm257, %v881, %v875
  %v886 = vmul.f32 %v885, %v263
  %v887 = vmul.f32 %v884, %v264
  %v888 = vmul.f32 %v883, %v265
  %v889 = vmul.f32 %v882, %v266
  %890 = vst [vmem:[#allocation2 + $0x120] sm:$0xff] %v886
  %891 = vst [vmem:[#allocation2 + $0x128] sm:$0xff] %v887
  %892 = vst [vmem:[#allocation2 + $0x130] sm:$0xff] %v888
  %893 = vst [vmem:[#allocation2 + $0x138] sm:$0xff] %v889
  %894 = vrot.lane.b32.xlu0 %v830, 1
  %v895 = vpop.permute.xlu0 %894
  %896 = vrot.lane.b32.xlu0 %v831, 1
  %v897 = vpop.permute.xlu0 %896
  %898 = vrot.lane.b32.xlu0 %v832, 1
  %v899 = vpop.permute.xlu0 %898
  %900 = vrot.lane.b32.xlu0 %v833, 1
  %v901 = vpop.permute.xlu0 %900
  %v902 = vsel %vm287, %v899, %v901
  %v903 = vsel %vm287, %v897, %v899
  %v904 = vsel %vm287, %v895, %v897
  %v905 = vsel %vm287, %v901, %v895
  %v906 = vmul.f32 %v905, %v293
  %v907 = vmul.f32 %v904, %v294
  %v908 = vmul.f32 %v903, %v295
  %v909 = vmul.f32 %v902, %v296
  %910 = vst [vmem:[#allocation2 + $0x1a0] sm:$0xff] %v906
  %911 = vst [vmem:[#allocation2 + $0x1a8] sm:$0xff] %v907
  %912 = vst [vmem:[#allocation2 + $0x1b0] sm:$0xff] %v908
  %913 = vst [vmem:[#allocation2 + $0x1b8] sm:$0xff] %v909
  %914 = vst [vmem:[#allocation2 + $0x220] sm:$0xff] %v830
  %915 = vst [vmem:[#allocation2 + $0x228] sm:$0xff] %v831
  %916 = vst [vmem:[#allocation2 + $0x230] sm:$0xff] %v832
  %917 = vst [vmem:[#allocation2 + $0x238] sm:$0xff] %v833
  %918 = vrot.lane.b32.xlu0 %v830, 127
  %v919 = vpop.permute.xlu0 %918
  %920 = vrot.lane.b32.xlu0 %v831, 127
  %v921 = vpop.permute.xlu0 %920
  %922 = vrot.lane.b32.xlu0 %v832, 127
  %v923 = vpop.permute.xlu0 %922
  %924 = vrot.lane.b32.xlu0 %v833, 127
  %v925 = vpop.permute.xlu0 %924
  %v926 = vsel %vm321, %v923, %v925
  %v927 = vsel %vm321, %v921, %v923
  %v928 = vsel %vm321, %v919, %v921
  %v929 = vsel %vm321, %v925, %v919
  %v930 = vmul.f32 %v928, %v327
  %v931 = vmul.f32 %v927, %v328
  %v932 = vmul.f32 %v926, %v329
  %v933 = vmul.f32 %v929, %v330
  %934 = vst [vmem:[#allocation2 + $0x2a0] sm:$0xff] %v930
  %935 = vst [vmem:[#allocation2 + $0x2a8] sm:$0xff] %v931
  %936 = vst [vmem:[#allocation2 + $0x2b0] sm:$0xff] %v932
  %937 = vst [vmem:[#allocation2 + $0x2b8] sm:$0xff] %v933
  %938 = vrot.lane.b32.xlu0 %v830, 113
  %v939 = vpop.permute.xlu0 %938
  %940 = vrot.lane.b32.xlu0 %v831, 113
  %v941 = vpop.permute.xlu0 %940
  %942 = vrot.lane.b32.xlu0 %v832, 113
  %v943 = vpop.permute.xlu0 %942
  %944 = vrot.lane.b32.xlu0 %v833, 113
  %v945 = vpop.permute.xlu0 %944
  %v946 = vsel %vm351, %v943, %v945
  %v947 = vsel %vm351, %v941, %v943
  %v948 = vsel %vm351, %v939, %v941
  %v949 = vsel %vm351, %v945, %v939
  %v950 = vmul.f32 %v948, %v357
  %v951 = vmul.f32 %v947, %v358
  %v952 = vmul.f32 %v946, %v359
  %v953 = vmul.f32 %v949, %v360
  %954 = vst [vmem:[#allocation2 + $0x320] sm:$0xff] %v950
  %955 = vst [vmem:[#allocation2 + $0x328] sm:$0xff] %v951
  %956 = vst [vmem:[#allocation2 + $0x330] sm:$0xff] %v952
  %957 = vst [vmem:[#allocation2 + $0x338] sm:$0xff] %v953
  %958 = vrot.lane.b32.xlu0 %v830, 112
  %v959 = vpop.permute.xlu0 %958
  %960 = vrot.lane.b32.xlu0 %v831, 112
  %v961 = vpop.permute.xlu0 %960
  %962 = vrot.lane.b32.xlu0 %v832, 112
  %v963 = vpop.permute.xlu0 %962
  %964 = vrot.lane.b32.xlu0 %v833, 112
  %v965 = vpop.permute.xlu0 %964
  %v966 = vsel %vm381, %v963, %v965
  %v967 = vsel %vm381, %v961, %v963
  %v968 = vsel %vm381, %v959, %v961
  %v969 = vsel %vm381, %v965, %v959
  %v970 = vmul.f32 %v968, %v387
  %v971 = vmul.f32 %v967, %v388
  %v972 = vmul.f32 %v966, %v389
  %v973 = vmul.f32 %v969, %v390
  %974 = vst [vmem:[#allocation2 + $0x3a0] sm:$0xff] %v970
  %975 = vst [vmem:[#allocation2 + $0x3a8] sm:$0xff] %v971
  %976 = vst [vmem:[#allocation2 + $0x3b0] sm:$0xff] %v972
  %977 = vst [vmem:[#allocation2 + $0x3b8] sm:$0xff] %v973
  %978 = vrot.lane.b32.xlu0 %v830, 111
  %v979 = vpop.permute.xlu0 %978
  %980 = vrot.lane.b32.xlu0 %v831, 111
  %v981 = vpop.permute.xlu0 %980
  %982 = vrot.lane.b32.xlu0 %v832, 111
  %v983 = vpop.permute.xlu0 %982
  %984 = vrot.lane.b32.xlu0 %v833, 111
  %v985 = vpop.permute.xlu0 %984
  %v986 = vsel %vm411, %v983, %v985
  %v987 = vsel %vm411, %v981, %v983
  %v988 = vsel %vm411, %v979, %v981
  %v989 = vsel %vm411, %v985, %v979
  %v990 = vmul.f32 %v988, %v417
  %v991 = vmul.f32 %v987, %v418
  %v992 = vmul.f32 %v986, %v419
  %v993 = vmul.f32 %v989, %v420
  %994 = vst [vmem:[#allocation2 + $0x420] sm:$0xff] %v990
  %995 = vst [vmem:[#allocation2 + $0x428] sm:$0xff] %v991
  %996 = vst [vmem:[#allocation2 + $0x430] sm:$0xff] %v992
  %997 = vst [vmem:[#allocation2 + $0x438] sm:$0xff] %v993
  %s998 = scalar_lea.vmem %s2, 24
  %v999 = vld [vmem:[%s998] sm:$0xff]
  %v1000 = vld [vmem:[%s998 + $0x8] sm:$0xff]
  %v1001 = vld [vmem:[%s998 + $0x10] sm:$0xff]
  %v1002 = vld [vmem:[#allocation2] sm:$0xff]
  %v1003 = vld [vmem:[#allocation2 + $0x8] sm:$0xff]
  %v1004 = vld [vmem:[#allocation2 + $0x10] sm:$0xff]
  %v1005 = vld [vmem:[#allocation2 + $0x18] sm:$0xff]
  %v1006 = vld [vmem:[#allocation2 + $0x20] sm:$0xff]
  %v1007 = vld [vmem:[#allocation2 + $0x28] sm:$0xff]
  %v1008 = vld [vmem:[#allocation2 + $0x30] sm:$0xff]
  %v1009 = vld [vmem:[#allocation2 + $0x38] sm:$0xff]
  %v1010 = vld [vmem:[#allocation2 + $0x40] sm:$0xff]
  %v1011 = vld [vmem:[#allocation2 + $0x48] sm:$0xff]
  %v1012 = vld [vmem:[#allocation2 + $0x50] sm:$0xff]
  %v1013 = vld [vmem:[#allocation2 + $0x58] sm:$0xff]
  %v1014 = vld [vmem:[#allocation2 + $0x60] sm:$0xff]
  %v1015 = vld [vmem:[#allocation2 + $0x68] sm:$0xff]
  %v1016 = vld [vmem:[#allocation2 + $0x70] sm:$0xff]
  %v1017 = vld [vmem:[#allocation2 + $0x78] sm:$0xff]
  %v1018 = vld [vmem:[#allocation2 + $0x80] sm:$0xff]
  %v1019 = vld [vmem:[#allocation2 + $0x88] sm:$0xff]
  %v1020 = vld [vmem:[#allocation2 + $0x90] sm:$0xff]
  %v1021 = vld [vmem:[#allocation2 + $0x98] sm:$0xff]
  %v1022 = vld [vmem:[#allocation2 + $0xa0] sm:$0xff]
  %v1023 = vld [vmem:[#allocation2 + $0xa8] sm:$0xff]
  %v1024 = vld [vmem:[#allocation2 + $0xb0] sm:$0xff]
  %v1025 = vld [vmem:[#allocation2 + $0xb8] sm:$0xff]
  %v1026 = vld [vmem:[#allocation2 + $0xc0] sm:$0xff]
  %v1027 = vld [vmem:[#allocation2 + $0xc8] sm:$0xff]
  %v1028 = vld [vmem:[#allocation2 + $0xd0] sm:$0xff]
  %v1029 = vld [vmem:[#allocation2 + $0xd8] sm:$0xff]
  %v1030 = vld [vmem:[#allocation2 + $0xe0] sm:$0xff]
  %v1031 = vld [vmem:[#allocation2 + $0xe8] sm:$0xff]
  %v1032 = vld [vmem:[#allocation2 + $0xf0] sm:$0xff]
  %v1033 = vld [vmem:[#allocation2 + $0xf8] sm:$0xff]
  %v1034 = vld [vmem:[#allocation2 + $0x100] sm:$0xff]
  %v1035 = vld [vmem:[#allocation2 + $0x108] sm:$0xff]
  %v1036 = vld [vmem:[#allocation2 + $0x110] sm:$0xff]
  %v1037 = vld [vmem:[#allocation2 + $0x118] sm:$0xff]
  %v1038 = vld [vmem:[#allocation2 + $0x120] sm:$0xff]
  %v1039 = vld [vmem:[#allocation2 + $0x128] sm:$0xff]
  %v1040 = vld [vmem:[#allocation2 + $0x130] sm:$0xff]
  %v1041 = vld [vmem:[#allocation2 + $0x138] sm:$0xff]
  %v1042 = vld [vmem:[#allocation2 + $0x140] sm:$0xff]
  %v1043 = vld [vmem:[#allocation2 + $0x148] sm:$0xff]
  %v1044 = vld [vmem:[#allocation2 + $0x150] sm:$0xff]
  %v1045 = vld [vmem:[#allocation2 + $0x158] sm:$0xff]
  %v1046 = vld [vmem:[#allocation2 + $0x160] sm:$0xff]
  %v1047 = vld [vmem:[#allocation2 + $0x168] sm:$0xff]
  %v1048 = vld [vmem:[#allocation2 + $0x170] sm:$0xff]
  %v1049 = vld [vmem:[#allocation2 + $0x178] sm:$0xff]
  %v1050 = vld [vmem:[#allocation2 + $0x180] sm:$0xff]
  %v1051 = vld [vmem:[#allocation2 + $0x188] sm:$0xff]
  %v1052 = vld [vmem:[#allocation2 + $0x190] sm:$0xff]
  %v1053 = vld [vmem:[#allocation2 + $0x198] sm:$0xff]
  %v1054 = vld [vmem:[#allocation2 + $0x1a0] sm:$0xff]
  %v1055 = vld [vmem:[#allocation2 + $0x1a8] sm:$0xff]
  %v1056 = vld [vmem:[#allocation2 + $0x1b0] sm:$0xff]
  %v1057 = vld [vmem:[#allocation2 + $0x1b8] sm:$0xff]
  %v1058 = vld [vmem:[#allocation2 + $0x1c0] sm:$0xff]
  %v1059 = vld [vmem:[#allocation2 + $0x1c8] sm:$0xff]
  %v1060 = vld [vmem:[#allocation2 + $0x1d0] sm:$0xff]
  %v1061 = vld [vmem:[#allocation2 + $0x1d8] sm:$0xff]
  %v1062 = vld [vmem:[#allocation2 + $0x1e0] sm:$0xff]
  %v1063 = vld [vmem:[#allocation2 + $0x1e8] sm:$0xff]
  %v1064 = vld [vmem:[#allocation2 + $0x1f0] sm:$0xff]
  %v1065 = vld [vmem:[#allocation2 + $0x1f8] sm:$0xff]
  %v1066 = vld [vmem:[#allocation2 + $0x200] sm:$0xff]
  %v1067 = vld [vmem:[#allocation2 + $0x208] sm:$0xff]
  %v1068 = vld [vmem:[#allocation2 + $0x210] sm:$0xff]
  %v1069 = vld [vmem:[#allocation2 + $0x218] sm:$0xff]
  %v1070 = vld [vmem:[#allocation2 + $0x220] sm:$0xff]
  %v1071 = vld [vmem:[#allocation2 + $0x228] sm:$0xff]
  %v1072 = vld [vmem:[#allocation2 + $0x230] sm:$0xff]
  %v1073 = vld [vmem:[#allocation2 + $0x238] sm:$0xff]
  %v1074 = vld [vmem:[#allocation2 + $0x240] sm:$0xff]
  %v1075 = vld [vmem:[#allocation2 + $0x248] sm:$0xff]
  %v1076 = vld [vmem:[#allocation2 + $0x250] sm:$0xff]
  %v1077 = vld [vmem:[#allocation2 + $0x258] sm:$0xff]
  %v1078 = vld [vmem:[#allocation2 + $0x260] sm:$0xff]
  %v1079 = vld [vmem:[#allocation2 + $0x268] sm:$0xff]
  %v1080 = vld [vmem:[#allocation2 + $0x270] sm:$0xff]
  %v1081 = vld [vmem:[#allocation2 + $0x278] sm:$0xff]
  %v1082 = vld [vmem:[#allocation2 + $0x280] sm:$0xff]
  %v1083 = vld [vmem:[#allocation2 + $0x288] sm:$0xff]
  %v1084 = vld [vmem:[#allocation2 + $0x290] sm:$0xff]
  %v1085 = vld [vmem:[#allocation2 + $0x298] sm:$0xff]
  %v1086 = vld [vmem:[#allocation2 + $0x2a0] sm:$0xff]
  %v1087 = vld [vmem:[#allocation2 + $0x2a8] sm:$0xff]
  %v1088 = vld [vmem:[#allocation2 + $0x2b0] sm:$0xff]
  %v1089 = vld [vmem:[#allocation2 + $0x2b8] sm:$0xff]
  %v1090 = vld [vmem:[#allocation2 + $0x2c0] sm:$0xff]
  %v1091 = vld [vmem:[#allocation2 + $0x2c8] sm:$0xff]
  %v1092 = vld [vmem:[#allocation2 + $0x2d0] sm:$0xff]
  %v1093 = vld [vmem:[#allocation2 + $0x2d8] sm:$0xff]
  %v1094 = vld [vmem:[#allocation2 + $0x2e0] sm:$0xff]
  %v1095 = vld [vmem:[#allocation2 + $0x2e8] sm:$0xff]
  %v1096 = vld [vmem:[#allocation2 + $0x2f0] sm:$0xff]
  %v1097 = vld [vmem:[#allocation2 + $0x2f8] sm:$0xff]
  %v1098 = vld [vmem:[#allocation2 + $0x300] sm:$0xff]
  %v1099 = vld [vmem:[#allocation2 + $0x308] sm:$0xff]
  %v1100 = vld [vmem:[#allocation2 + $0x310] sm:$0xff]
  %v1101 = vld [vmem:[#allocation2 + $0x318] sm:$0xff]
  %v1102 = vld [vmem:[#allocation2 + $0x320] sm:$0xff]
  %v1103 = vld [vmem:[#allocation2 + $0x328] sm:$0xff]
  %v1104 = vld [vmem:[#allocation2 + $0x330] sm:$0xff]
  %v1105 = vld [vmem:[#allocation2 + $0x338] sm:$0xff]
  %v1106 = vld [vmem:[#allocation2 + $0x340] sm:$0xff]
  %v1107 = vld [vmem:[#allocation2 + $0x348] sm:$0xff]
  %v1108 = vld [vmem:[#allocation2 + $0x350] sm:$0xff]
  %v1109 = vld [vmem:[#allocation2 + $0x358] sm:$0xff]
  %v1110 = vld [vmem:[#allocation2 + $0x360] sm:$0xff]
  %v1111 = vld [vmem:[#allocation2 + $0x368] sm:$0xff]
  %v1112 = vld [vmem:[#allocation2 + $0x370] sm:$0xff]
  %v1113 = vld [vmem:[#allocation2 + $0x378] sm:$0xff]
  %v1114 = vld [vmem:[#allocation2 + $0x380] sm:$0xff]
  %v1115 = vld [vmem:[#allocation2 + $0x388] sm:$0xff]
  %v1116 = vld [vmem:[#allocation2 + $0x390] sm:$0xff]
  %v1117 = vld [vmem:[#allocation2 + $0x398] sm:$0xff]
  %v1118 = vld [vmem:[#allocation2 + $0x3a0] sm:$0xff]
  %v1119 = vld [vmem:[#allocation2 + $0x3a8] sm:$0xff]
  %v1120 = vld [vmem:[#allocation2 + $0x3b0] sm:$0xff]
  %v1121 = vld [vmem:[#allocation2 + $0x3b8] sm:$0xff]
  %v1122 = vld [vmem:[#allocation2 + $0x3c0] sm:$0xff]
  %v1123 = vld [vmem:[#allocation2 + $0x3c8] sm:$0xff]
  %v1124 = vld [vmem:[#allocation2 + $0x3d0] sm:$0xff]
  %v1125 = vld [vmem:[#allocation2 + $0x3d8] sm:$0xff]
  %v1126 = vld [vmem:[#allocation2 + $0x3e0] sm:$0xff]
  %v1127 = vld [vmem:[#allocation2 + $0x3e8] sm:$0xff]
  %v1128 = vld [vmem:[#allocation2 + $0x3f0] sm:$0xff]
  %v1129 = vld [vmem:[#allocation2 + $0x3f8] sm:$0xff]
  %v1130 = vld [vmem:[#allocation2 + $0x400] sm:$0xff]
  %v1131 = vld [vmem:[#allocation2 + $0x408] sm:$0xff]
  %v1132 = vld [vmem:[#allocation2 + $0x410] sm:$0xff]
  %v1133 = vld [vmem:[#allocation2 + $0x418] sm:$0xff]
  %v1134 = vld [vmem:[#allocation2 + $0x420] sm:$0xff]
  %v1135 = vld [vmem:[#allocation2 + $0x428] sm:$0xff]
  %v1136 = vld [vmem:[#allocation2 + $0x430] sm:$0xff]
  %v1137 = vld [vmem:[#allocation2 + $0x438] sm:$0xff]
  %v1138 = vld [vmem:[#allocation2 + $0x440] sm:$0xff]
  %v1139 = vld [vmem:[#allocation2 + $0x448] sm:$0xff]
  %v1140 = vld [vmem:[#allocation2 + $0x450] sm:$0xff]
  %v1141 = vld [vmem:[#allocation2 + $0x458] sm:$0xff]
  %v1142 = vld [vmem:[#allocation2 + $0x460] sm:$0xff]
  %v1143 = vld [vmem:[#allocation2 + $0x468] sm:$0xff]
  %v1144 = vld [vmem:[#allocation2 + $0x470] sm:$0xff]
  %v1145 = vld [vmem:[#allocation2 + $0x478] sm:$0xff]
  %s1146 = scalar_lea.vmem %s3, 8
  %v1147 = vld [vmem:[%s1146] sm:$0xff]
  %1149 = vset.pattern.permute.xlu0 0
  %1150 = vperm.xlu0 %1149, %v1147
  %v1151 = vpop.permute.xlu0 %1150
  %v1154 = vsel %vm586, %v1001, 0
  %1156 = vmatpush.msra.mxu0 %v1062
  %1157 = vmatpush.msra.mxu0 %v1058
  %1158 = vmatpush.msra.mxu0 %v1054
  %1159 = vmatpush.msra.mxu0 %v1050
  %1160 = vmatpush.msra.mxu0 %v1046
  %1161 = vmatpush.msra.mxu0 %v1042
  %1162 = vmatpush.msra.mxu0 %v1038
  %1163 = vmatpush.msra.mxu0 %v1034
  %1164 = vmatpush.msra.mxu0 %v1030
  %1165 = vmatpush.msra.mxu0 %v1026
  %1166 = vmatpush.msra.mxu0 %v1022
  %1167 = vmatpush.msra.mxu0 %v1018
  %1168 = vmatpush.msra.mxu0 %v1014
  %1169 = vmatpush.msra.mxu0 %v1010
  %1170 = vmatpush.msra.mxu0 %v1006
  %1171 = vmatpush.msra.mxu0 %v1002
  %1172 = vmatmul.f32.gmra.mxu0 %v999
  %v1173 = vpop.f32.mrf.mxu0
  %v1174 = vadd.f32 %v1151, %v1173
  %1175 = vdwg.mxu0
  %1176 = vmatpush.msra.mxu0 %v1126
  %1177 = vmatpush.msra.mxu0 %v1122
  %1178 = vmatpush.msra.mxu0 %v1118
  %1179 = vmatpush.msra.mxu0 %v1114
  %1180 = vmatpush.msra.mxu0 %v1110
  %1181 = vmatpush.msra.mxu0 %v1106
  %1182 = vmatpush.msra.mxu0 %v1102
  %1183 = vmatpush.msra.mxu0 %v1098
  %1184 = vmatpush.msra.mxu0 %v1094
  %1185 = vmatpush.msra.mxu0 %v1090
  %1186 = vmatpush.msra.mxu0 %v1086
  %1187 = vmatpush.msra.mxu0 %v1082
  %1188 = vmatpush.msra.mxu0 %v1078
  %1189 = vmatpush.msra.mxu0 %v1074
  %1190 = vmatpush.msra.mxu0 %v1070
  %1191 = vmatpush.msra.mxu0 %v1066
  %1192 = vmatmul.f32.gmra.mxu0 %v1000
  %v1193 = vpop.f32.mrf.mxu0
  %v1194 = vadd.f32 %v1174, %v1193
  %1195 = vdwg.mxu0
  %1196 = vmatpush.msra.mxu0 0.0
  %1197 = vmatpush.msra.mxu0 0.0
  %1198 = vmatpush.msra.mxu0 0.0
  %1199 = vmatpush.msra.mxu0 0.0
  %1200 = vmatpush.msra.mxu0 0.0
  %1201 = vmatpush.msra.mxu0 0.0
  %1202 = vmatpush.msra.mxu0 0.0
  %1203 = vmatpush.msra.mxu0 0.0
  %1204 = vmatpush.msra.mxu0 0.0
  %1205 = vmatpush.msra.mxu0 0.0
  %1206 = vmatpush.msra.mxu0 0.0
  %1207 = vmatpush.msra.mxu0 0.0
  %1208 = vmatpush.msra.mxu0 %v1142
  %1209 = vmatpush.msra.mxu0 %v1138
  %1210 = vmatpush.msra.mxu0 %v1134
  %1211 = vmatpush.msra.mxu0 %v1130
  %1212 = vmatmul.f32.gmra.mxu0 %v1154
  %v1213 = vpop.f32.mrf.mxu0
  %v1214 = vadd.f32 %v1194, %v1213
  %1215 = vdwg.mxu0
  %1216 = vmatpush.msra.mxu0 %v1063
  %1217 = vmatpush.msra.mxu0 %v1059
  %1218 = vmatpush.msra.mxu0 %v1055
  %1219 = vmatpush.msra.mxu0 %v1051
  %1220 = vmatpush.msra.mxu0 %v1047
  %1221 = vmatpush.msra.mxu0 %v1043
  %1222 = vmatpush.msra.mxu0 %v1039
  %1223 = vmatpush.msra.mxu0 %v1035
  %1224 = vmatpush.msra.mxu0 %v1031
  %1225 = vmatpush.msra.mxu0 %v1027
  %1226 = vmatpush.msra.mxu0 %v1023
  %1227 = vmatpush.msra.mxu0 %v1019
  %1228 = vmatpush.msra.mxu0 %v1015
  %1229 = vmatpush.msra.mxu0 %v1011
  %1230 = vmatpush.msra.mxu0 %v1007
  %1231 = vmatpush.msra.mxu0 %v1003
  %1232 = vmatmul.f32.gmra.mxu0 %v999
  %v1233 = vpop.f32.mrf.mxu0
  %v1234 = vadd.f32 %v1151, %v1233
  %1235 = vdwg.mxu0
  %1236 = vmatpush.msra.mxu0 %v1127
  %1237 = vmatpush.msra.mxu0 %v1123
  %1238 = vmatpush.msra.mxu0 %v1119
  %1239 = vmatpush.msra.mxu0 %v1115
  %1240 = vmatpush.msra.mxu0 %v1111
  %1241 = vmatpush.msra.mxu0 %v1107
  %1242 = vmatpush.msra.mxu0 %v1103
  %1243 = vmatpush.msra.mxu0 %v1099
  %1244 = vmatpush.msra.mxu0 %v1095
  %1245 = vmatpush.msra.mxu0 %v1091
  %1246 = vmatpush.msra.mxu0 %v1087
  %1247 = vmatpush.msra.mxu0 %v1083
  %1248 = vmatpush.msra.mxu0 %v1079
  %1249 = vmatpush.msra.mxu0 %v1075
  %1250 = vmatpush.msra.mxu0 %v1071
  %1251 = vmatpush.msra.mxu0 %v1067
  %1252 = vmatmul.f32.gmra.mxu0 %v1000
  %v1253 = vpop.f32.mrf.mxu0
  %v1254 = vadd.f32 %v1234, %v1253
  %1255 = vdwg.mxu0
  %1256 = vmatpush.msra.mxu0 0.0
  %1257 = vmatpush.msra.mxu0 0.0
  %1258 = vmatpush.msra.mxu0 0.0
  %1259 = vmatpush.msra.mxu0 0.0
  %1260 = vmatpush.msra.mxu0 0.0
  %1261 = vmatpush.msra.mxu0 0.0
  %1262 = vmatpush.msra.mxu0 0.0
  %1263 = vmatpush.msra.mxu0 0.0
  %1264 = vmatpush.msra.mxu0 0.0
  %1265 = vmatpush.msra.mxu0 0.0
  %1266 = vmatpush.msra.mxu0 0.0
  %1267 = vmatpush.msra.mxu0 0.0
  %1268 = vmatpush.msra.mxu0 %v1143
  %1269 = vmatpush.msra.mxu0 %v1139
  %1270 = vmatpush.msra.mxu0 %v1135
  %1271 = vmatpush.msra.mxu0 %v1131
  %1272 = vmatmul.f32.gmra.mxu0 %v1154
  %v1273 = vpop.f32.mrf.mxu0
  %v1274 = vadd.f32 %v1254, %v1273
  %1275 = vdwg.mxu0
  %1276 = vmatpush.msra.mxu0 %v1064
  %1277 = vmatpush.msra.mxu0 %v1060
  %1278 = vmatpush.msra.mxu0 %v1056
  %1279 = vmatpush.msra.mxu0 %v1052
  %1280 = vmatpush.msra.mxu0 %v1048
  %1281 = vmatpush.msra.mxu0 %v1044
  %1282 = vmatpush.msra.mxu0 %v1040
  %1283 = vmatpush.msra.mxu0 %v1036
  %1284 = vmatpush.msra.mxu0 %v1032
  %1285 = vmatpush.msra.mxu0 %v1028
  %1286 = vmatpush.msra.mxu0 %v1024
  %1287 = vmatpush.msra.mxu0 %v1020
  %1288 = vmatpush.msra.mxu0 %v1016
  %1289 = vmatpush.msra.mxu0 %v1012
  %1290 = vmatpush.msra.mxu0 %v1008
  %1291 = vmatpush.msra.mxu0 %v1004
  %1292 = vmatmul.f32.gmra.mxu0 %v999
  %v1293 = vpop.f32.mrf.mxu0
  %v1294 = vadd.f32 %v1151, %v1293
  %1295 = vdwg.mxu0
  %1296 = vmatpush.msra.mxu0 %v1128
  %1297 = vmatpush.msra.mxu0 %v1124
  %1298 = vmatpush.msra.mxu0 %v1120
  %1299 = vmatpush.msra.mxu0 %v1116
  %1300 = vmatpush.msra.mxu0 %v1112
  %1301 = vmatpush.msra.mxu0 %v1108
  %1302 = vmatpush.msra.mxu0 %v1104
  %1303 = vmatpush.msra.mxu0 %v1100
  %1304 = vmatpush.msra.mxu0 %v1096
  %1305 = vmatpush.msra.mxu0 %v1092
  %1306 = vmatpush.msra.mxu0 %v1088
  %1307 = vmatpush.msra.mxu0 %v1084
  %1308 = vmatpush.msra.mxu0 %v1080
  %1309 = vmatpush.msra.mxu0 %v1076
  %1310 = vmatpush.msra.mxu0 %v1072
  %1311 = vmatpush.msra.mxu0 %v1068
  %1312 = vmatmul.f32.gmra.mxu0 %v1000
  %v1313 = vpop.f32.mrf.mxu0
  %v1314 = vadd.f32 %v1294, %v1313
  %1315 = vdwg.mxu0
  %1316 = vmatpush.msra.mxu0 0.0
  %1317 = vmatpush.msra.mxu0 0.0
  %1318 = vmatpush.msra.mxu0 0.0
  %1319 = vmatpush.msra.mxu0 0.0
  %1320 = vmatpush.msra.mxu0 0.0
  %1321 = vmatpush.msra.mxu0 0.0
  %1322 = vmatpush.msra.mxu0 0.0
  %1323 = vmatpush.msra.mxu0 0.0
  %1324 = vmatpush.msra.mxu0 0.0
  %1325 = vmatpush.msra.mxu0 0.0
  %1326 = vmatpush.msra.mxu0 0.0
  %1327 = vmatpush.msra.mxu0 0.0
  %1328 = vmatpush.msra.mxu0 %v1144
  %1329 = vmatpush.msra.mxu0 %v1140
  %1330 = vmatpush.msra.mxu0 %v1136
  %1331 = vmatpush.msra.mxu0 %v1132
  %1332 = vmatmul.f32.gmra.mxu0 %v1154
  %v1333 = vpop.f32.mrf.mxu0
  %v1334 = vadd.f32 %v1314, %v1333
  %1335 = vdwg.mxu0
  %1336 = vmatpush.msra.mxu0 %v1065
  %1337 = vmatpush.msra.mxu0 %v1061
  %1338 = vmatpush.msra.mxu0 %v1057
  %1339 = vmatpush.msra.mxu0 %v1053
  %1340 = vmatpush.msra.mxu0 %v1049
  %1341 = vmatpush.msra.mxu0 %v1045
  %1342 = vmatpush.msra.mxu0 %v1041
  %1343 = vmatpush.msra.mxu0 %v1037
  %1344 = vmatpush.msra.mxu0 %v1033
  %1345 = vmatpush.msra.mxu0 %v1029
  %1346 = vmatpush.msra.mxu0 %v1025
  %1347 = vmatpush.msra.mxu0 %v1021
  %1348 = vmatpush.msra.mxu0 %v1017
  %1349 = vmatpush.msra.mxu0 %v1013
  %1350 = vmatpush.msra.mxu0 %v1009
  %1351 = vmatpush.msra.mxu0 %v1005
  %1352 = vmatmul.f32.gmra.mxu0 %v999
  %v1353 = vpop.f32.mrf.mxu0
  %v1354 = vadd.f32 %v1151, %v1353
  %1355 = vdwg.mxu0
  %1356 = vmatpush.msra.mxu0 %v1129
  %1357 = vmatpush.msra.mxu0 %v1125
  %1358 = vmatpush.msra.mxu0 %v1121
  %1359 = vmatpush.msra.mxu0 %v1117
  %1360 = vmatpush.msra.mxu0 %v1113
  %1361 = vmatpush.msra.mxu0 %v1109
  %1362 = vmatpush.msra.mxu0 %v1105
  %1363 = vmatpush.msra.mxu0 %v1101
  %1364 = vmatpush.msra.mxu0 %v1097
  %1365 = vmatpush.msra.mxu0 %v1093
  %1366 = vmatpush.msra.mxu0 %v1089
  %1367 = vmatpush.msra.mxu0 %v1085
  %1368 = vmatpush.msra.mxu0 %v1081
  %1369 = vmatpush.msra.mxu0 %v1077
  %1370 = vmatpush.msra.mxu0 %v1073
  %1371 = vmatpush.msra.mxu0 %v1069
  %1372 = vmatmul.f32.gmra.mxu0 %v1000
  %v1373 = vpop.f32.mrf.mxu0
  %v1374 = vadd.f32 %v1354, %v1373
  %1375 = vdwg.mxu0
  %1376 = vmatpush.msra.mxu0 0.0
  %1377 = vmatpush.msra.mxu0 0.0
  %1378 = vmatpush.msra.mxu0 0.0
  %1379 = vmatpush.msra.mxu0 0.0
  %1380 = vmatpush.msra.mxu0 0.0
  %1381 = vmatpush.msra.mxu0 0.0
  %1382 = vmatpush.msra.mxu0 0.0
  %1383 = vmatpush.msra.mxu0 0.0
  %1384 = vmatpush.msra.mxu0 0.0
  %1385 = vmatpush.msra.mxu0 0.0
  %1386 = vmatpush.msra.mxu0 0.0
  %1387 = vmatpush.msra.mxu0 0.0
  %1388 = vmatpush.msra.mxu0 %v1145
  %1389 = vmatpush.msra.mxu0 %v1141
  %1390 = vmatpush.msra.mxu0 %v1137
  %1391 = vmatpush.msra.mxu0 %v1133
  %1392 = vmatmul.f32.gmra.mxu0 %v1154
  %v1393 = vpop.f32.mrf.mxu0
  %v1394 = vadd.f32 %v1374, %v1393
  %1395 = vdwg.mxu0
  %v1396 = vmax.f32 %v1214, 0.0
  %v1397 = vmax.f32 %v1274, 0.0
  %v1398 = vmax.f32 %v1334, 0.0
  %v1399 = vmax.f32 %v1394, 0.0
  %1400 = vrot.lane.b32.xlu0 %v1396, 17
  %v1401 = vpop.permute.xlu0 %1400
  %1402 = vrot.lane.b32.xlu0 %v1397, 17
  %v1403 = vpop.permute.xlu0 %1402
  %1404 = vrot.lane.b32.xlu0 %v1398, 17
  %v1405 = vpop.permute.xlu0 %1404
  %1406 = vrot.lane.b32.xlu0 %v1399, 17
  %v1407 = vpop.permute.xlu0 %1406
  %v1408 = vsel %vm197, %v1405, %v1407
  %v1409 = vsel %vm197, %v1403, %v1405
  %v1410 = vsel %vm197, %v1401, %v1403
  %v1411 = vsel %vm197, %v1407, %v1401
  %v1412 = vmul.f32 %v1411, %v203
  %v1413 = vmul.f32 %v1410, %v204
  %v1414 = vmul.f32 %v1409, %v205
  %v1415 = vmul.f32 %v1408, %v206
  %1416 = vst [vmem:[#allocation2 + $0x40] sm:$0xff] %v1412
  %1417 = vst [vmem:[#allocation2 + $0x48] sm:$0xff] %v1413
  %1418 = vst [vmem:[#allocation2 + $0x50] sm:$0xff] %v1414
  %1419 = vst [vmem:[#allocation2 + $0x58] sm:$0xff] %v1415
  %1420 = vrot.lane.b32.xlu0 %v1396, 16
  %v1421 = vpop.permute.xlu0 %1420
  %1422 = vrot.lane.b32.xlu0 %v1397, 16
  %v1423 = vpop.permute.xlu0 %1422
  %1424 = vrot.lane.b32.xlu0 %v1398, 16
  %v1425 = vpop.permute.xlu0 %1424
  %1426 = vrot.lane.b32.xlu0 %v1399, 16
  %v1427 = vpop.permute.xlu0 %1426
  %v1428 = vsel %vm227, %v1425, %v1427
  %v1429 = vsel %vm227, %v1423, %v1425
  %v1430 = vsel %vm227, %v1421, %v1423
  %v1431 = vsel %vm227, %v1427, %v1421
  %v1432 = vmul.f32 %v1431, %v233
  %v1433 = vmul.f32 %v1430, %v234
  %v1434 = vmul.f32 %v1429, %v235
  %v1435 = vmul.f32 %v1428, %v236
  %1436 = vst [vmem:[#allocation2 + $0xc0] sm:$0xff] %v1432
  %1437 = vst [vmem:[#allocation2 + $0xc8] sm:$0xff] %v1433
  %1438 = vst [vmem:[#allocation2 + $0xd0] sm:$0xff] %v1434
  %1439 = vst [vmem:[#allocation2 + $0xd8] sm:$0xff] %v1435
  %1440 = vrot.lane.b32.xlu0 %v1396, 15
  %v1441 = vpop.permute.xlu0 %1440
  %1442 = vrot.lane.b32.xlu0 %v1397, 15
  %v1443 = vpop.permute.xlu0 %1442
  %1444 = vrot.lane.b32.xlu0 %v1398, 15
  %v1445 = vpop.permute.xlu0 %1444
  %1446 = vrot.lane.b32.xlu0 %v1399, 15
  %v1447 = vpop.permute.xlu0 %1446
  %v1448 = vsel %vm257, %v1445, %v1447
  %v1449 = vsel %vm257, %v1443, %v1445
  %v1450 = vsel %vm257, %v1441, %v1443
  %v1451 = vsel %vm257, %v1447, %v1441
  %v1452 = vmul.f32 %v1451, %v263
  %v1453 = vmul.f32 %v1450, %v264
  %v1454 = vmul.f32 %v1449, %v265
  %v1455 = vmul.f32 %v1448, %v266
  %1456 = vst [vmem:[#allocation2 + $0x140] sm:$0xff] %v1452
  %1457 = vst [vmem:[#allocation2 + $0x148] sm:$0xff] %v1453
  %1458 = vst [vmem:[#allocation2 + $0x150] sm:$0xff] %v1454
  %1459 = vst [vmem:[#allocation2 + $0x158] sm:$0xff] %v1455
  %1460 = vrot.lane.b32.xlu0 %v1396, 1
  %v1461 = vpop.permute.xlu0 %1460
  %1462 = vrot.lane.b32.xlu0 %v1397, 1
  %v1463 = vpop.permute.xlu0 %1462
  %1464 = vrot.lane.b32.xlu0 %v1398, 1
  %v1465 = vpop.permute.xlu0 %1464
  %1466 = vrot.lane.b32.xlu0 %v1399, 1
  %v1467 = vpop.permute.xlu0 %1466
  %v1468 = vsel %vm287, %v1465, %v1467
  %v1469 = vsel %vm287, %v1463, %v1465
  %v1470 = vsel %vm287, %v1461, %v1463
  %v1471 = vsel %vm287, %v1467, %v1461
  %v1472 = vmul.f32 %v1471, %v293
  %v1473 = vmul.f32 %v1470, %v294
  %v1474 = vmul.f32 %v1469, %v295
  %v1475 = vmul.f32 %v1468, %v296
  %1476 = vst [vmem:[#allocation2 + $0x1c0] sm:$0xff] %v1472
  %1477 = vst [vmem:[#allocation2 + $0x1c8] sm:$0xff] %v1473
  %1478 = vst [vmem:[#allocation2 + $0x1d0] sm:$0xff] %v1474
  %1479 = vst [vmem:[#allocation2 + $0x1d8] sm:$0xff] %v1475
  %1480 = vst [vmem:[#allocation2 + $0x240] sm:$0xff] %v1396
  %1481 = vst [vmem:[#allocation2 + $0x248] sm:$0xff] %v1397
  %1482 = vst [vmem:[#allocation2 + $0x250] sm:$0xff] %v1398
  %1483 = vst [vmem:[#allocation2 + $0x258] sm:$0xff] %v1399
  %1484 = vrot.lane.b32.xlu0 %v1396, 127
  %v1485 = vpop.permute.xlu0 %1484
  %1486 = vrot.lane.b32.xlu0 %v1397, 127
  %v1487 = vpop.permute.xlu0 %1486
  %1488 = vrot.lane.b32.xlu0 %v1398, 127
  %v1489 = vpop.permute.xlu0 %1488
  %1490 = vrot.lane.b32.xlu0 %v1399, 127
  %v1491 = vpop.permute.xlu0 %1490
  %v1492 = vsel %vm321, %v1489, %v1491
  %v1493 = vsel %vm321, %v1487, %v1489
  %v1494 = vsel %vm321, %v1485, %v1487
  %v1495 = vsel %vm321, %v1491, %v1485
  %v1496 = vmul.f32 %v1494, %v327
  %v1497 = vmul.f32 %v1493, %v328
  %v1498 = vmul.f32 %v1492, %v329
  %v1499 = vmul.f32 %v1495, %v330
  %1500 = vst [vmem:[#allocation2 + $0x2c0] sm:$0xff] %v1496
  %1501 = vst [vmem:[#allocation2 + $0x2c8] sm:$0xff] %v1497
  %1502 = vst [vmem:[#allocation2 + $0x2d0] sm:$0xff] %v1498
  %1503 = vst [vmem:[#allocation2 + $0x2d8] sm:$0xff] %v1499
  %1504 = vrot.lane.b32.xlu0 %v1396, 113
  %v1505 = vpop.permute.xlu0 %1504
  %1506 = vrot.lane.b32.xlu0 %v1397, 113
  %v1507 = vpop.permute.xlu0 %1506
  %1508 = vrot.lane.b32.xlu0 %v1398, 113
  %v1509 = vpop.permute.xlu0 %1508
  %1510 = vrot.lane.b32.xlu0 %v1399, 113
  %v1511 = vpop.permute.xlu0 %1510
  %v1512 = vsel %vm351, %v1509, %v1511
  %v1513 = vsel %vm351, %v1507, %v1509
  %v1514 = vsel %vm351, %v1505, %v1507
  %v1515 = vsel %vm351, %v1511, %v1505
  %v1516 = vmul.f32 %v1514, %v357
  %v1517 = vmul.f32 %v1513, %v358
  %v1518 = vmul.f32 %v1512, %v359
  %v1519 = vmul.f32 %v1515, %v360
  %1520 = vst [vmem:[#allocation2 + $0x340] sm:$0xff] %v1516
  %1521 = vst [vmem:[#allocation2 + $0x348] sm:$0xff] %v1517
  %1522 = vst [vmem:[#allocation2 + $0x350] sm:$0xff] %v1518
  %1523 = vst [vmem:[#allocation2 + $0x358] sm:$0xff] %v1519
  %1524 = vrot.lane.b32.xlu0 %v1396, 112
  %v1525 = vpop.permute.xlu0 %1524
  %1526 = vrot.lane.b32.xlu0 %v1397, 112
  %v1527 = vpop.permute.xlu0 %1526
  %1528 = vrot.lane.b32.xlu0 %v1398, 112
  %v1529 = vpop.permute.xlu0 %1528
  %1530 = vrot.lane.b32.xlu0 %v1399, 112
  %v1531 = vpop.permute.xlu0 %1530
  %v1532 = vsel %vm381, %v1529, %v1531
  %v1533 = vsel %vm381, %v1527, %v1529
  %v1534 = vsel %vm381, %v1525, %v1527
  %v1535 = vsel %vm381, %v1531, %v1525
  %v1536 = vmul.f32 %v1534, %v387
  %v1537 = vmul.f32 %v1533, %v388
  %v1538 = vmul.f32 %v1532, %v389
  %v1539 = vmul.f32 %v1535, %v390
  %1540 = vst [vmem:[#allocation2 + $0x3c0] sm:$0xff] %v1536
  %1541 = vst [vmem:[#allocation2 + $0x3c8] sm:$0xff] %v1537
  %1542 = vst [vmem:[#allocation2 + $0x3d0] sm:$0xff] %v1538
  %1543 = vst [vmem:[#allocation2 + $0x3d8] sm:$0xff] %v1539
  %1544 = vrot.lane.b32.xlu0 %v1396, 111
  %v1545 = vpop.permute.xlu0 %1544
  %1546 = vrot.lane.b32.xlu0 %v1397, 111
  %v1547 = vpop.permute.xlu0 %1546
  %1548 = vrot.lane.b32.xlu0 %v1398, 111
  %v1549 = vpop.permute.xlu0 %1548
  %1550 = vrot.lane.b32.xlu0 %v1399, 111
  %v1551 = vpop.permute.xlu0 %1550
  %v1552 = vsel %vm411, %v1549, %v1551
  %v1553 = vsel %vm411, %v1547, %v1549
  %v1554 = vsel %vm411, %v1545, %v1547
  %v1555 = vsel %vm411, %v1551, %v1545
  %v1556 = vmul.f32 %v1554, %v417
  %v1557 = vmul.f32 %v1553, %v418
  %v1558 = vmul.f32 %v1552, %v419
  %v1559 = vmul.f32 %v1555, %v420
  %1560 = vst [vmem:[#allocation2 + $0x440] sm:$0xff] %v1556
  %1561 = vst [vmem:[#allocation2 + $0x448] sm:$0xff] %v1557
  %1562 = vst [vmem:[#allocation2 + $0x450] sm:$0xff] %v1558
  %1563 = vst [vmem:[#allocation2 + $0x458] sm:$0xff] %v1559
  %s1564 = scalar_lea.vmem %s2, 48
  %v1565 = vld [vmem:[%s1564] sm:$0xff]
  %v1566 = vld [vmem:[%s1564 + $0x8] sm:$0xff]
  %v1567 = vld [vmem:[%s1564 + $0x10] sm:$0xff]
  %v1568 = vld [vmem:[#allocation2] sm:$0xff]
  %v1569 = vld [vmem:[#allocation2 + $0x8] sm:$0xff]
  %v1570 = vld [vmem:[#allocation2 + $0x10] sm:$0xff]
  %v1571 = vld [vmem:[#allocation2 + $0x18] sm:$0xff]
  %v1572 = vld [vmem:[#allocation2 + $0x20] sm:$0xff]
  %v1573 = vld [vmem:[#allocation2 + $0x28] sm:$0xff]
  %v1574 = vld [vmem:[#allocation2 + $0x30] sm:$0xff]
  %v1575 = vld [vmem:[#allocation2 + $0x38] sm:$0xff]
  %v1576 = vld [vmem:[#allocation2 + $0x40] sm:$0xff]
  %v1577 = vld [vmem:[#allocation2 + $0x48] sm:$0xff]
  %v1578 = vld [vmem:[#allocation2 + $0x50] sm:$0xff]
  %v1579 = vld [vmem:[#allocation2 + $0x58] sm:$0xff]
  %v1580 = vld [vmem:[#allocation2 + $0x60] sm:$0xff]
  %v1581 = vld [vmem:[#allocation2 + $0x68] sm:$0xff]
  %v1582 = vld [vmem:[#allocation2 + $0x70] sm:$0xff]
  %v1583 = vld [vmem:[#allocation2 + $0x78] sm:$0xff]
  %v1584 = vld [vmem:[#allocation2 + $0x80] sm:$0xff]
  %v1585 = vld [vmem:[#allocation2 + $0x88] sm:$0xff]
  %v1586 = vld [vmem:[#allocation2 + $0x90] sm:$0xff]
  %v1587 = vld [vmem:[#allocation2 + $0x98] sm:$0xff]
  %v1588 = vld [vmem:[#allocation2 + $0xa0] sm:$0xff]
  %v1589 = vld [vmem:[#allocation2 + $0xa8] sm:$0xff]
  %v1590 = vld [vmem:[#allocation2 + $0xb0] sm:$0xff]
  %v1591 = vld [vmem:[#allocation2 + $0xb8] sm:$0xff]
  %v1592 = vld [vmem:[#allocation2 + $0xc0] sm:$0xff]
  %v1593 = vld [vmem:[#allocation2 + $0xc8] sm:$0xff]
  %v1594 = vld [vmem:[#allocation2 + $0xd0] sm:$0xff]
  %v1595 = vld [vmem:[#allocation2 + $0xd8] sm:$0xff]
  %v1596 = vld [vmem:[#allocation2 + $0xe0] sm:$0xff]
  %v1597 = vld [vmem:[#allocation2 + $0xe8] sm:$0xff]
  %v1598 = vld [vmem:[#allocation2 + $0xf0] sm:$0xff]
  %v1599 = vld [vmem:[#allocation2 + $0xf8] sm:$0xff]
  %v1600 = vld [vmem:[#allocation2 + $0x100] sm:$0xff]
  %v1601 = vld [vmem:[#allocation2 + $0x108] sm:$0xff]
  %v1602 = vld [vmem:[#allocation2 + $0x110] sm:$0xff]
  %v1603 = vld [vmem:[#allocation2 + $0x118] sm:$0xff]
  %v1604 = vld [vmem:[#allocation2 + $0x120] sm:$0xff]
  %v1605 = vld [vmem:[#allocation2 + $0x128] sm:$0xff]
  %v1606 = vld [vmem:[#allocation2 + $0x130] sm:$0xff]
  %v1607 = vld [vmem:[#allocation2 + $0x138] sm:$0xff]
  %v1608 = vld [vmem:[#allocation2 + $0x140] sm:$0xff]
  %v1609 = vld [vmem:[#allocation2 + $0x148] sm:$0xff]
  %v1610 = vld [vmem:[#allocation2 + $0x150] sm:$0xff]
  %v1611 = vld [vmem:[#allocation2 + $0x158] sm:$0xff]
  %v1612 = vld [vmem:[#allocation2 + $0x160] sm:$0xff]
  %v1613 = vld [vmem:[#allocation2 + $0x168] sm:$0xff]
  %v1614 = vld [vmem:[#allocation2 + $0x170] sm:$0xff]
  %v1615 = vld [vmem:[#allocation2 + $0x178] sm:$0xff]
  %v1616 = vld [vmem:[#allocation2 + $0x180] sm:$0xff]
  %v1617 = vld [vmem:[#allocation2 + $0x188] sm:$0xff]
  %v1618 = vld [vmem:[#allocation2 + $0x190] sm:$0xff]
  %v1619 = vld [vmem:[#allocation2 + $0x198] sm:$0xff]
  %v1620 = vld [vmem:[#allocation2 + $0x1a0] sm:$0xff]
  %v1621 = vld [vmem:[#allocation2 + $0x1a8] sm:$0xff]
  %v1622 = vld [vmem:[#allocation2 + $0x1b0] sm:$0xff]
  %v1623 = vld [vmem:[#allocation2 + $0x1b8] sm:$0xff]
  %v1624 = vld [vmem:[#allocation2 + $0x1c0] sm:$0xff]
  %v1625 = vld [vmem:[#allocation2 + $0x1c8] sm:$0xff]
  %v1626 = vld [vmem:[#allocation2 + $0x1d0] sm:$0xff]
  %v1627 = vld [vmem:[#allocation2 + $0x1d8] sm:$0xff]
  %v1628 = vld [vmem:[#allocation2 + $0x1e0] sm:$0xff]
  %v1629 = vld [vmem:[#allocation2 + $0x1e8] sm:$0xff]
  %v1630 = vld [vmem:[#allocation2 + $0x1f0] sm:$0xff]
  %v1631 = vld [vmem:[#allocation2 + $0x1f8] sm:$0xff]
  %v1632 = vld [vmem:[#allocation2 + $0x200] sm:$0xff]
  %v1633 = vld [vmem:[#allocation2 + $0x208] sm:$0xff]
  %v1634 = vld [vmem:[#allocation2 + $0x210] sm:$0xff]
  %v1635 = vld [vmem:[#allocation2 + $0x218] sm:$0xff]
  %v1636 = vld [vmem:[#allocation2 + $0x220] sm:$0xff]
  %v1637 = vld [vmem:[#allocation2 + $0x228] sm:$0xff]
  %v1638 = vld [vmem:[#allocation2 + $0x230] sm:$0xff]
  %v1639 = vld [vmem:[#allocation2 + $0x238] sm:$0xff]
  %v1640 = vld [vmem:[#allocation2 + $0x240] sm:$0xff]
  %v1641 = vld [vmem:[#allocation2 + $0x248] sm:$0xff]
  %v1642 = vld [vmem:[#allocation2 + $0x250] sm:$0xff]
  %v1643 = vld [vmem:[#allocation2 + $0x258] sm:$0xff]
  %v1644 = vld [vmem:[#allocation2 + $0x260] sm:$0xff]
  %v1645 = vld [vmem:[#allocation2 + $0x268] sm:$0xff]
  %v1646 = vld [vmem:[#allocation2 + $0x270] sm:$0xff]
  %v1647 = vld [vmem:[#allocation2 + $0x278] sm:$0xff]
  %v1648 = vld [vmem:[#allocation2 + $0x280] sm:$0xff]
  %v1649 = vld [vmem:[#allocation2 + $0x288] sm:$0xff]
  %v1650 = vld [vmem:[#allocation2 + $0x290] sm:$0xff]
  %v1651 = vld [vmem:[#allocation2 + $0x298] sm:$0xff]
  %v1652 = vld [vmem:[#allocation2 + $0x2a0] sm:$0xff]
  %v1653 = vld [vmem:[#allocation2 + $0x2a8] sm:$0xff]
  %v1654 = vld [vmem:[#allocation2 + $0x2b0] sm:$0xff]
  %v1655 = vld [vmem:[#allocation2 + $0x2b8] sm:$0xff]
  %v1656 = vld [vmem:[#allocation2 + $0x2c0] sm:$0xff]
  %v1657 = vld [vmem:[#allocation2 + $0x2c8] sm:$0xff]
  %v1658 = vld [vmem:[#allocation2 + $0x2d0] sm:$0xff]
  %v1659 = vld [vmem:[#allocation2 + $0x2d8] sm:$0xff]
  %v1660 = vld [vmem:[#allocation2 + $0x2e0] sm:$0xff]
  %v1661 = vld [vmem:[#allocation2 + $0x2e8] sm:$0xff]
  %v1662 = vld [vmem:[#allocation2 + $0x2f0] sm:$0xff]
  %v1663 = vld [vmem:[#allocation2 + $0x2f8] sm:$0xff]
  %v1664 = vld [vmem:[#allocation2 + $0x300] sm:$0xff]
  %v1665 = vld [vmem:[#allocation2 + $0x308] sm:$0xff]
  %v1666 = vld [vmem:[#allocation2 + $0x310] sm:$0xff]
  %v1667 = vld [vmem:[#allocation2 + $0x318] sm:$0xff]
  %v1668 = vld [vmem:[#allocation2 + $0x320] sm:$0xff]
  %v1669 = vld [vmem:[#allocation2 + $0x328] sm:$0xff]
  %v1670 = vld [vmem:[#allocation2 + $0x330] sm:$0xff]
  %v1671 = vld [vmem:[#allocation2 + $0x338] sm:$0xff]
  %v1672 = vld [vmem:[#allocation2 + $0x340] sm:$0xff]
  %v1673 = vld [vmem:[#allocation2 + $0x348] sm:$0xff]
  %v1674 = vld [vmem:[#allocation2 + $0x350] sm:$0xff]
  %v1675 = vld [vmem:[#allocation2 + $0x358] sm:$0xff]
  %v1676 = vld [vmem:[#allocation2 + $0x360] sm:$0xff]
  %v1677 = vld [vmem:[#allocation2 + $0x368] sm:$0xff]
  %v1678 = vld [vmem:[#allocation2 + $0x370] sm:$0xff]
  %v1679 = vld [vmem:[#allocation2 + $0x378] sm:$0xff]
  %v1680 = vld [vmem:[#allocation2 + $0x380] sm:$0xff]
  %v1681 = vld [vmem:[#allocation2 + $0x388] sm:$0xff]
  %v1682 = vld [vmem:[#allocation2 + $0x390] sm:$0xff]
  %v1683 = vld [vmem:[#allocation2 + $0x398] sm:$0xff]
  %v1684 = vld [vmem:[#allocation2 + $0x3a0] sm:$0xff]
  %v1685 = vld [vmem:[#allocation2 + $0x3a8] sm:$0xff]
  %v1686 = vld [vmem:[#allocation2 + $0x3b0] sm:$0xff]
  %v1687 = vld [vmem:[#allocation2 + $0x3b8] sm:$0xff]
  %v1688 = vld [vmem:[#allocation2 + $0x3c0] sm:$0xff]
  %v1689 = vld [vmem:[#allocation2 + $0x3c8] sm:$0xff]
  %v1690 = vld [vmem:[#allocation2 + $0x3d0] sm:$0xff]
  %v1691 = vld [vmem:[#allocation2 + $0x3d8] sm:$0xff]
  %v1692 = vld [vmem:[#allocation2 + $0x3e0] sm:$0xff]
  %v1693 = vld [vmem:[#allocation2 + $0x3e8] sm:$0xff]
  %v1694 = vld [vmem:[#allocation2 + $0x3f0] sm:$0xff]
  %v1695 = vld [vmem:[#allocation2 + $0x3f8] sm:$0xff]
  %v1696 = vld [vmem:[#allocation2 + $0x400] sm:$0xff]
  %v1697 = vld [vmem:[#allocation2 + $0x408] sm:$0xff]
  %v1698 = vld [vmem:[#allocation2 + $0x410] sm:$0xff]
  %v1699 = vld [vmem:[#allocation2 + $0x418] sm:$0xff]
  %v1700 = vld [vmem:[#allocation2 + $0x420] sm:$0xff]
  %v1701 = vld [vmem:[#allocation2 + $0x428] sm:$0xff]
  %v1702 = vld [vmem:[#allocation2 + $0x430] sm:$0xff]
  %v1703 = vld [vmem:[#allocation2 + $0x438] sm:$0xff]
  %v1704 = vld [vmem:[#allocation2 + $0x440] sm:$0xff]
  %v1705 = vld [vmem:[#allocation2 + $0x448] sm:$0xff]
  %v1706 = vld [vmem:[#allocation2 + $0x450] sm:$0xff]
  %v1707 = vld [vmem:[#allocation2 + $0x458] sm:$0xff]
  %v1708 = vld [vmem:[#allocation2 + $0x460] sm:$0xff]
  %v1709 = vld [vmem:[#allocation2 + $0x468] sm:$0xff]
  %v1710 = vld [vmem:[#allocation2 + $0x470] sm:$0xff]
  %v1711 = vld [vmem:[#allocation2 + $0x478] sm:$0xff]
  %s1712 = scalar_lea.vmem %s3, 16
  %v1713 = vld [vmem:[%s1712] sm:$0xff]
  %1715 = vset.pattern.permute.xlu0 0
  %1716 = vperm.xlu0 %1715, %v1713
  %v1717 = vpop.permute.xlu0 %1716
  %v1720 = vsel %vm586, %v1567, 0
  %1722 = vmatpush.msra.mxu0 %v1628
  %1723 = vmatpush.msra.mxu0 %v1624
  %1724 = vmatpush.msra.mxu0 %v1620
  %1725 = vmatpush.msra.mxu0 %v1616
  %1726 = vmatpush.msra.mxu0 %v1612
  %1727 = vmatpush.msra.mxu0 %v1608
  %1728 = vmatpush.msra.mxu0 %v1604
  %1729 = vmatpush.msra.mxu0 %v1600
  %1730 = vmatpush.msra.mxu0 %v1596
  %1731 = vmatpush.msra.mxu0 %v1592
  %1732 = vmatpush.msra.mxu0 %v1588
  %1733 = vmatpush.msra.mxu0 %v1584
  %1734 = vmatpush.msra.mxu0 %v1580
  %1735 = vmatpush.msra.mxu0 %v1576
  %1736 = vmatpush.msra.mxu0 %v1572
  %1737 = vmatpush.msra.mxu0 %v1568
  %1738 = vmatmul.f32.gmra.mxu0 %v1565
  %v1739 = vpop.f32.mrf.mxu0
  %v1740 = vadd.f32 %v1717, %v1739
  %1741 = vdwg.mxu0
  %1742 = vmatpush.msra.mxu0 %v1692
  %1743 = vmatpush.msra.mxu0 %v1688
  %1744 = vmatpush.msra.mxu0 %v1684
  %1745 = vmatpush.msra.mxu0 %v1680
  %1746 = vmatpush.msra.mxu0 %v1676
  %1747 = vmatpush.msra.mxu0 %v1672
  %1748 = vmatpush.msra.mxu0 %v1668
  %1749 = vmatpush.msra.mxu0 %v1664
  %1750 = vmatpush.msra.mxu0 %v1660
  %1751 = vmatpush.msra.mxu0 %v1656
  %1752 = vmatpush.msra.mxu0 %v1652
  %1753 = vmatpush.msra.mxu0 %v1648
  %1754 = vmatpush.msra.mxu0 %v1644
  %1755 = vmatpush.msra.mxu0 %v1640
  %1756 = vmatpush.msra.mxu0 %v1636
  %1757 = vmatpush.msra.mxu0 %v1632
  %1758 = vmatmul.f32.gmra.mxu0 %v1566
  %v1759 = vpop.f32.mrf.mxu0
  %v1760 = vadd.f32 %v1740, %v1759
  %1761 = vdwg.mxu0
  %1762 = vmatpush.msra.mxu0 0.0
  %1763 = vmatpush.msra.mxu0 0.0
  %1764 = vmatpush.msra.mxu0 0.0
  %1765 = vmatpush.msra.mxu0 0.0
  %1766 = vmatpush.msra.mxu0 0.0
  %1767 = vmatpush.msra.mxu0 0.0
  %1768 = vmatpush.msra.mxu0 0.0
  %1769 = vmatpush.msra.mxu0 0.0
  %1770 = vmatpush.msra.mxu0 0.0
  %1771 = vmatpush.msra.mxu0 0.0
  %1772 = vmatpush.msra.mxu0 0.0
  %1773 = vmatpush.msra.mxu0 0.0
  %1774 = vmatpush.msra.mxu0 %v1708
  %1775 = vmatpush.msra.mxu0 %v1704
  %1776 = vmatpush.msra.mxu0 %v1700
  %1777 = vmatpush.msra.mxu0 %v1696
  %1778 = vmatmul.f32.gmra.mxu0 %v1720
  %v1779 = vpop.f32.mrf.mxu0
  %v1780 = vadd.f32 %v1760, %v1779
  %1781 = vdwg.mxu0
  %1782 = vmatpush.msra.mxu0 %v1629
  %1783 = vmatpush.msra.mxu0 %v1625
  %1784 = vmatpush.msra.mxu0 %v1621
  %1785 = vmatpush.msra.mxu0 %v1617
  %1786 = vmatpush.msra.mxu0 %v1613
  %1787 = vmatpush.msra.mxu0 %v1609
  %1788 = vmatpush.msra.mxu0 %v1605
  %1789 = vmatpush.msra.mxu0 %v1601
  %1790 = vmatpush.msra.mxu0 %v1597
  %1791 = vmatpush.msra.mxu0 %v1593
  %1792 = vmatpush.msra.mxu0 %v1589
  %1793 = vmatpush.msra.mxu0 %v1585
  %1794 = vmatpush.msra.mxu0 %v1581
  %1795 = vmatpush.msra.mxu0 %v1577
  %1796 = vmatpush.msra.mxu0 %v1573
  %1797 = vmatpush.msra.mxu0 %v1569
  %1798 = vmatmul.f32.gmra.mxu0 %v1565
  %v1799 = vpop.f32.mrf.mxu0
  %v1800 = vadd.f32 %v1717, %v1799
  %1801 = vdwg.mxu0
  %1802 = vmatpush.msra.mxu0 %v1693
  %1803 = vmatpush.msra.mxu0 %v1689
  %1804 = vmatpush.msra.mxu0 %v1685
  %1805 = vmatpush.msra.mxu0 %v1681
  %1806 = vmatpush.msra.mxu0 %v1677
  %1807 = vmatpush.msra.mxu0 %v1673
  %1808 = vmatpush.msra.mxu0 %v1669
  %1809 = vmatpush.msra.mxu0 %v1665
  %1810 = vmatpush.msra.mxu0 %v1661
  %1811 = vmatpush.msra.mxu0 %v1657
  %1812 = vmatpush.msra.mxu0 %v1653
  %1813 = vmatpush.msra.mxu0 %v1649
  %1814 = vmatpush.msra.mxu0 %v1645
  %1815 = vmatpush.msra.mxu0 %v1641
  %1816 = vmatpush.msra.mxu0 %v1637
  %1817 = vmatpush.msra.mxu0 %v1633
  %1818 = vmatmul.f32.gmra.mxu0 %v1566
  %v1819 = vpop.f32.mrf.mxu0
  %v1820 = vadd.f32 %v1800, %v1819
  %1821 = vdwg.mxu0
  %1822 = vmatpush.msra.mxu0 0.0
  %1823 = vmatpush.msra.mxu0 0.0
  %1824 = vmatpush.msra.mxu0 0.0
  %1825 = vmatpush.msra.mxu0 0.0
  %1826 = vmatpush.msra.mxu0 0.0
  %1827 = vmatpush.msra.mxu0 0.0
  %1828 = vmatpush.msra.mxu0 0.0
  %1829 = vmatpush.msra.mxu0 0.0
  %1830 = vmatpush.msra.mxu0 0.0
  %1831 = vmatpush.msra.mxu0 0.0
  %1832 = vmatpush.msra.mxu0 0.0
  %1833 = vmatpush.msra.mxu0 0.0
  %1834 = vmatpush.msra.mxu0 %v1709
  %1835 = vmatpush.msra.mxu0 %v1705
  %1836 = vmatpush.msra.mxu0 %v1701
  %1837 = vmatpush.msra.mxu0 %v1697
  %1838 = vmatmul.f32.gmra.mxu0 %v1720
  %v1839 = vpop.f32.mrf.mxu0
  %v1840 = vadd.f32 %v1820, %v1839
  %1841 = vdwg.mxu0
  %1842 = vmatpush.msra.mxu0 %v1630
  %1843 = vmatpush.msra.mxu0 %v1626
  %1844 = vmatpush.msra.mxu0 %v1622
  %1845 = vmatpush.msra.mxu0 %v1618
  %1846 = vmatpush.msra.mxu0 %v1614
  %1847 = vmatpush.msra.mxu0 %v1610
  %1848 = vmatpush.msra.mxu0 %v1606
  %1849 = vmatpush.msra.mxu0 %v1602
  %1850 = vmatpush.msra.mxu0 %v1598
  %1851 = vmatpush.msra.mxu0 %v1594
  %1852 = vmatpush.msra.mxu0 %v1590
  %1853 = vmatpush.msra.mxu0 %v1586
  %1854 = vmatpush.msra.mxu0 %v1582
  %1855 = vmatpush.msra.mxu0 %v1578
  %1856 = vmatpush.msra.mxu0 %v1574
  %1857 = vmatpush.msra.mxu0 %v1570
  %1858 = vmatmul.f32.gmra.mxu0 %v1565
  %v1859 = vpop.f32.mrf.mxu0
  %v1860 = vadd.f32 %v1717, %v1859
  %1861 = vdwg.mxu0
  %1862 = vmatpush.msra.mxu0 %v1694
  %1863 = vmatpush.msra.mxu0 %v1690
  %1864 = vmatpush.msra.mxu0 %v1686
  %1865 = vmatpush.msra.mxu0 %v1682
  %1866 = vmatpush.msra.mxu0 %v1678
  %1867 = vmatpush.msra.mxu0 %v1674
  %1868 = vmatpush.msra.mxu0 %v1670
  %1869 = vmatpush.msra.mxu0 %v1666
  %1870 = vmatpush.msra.mxu0 %v1662
  %1871 = vmatpush.msra.mxu0 %v1658
  %1872 = vmatpush.msra.mxu0 %v1654
  %1873 = vmatpush.msra.mxu0 %v1650
  %1874 = vmatpush.msra.mxu0 %v1646
  %1875 = vmatpush.msra.mxu0 %v1642
  %1876 = vmatpush.msra.mxu0 %v1638
  %1877 = vmatpush.msra.mxu0 %v1634
  %1878 = vmatmul.f32.gmra.mxu0 %v1566
  %v1879 = vpop.f32.mrf.mxu0
  %v1880 = vadd.f32 %v1860, %v1879
  %1881 = vdwg.mxu0
  %1882 = vmatpush.msra.mxu0 0.0
  %1883 = vmatpush.msra.mxu0 0.0
  %1884 = vmatpush.msra.mxu0 0.0
  %1885 = vmatpush.msra.mxu0 0.0
  %1886 = vmatpush.msra.mxu0 0.0
  %1887 = vmatpush.msra.mxu0 0.0
  %1888 = vmatpush.msra.mxu0 0.0
  %1889 = vmatpush.msra.mxu0 0.0
  %1890 = vmatpush.msra.mxu0 0.0
  %1891 = vmatpush.msra.mxu0 0.0
  %1892 = vmatpush.msra.mxu0 0.0
  %1893 = vmatpush.msra.mxu0 0.0
  %1894 = vmatpush.msra.mxu0 %v1710
  %1895 = vmatpush.msra.mxu0 %v1706
  %1896 = vmatpush.msra.mxu0 %v1702
  %1897 = vmatpush.msra.mxu0 %v1698
  %1898 = vmatmul.f32.gmra.mxu0 %v1720
  %v1899 = vpop.f32.mrf.mxu0
  %v1900 = vadd.f32 %v1880, %v1899
  %1901 = vdwg.mxu0
  %1902 = vmatpush.msra.mxu0 %v1631
  %1903 = vmatpush.msra.mxu0 %v1627
  %1904 = vmatpush.msra.mxu0 %v1623
  %1905 = vmatpush.msra.mxu0 %v1619
  %1906 = vmatpush.msra.mxu0 %v1615
  %1907 = vmatpush.msra.mxu0 %v1611
  %1908 = vmatpush.msra.mxu0 %v1607
  %1909 = vmatpush.msra.mxu0 %v1603
  %1910 = vmatpush.msra.mxu0 %v1599
  %1911 = vmatpush.msra.mxu0 %v1595
  %1912 = vmatpush.msra.mxu0 %v1591
  %1913 = vmatpush.msra.mxu0 %v1587
  %1914 = vmatpush.msra.mxu0 %v1583
  %1915 = vmatpush.msra.mxu0 %v1579
  %1916 = vmatpush.msra.mxu0 %v1575
  %1917 = vmatpush.msra.mxu0 %v1571
  %1918 = vmatmul.f32.gmra.mxu0 %v1565
  %v1919 = vpop.f32.mrf.mxu0
  %v1920 = vadd.f32 %v1717, %v1919
  %1921 = vdwg.mxu0
  %1922 = vmatpush.msra.mxu0 %v1695
  %1923 = vmatpush.msra.mxu0 %v1691
  %1924 = vmatpush.msra.mxu0 %v1687
  %1925 = vmatpush.msra.mxu0 %v1683
  %1926 = vmatpush.msra.mxu0 %v1679
  %1927 = vmatpush.msra.mxu0 %v1675
  %1928 = vmatpush.msra.mxu0 %v1671
  %1929 = vmatpush.msra.mxu0 %v1667
  %1930 = vmatpush.msra.mxu0 %v1663
  %1931 = vmatpush.msra.mxu0 %v1659
  %1932 = vmatpush.msra.mxu0 %v1655
  %1933 = vmatpush.msra.mxu0 %v1651
  %1934 = vmatpush.msra.mxu0 %v1647
  %1935 = vmatpush.msra.mxu0 %v1643
  %1936 = vmatpush.msra.mxu0 %v1639
  %1937 = vmatpush.msra.mxu0 %v1635
  %1938 = vmatmul.f32.gmra.mxu0 %v1566
  %v1939 = vpop.f32.mrf.mxu0
  %v1940 = vadd.f32 %v1920, %v1939
  %1941 = vdwg.mxu0
  %1942 = vmatpush.msra.mxu0 0.0
  %1943 = vmatpush.msra.mxu0 0.0
  %1944 = vmatpush.msra.mxu0 0.0
  %1945 = vmatpush.msra.mxu0 0.0
  %1946 = vmatpush.msra.mxu0 0.0
  %1947 = vmatpush.msra.mxu0 0.0
  %1948 = vmatpush.msra.mxu0 0.0
  %1949 = vmatpush.msra.mxu0 0.0
  %1950 = vmatpush.msra.mxu0 0.0
  %1951 = vmatpush.msra.mxu0 0.0
  %1952 = vmatpush.msra.mxu0 0.0
  %1953 = vmatpush.msra.mxu0 0.0
  %1954 = vmatpush.msra.mxu0 %v1711
  %1955 = vmatpush.msra.mxu0 %v1707
  %1956 = vmatpush.msra.mxu0 %v1703
  %1957 = vmatpush.msra.mxu0 %v1699
  %1958 = vmatmul.f32.gmra.mxu0 %v1720
  %v1959 = vpop.f32.mrf.mxu0
  %v1960 = vadd.f32 %v1940, %v1959
  %1961 = vdwg.mxu0
  %v1962 = vmax.f32 %v1780, 0.0
  %v1963 = vmax.f32 %v1840, 0.0
  %v1964 = vmax.f32 %v1900, 0.0
  %v1965 = vmax.f32 %v1960, 0.0
  %1966 = vrot.lane.b32.xlu0 %v1962, 17
  %v1967 = vpop.permute.xlu0 %1966
  %1968 = vrot.lane.b32.xlu0 %v1963, 17
  %v1969 = vpop.permute.xlu0 %1968
  %1970 = vrot.lane.b32.xlu0 %v1964, 17
  %v1971 = vpop.permute.xlu0 %1970
  %1972 = vrot.lane.b32.xlu0 %v1965, 17
  %v1973 = vpop.permute.xlu0 %1972
  %v1974 = vsel %vm197, %v1971, %v1973
  %v1975 = vsel %vm197, %v1969, %v1971
  %v1976 = vsel %vm197, %v1967, %v1969
  %v1977 = vsel %vm197, %v1973, %v1967
  %v1978 = vmul.f32 %v1977, %v203
  %v1979 = vmul.f32 %v1976, %v204
  %v1980 = vmul.f32 %v1975, %v205
  %v1981 = vmul.f32 %v1974, %v206
  %1982 = vst [vmem:[#allocation2 + $0x60] sm:$0xff] %v1978
  %1983 = vst [vmem:[#allocation2 + $0x68] sm:$0xff] %v1979
  %1984 = vst [vmem:[#allocation2 + $0x70] sm:$0xff] %v1980
  %1985 = vst [vmem:[#allocation2 + $0x78] sm:$0xff] %v1981
  %1986 = vrot.lane.b32.xlu0 %v1962, 16
  %v1987 = vpop.permute.xlu0 %1986
  %1988 = vrot.lane.b32.xlu0 %v1963, 16
  %v1989 = vpop.permute.xlu0 %1988
  %1990 = vrot.lane.b32.xlu0 %v1964, 16
  %v1991 = vpop.permute.xlu0 %1990
  %1992 = vrot.lane.b32.xlu0 %v1965, 16
  %v1993 = vpop.permute.xlu0 %1992
  %v1994 = vsel %vm227, %v1991, %v1993
  %v1995 = vsel %vm227, %v1989, %v1991
  %v1996 = vsel %vm227, %v1987, %v1989
  %v1997 = vsel %vm227, %v1993, %v1987
  %v1998 = vmul.f32 %v1997, %v233
  %v1999 = vmul.f32 %v1996, %v234
  %v2000 = vmul.f32 %v1995, %v235
  %v2001 = vmul.f32 %v1994, %v236
  %2002 = vst [vmem:[#allocation2 + $0xe0] sm:$0xff] %v1998
  %2003 = vst [vmem:[#allocation2 + $0xe8] sm:$0xff] %v1999
  %2004 = vst [vmem:[#allocation2 + $0xf0] sm:$0xff] %v2000
  %2005 = vst [vmem:[#allocation2 + $0xf8] sm:$0xff] %v2001
  %2006 = vrot.lane.b32.xlu0 %v1962, 15
  %v2007 = vpop.permute.xlu0 %2006
  %2008 = vrot.lane.b32.xlu0 %v1963, 15
  %v2009 = vpop.permute.xlu0 %2008
  %2010 = vrot.lane.b32.xlu0 %v1964, 15
  %v2011 = vpop.permute.xlu0 %2010
  %2012 = vrot.lane.b32.xlu0 %v1965, 15
  %v2013 = vpop.permute.xlu0 %2012
  %v2014 = vsel %vm257, %v2011, %v2013
  %v2015 = vsel %vm257, %v2009, %v2011
  %v2016 = vsel %vm257, %v2007, %v2009
  %v2017 = vsel %vm257, %v2013, %v2007
  %v2018 = vmul.f32 %v2017, %v263
  %v2019 = vmul.f32 %v2016, %v264
  %v2020 = vmul.f32 %v2015, %v265
  %v2021 = vmul.f32 %v2014, %v266
  %2022 = vst [vmem:[#allocation2 + $0x160] sm:$0xff] %v2018
  %2023 = vst [vmem:[#allocation2 + $0x168] sm:$0xff] %v2019
  %2024 = vst [vmem:[#allocation2 + $0x170] sm:$0xff] %v2020
  %2025 = vst [vmem:[#allocation2 + $0x178] sm:$0xff] %v2021
  %2026 = vrot.lane.b32.xlu0 %v1962, 1
  %v2027 = vpop.permute.xlu0 %2026
  %2028 = vrot.lane.b32.xlu0 %v1963, 1
  %v2029 = vpop.permute.xlu0 %2028
  %2030 = vrot.lane.b32.xlu0 %v1964, 1
  %v2031 = vpop.permute.xlu0 %2030
  %2032 = vrot.lane.b32.xlu0 %v1965, 1
  %v2033 = vpop.permute.xlu0 %2032
  %v2034 = vsel %vm287, %v2031, %v2033
  %v2035 = vsel %vm287, %v2029, %v2031
  %v2036 = vsel %vm287, %v2027, %v2029
  %v2037 = vsel %vm287, %v2033, %v2027
  %v2038 = vmul.f32 %v2037, %v293
  %v2039 = vmul.f32 %v2036, %v294
  %v2040 = vmul.f32 %v2035, %v295
  %v2041 = vmul.f32 %v2034, %v296
  %2042 = vst [vmem:[#allocation2 + $0x1e0] sm:$0xff] %v2038
  %2043 = vst [vmem:[#allocation2 + $0x1e8] sm:$0xff] %v2039
  %2044 = vst [vmem:[#allocation2 + $0x1f0] sm:$0xff] %v2040
  %2045 = vst [vmem:[#allocation2 + $0x1f8] sm:$0xff] %v2041
  %2046 = vst [vmem:[#allocation2 + $0x260] sm:$0xff] %v1962
  %2047 = vst [vmem:[#allocation2 + $0x268] sm:$0xff] %v1963
  %2048 = vst [vmem:[#allocation2 + $0x270] sm:$0xff] %v1964
  %2049 = vst [vmem:[#allocation2 + $0x278] sm:$0xff] %v1965
  %2050 = vrot.lane.b32.xlu0 %v1962, 127
  %v2051 = vpop.permute.xlu0 %2050
  %2052 = vrot.lane.b32.xlu0 %v1963, 127
  %v2053 = vpop.permute.xlu0 %2052
  %2054 = vrot.lane.b32.xlu0 %v1964, 127
  %v2055 = vpop.permute.xlu0 %2054
  %2056 = vrot.lane.b32.xlu0 %v1965, 127
  %v2057 = vpop.permute.xlu0 %2056
  %v2058 = vsel %vm321, %v2055, %v2057
  %v2059 = vsel %vm321, %v2053, %v2055
  %v2060 = vsel %vm321, %v2051, %v2053
  %v2061 = vsel %vm321, %v2057, %v2051
  %v2062 = vmul.f32 %v2060, %v327
  %v2063 = vmul.f32 %v2059, %v328
  %v2064 = vmul.f32 %v2058, %v329
  %v2065 = vmul.f32 %v2061, %v330
  %2066 = vst [vmem:[#allocation2 + $0x2e0] sm:$0xff] %v2062
  %2067 = vst [vmem:[#allocation2 + $0x2e8] sm:$0xff] %v2063
  %2068 = vst [vmem:[#allocation2 + $0x2f0] sm:$0xff] %v2064
  %2069 = vst [vmem:[#allocation2 + $0x2f8] sm:$0xff] %v2065
  %2070 = vrot.lane.b32.xlu0 %v1962, 113
  %v2071 = vpop.permute.xlu0 %2070
  %2072 = vrot.lane.b32.xlu0 %v1963, 113
  %v2073 = vpop.permute.xlu0 %2072
  %2074 = vrot.lane.b32.xlu0 %v1964, 113
  %v2075 = vpop.permute.xlu0 %2074
  %2076 = vrot.lane.b32.xlu0 %v1965, 113
  %v2077 = vpop.permute.xlu0 %2076
  %v2078 = vsel %vm351, %v2075, %v2077
  %v2079 = vsel %vm351, %v2073, %v2075
  %v2080 = vsel %vm351, %v2071, %v2073
  %v2081 = vsel %vm351, %v2077, %v2071
  %v2082 = vmul.f32 %v2080, %v357
  %v2083 = vmul.f32 %v2079, %v358
  %v2084 = vmul.f32 %v2078, %v359
  %v2085 = vmul.f32 %v2081, %v360
  %2086 = vst [vmem:[#allocation2 + $0x360] sm:$0xff] %v2082
  %2087 = vst [vmem:[#allocation2 + $0x368] sm:$0xff] %v2083
  %2088 = vst [vmem:[#allocation2 + $0x370] sm:$0xff] %v2084
  %2089 = vst [vmem:[#allocation2 + $0x378] sm:$0xff] %v2085
  %2090 = vrot.lane.b32.xlu0 %v1962, 112
  %v2091 = vpop.permute.xlu0 %2090
  %2092 = vrot.lane.b32.xlu0 %v1963, 112
  %v2093 = vpop.permute.xlu0 %2092
  %2094 = vrot.lane.b32.xlu0 %v1964, 112
  %v2095 = vpop.permute.xlu0 %2094
  %2096 = vrot.lane.b32.xlu0 %v1965, 112
  %v2097 = vpop.permute.xlu0 %2096
  %v2098 = vsel %vm381, %v2095, %v2097
  %v2099 = vsel %vm381, %v2093, %v2095
  %v2100 = vsel %vm381, %v2091, %v2093
  %v2101 = vsel %vm381, %v2097, %v2091
  %v2102 = vmul.f32 %v2100, %v387
  %v2103 = vmul.f32 %v2099, %v388
  %v2104 = vmul.f32 %v2098, %v389
  %v2105 = vmul.f32 %v2101, %v390
  %2106 = vst [vmem:[#allocation2 + $0x3e0] sm:$0xff] %v2102
  %2107 = vst [vmem:[#allocation2 + $0x3e8] sm:$0xff] %v2103
  %2108 = vst [vmem:[#allocation2 + $0x3f0] sm:$0xff] %v2104
  %2109 = vst [vmem:[#allocation2 + $0x3f8] sm:$0xff] %v2105
  %2110 = vrot.lane.b32.xlu0 %v1962, 111
  %v2111 = vpop.permute.xlu0 %2110
  %2112 = vrot.lane.b32.xlu0 %v1963, 111
  %v2113 = vpop.permute.xlu0 %2112
  %2114 = vrot.lane.b32.xlu0 %v1964, 111
  %v2115 = vpop.permute.xlu0 %2114
  %2116 = vrot.lane.b32.xlu0 %v1965, 111
  %v2117 = vpop.permute.xlu0 %2116
  %v2118 = vsel %vm411, %v2115, %v2117
  %v2119 = vsel %vm411, %v2113, %v2115
  %v2120 = vsel %vm411, %v2111, %v2113
  %v2121 = vsel %vm411, %v2117, %v2111
  %v2122 = vmul.f32 %v2120, %v417
  %v2123 = vmul.f32 %v2119, %v418
  %v2124 = vmul.f32 %v2118, %v419
  %v2125 = vmul.f32 %v2121, %v420
  %2126 = vst [vmem:[#allocation2 + $0x460] sm:$0xff] %v2122
  %2127 = vst [vmem:[#allocation2 + $0x468] sm:$0xff] %v2123
  %2128 = vst [vmem:[#allocation2 + $0x470] sm:$0xff] %v2124
  %2129 = vst [vmem:[#allocation2 + $0x478] sm:$0xff] %v2125
  %v2130 = vld [vmem:[#allocation2 + $0x200] sm:$0xff]
  %v2131 = vld [vmem:[#allocation2 + $0x208] sm:$0xff]
  %v2132 = vld [vmem:[#allocation2 + $0x210] sm:$0xff]
  %v2133 = vld [vmem:[#allocation2 + $0x218] sm:$0xff]
  %v2134 = vld [vmem:[#allocation2 + $0x220] sm:$0xff]
  %v2135 = vld [vmem:[#allocation2 + $0x228] sm:$0xff]
  %v2136 = vld [vmem:[#allocation2 + $0x230] sm:$0xff]
  %v2137 = vld [vmem:[#allocation2 + $0x238] sm:$0xff]
  %v2138 = vld [vmem:[#allocation2 + $0x240] sm:$0xff]
  %v2139 = vld [vmem:[#allocation2 + $0x248] sm:$0xff]
  %v2140 = vld [vmem:[#allocation2 + $0x250] sm:$0xff]
  %v2141 = vld [vmem:[#allocation2 + $0x258] sm:$0xff]
  %v2142 = vld [vmem:[#allocation2 + $0x260] sm:$0xff]
  %v2143 = vld [vmem:[#allocation2 + $0x268] sm:$0xff]
  %v2144 = vld [vmem:[#allocation2 + $0x270] sm:$0xff]
  %v2145 = vld [vmem:[#allocation2 + $0x278] sm:$0xff]
  %v2146 = vld [vmem:[%s4] sm:$0xff]
  %v2147 = vld [vmem:[%s5] sm:$0xff]
  %2149 = vset.pattern.permute.xlu0 0
  %2150 = vperm.xlu0 %2149, %v2147
  %v2151 = vpop.permute.xlu0 %2150
  %v2154 = vsel %vm586, %v2146, 0
  %2156 = vmatpush.msra.mxu0 0.0
  %2157 = vmatpush.msra.mxu0 0.0
  %2158 = vmatpush.msra.mxu0 0.0
  %2159 = vmatpush.msra.mxu0 0.0
  %2160 = vmatpush.msra.mxu0 0.0
  %2161 = vmatpush.msra.mxu0 0.0
  %2162 = vmatpush.msra.mxu0 0.0
  %2163 = vmatpush.msra.mxu0 0.0
  %2164 = vmatpush.msra.mxu0 0.0
  %2165 = vmatpush.msra.mxu0 0.0
  %2166 = vmatpush.msra.mxu0 0.0
  %2167 = vmatpush.msra.mxu0 0.0
  %2168 = vmatpush.msra.mxu0 %v2142
  %2169 = vmatpush.msra.mxu0 %v2138
  %2170 = vmatpush.msra.mxu0 %v2134
  %2171 = vmatpush.msra.mxu0 %v2130
  %2172 = vmatmul.f32.gmra.mxu0 %v2154
  %v2173 = vpop.f32.mrf.mxu0
  %v2174 = vadd.f32 %v2151, %v2173
  %2175 = vdwg.mxu0
  %2176 = vmatpush.msra.mxu0 0.0
  %2177 = vmatpush.msra.mxu0 0.0
  %2178 = vmatpush.msra.mxu0 0.0
  %2179 = vmatpush.msra.mxu0 0.0
  %2180 = vmatpush.msra.mxu0 0.0
  %2181 = vmatpush.msra.mxu0 0.0
  %2182 = vmatpush.msra.mxu0 0.0
  %2183 = vmatpush.msra.mxu0 0.0
  %2184 = vmatpush.msra.mxu0 0.0
  %2185 = vmatpush.msra.mxu0 0.0
  %2186 = vmatpush.msra.mxu0 0.0
  %2187 = vmatpush.msra.mxu0 0.0
  %2188 = vmatpush.msra.mxu0 %v2143
  %2189 = vmatpush.msra.mxu0 %v2139
  %2190 = vmatpush.msra.mxu0 %v2135
  %2191 = vmatpush.msra.mxu0 %v2131
  %2192 = vmatmul.f32.gmra.mxu0 %v2154
  %v2193 = vpop.f32.mrf.mxu0
  %v2194 = vadd.f32 %v2151, %v2193
  %2195 = vdwg.mxu0
  %2196 = vmatpush.msra.mxu0 0.0
  %2197 = vmatpush.msra.mxu0 0.0
  %2198 = vmatpush.msra.mxu0 0.0
  %2199 = vmatpush.msra.mxu0 0.0
  %2200 = vmatpush.msra.mxu0 0.0
  %2201 = vmatpush.msra.mxu0 0.0
  %2202 = vmatpush.msra.mxu0 0.0
  %2203 = vmatpush.msra.mxu0 0.0
  %2204 = vmatpush.msra.mxu0 0.0
  %2205 = vmatpush.msra.mxu0 0.0
  %2206 = vmatpush.msra.mxu0 0.0
  %2207 = vmatpush.msra.mxu0 0.0
  %2208 = vmatpush.msra.mxu0 %v2144
  %2209 = vmatpush.msra.mxu0 %v2140
  %2210 = vmatpush.msra.mxu0 %v2136
  %2211 = vmatpush.msra.mxu0 %v2132
  %2212 = vmatmul.f32.gmra.mxu0 %v2154
  %v2213 = vpop.f32.mrf.mxu0
  %v2214 = vadd.f32 %v2151, %v2213
  %2215 = vdwg.mxu0
  %2216 = vmatpush.msra.mxu0 0.0
  %2217 = vmatpush.msra.mxu0 0.0
  %2218 = vmatpush.msra.mxu0 0.0
  %2219 = vmatpush.msra.mxu0 0.0
  %2220 = vmatpush.msra.mxu0 0.0
  %2221 = vmatpush.msra.mxu0 0.0
  %2222 = vmatpush.msra.mxu0 0.0
  %2223 = vmatpush.msra.mxu0 0.0
  %2224 = vmatpush.msra.mxu0 0.0
  %2225 = vmatpush.msra.mxu0 0.0
  %2226 = vmatpush.msra.mxu0 0.0
  %2227 = vmatpush.msra.mxu0 0.0
  %2228 = vmatpush.msra.mxu0 %v2145
  %2229 = vmatpush.msra.mxu0 %v2141
  %2230 = vmatpush.msra.mxu0 %v2137
  %2231 = vmatpush.msra.mxu0 %v2133
  %2232 = vmatmul.f32.gmra.mxu0 %v2154
  %v2233 = vpop.f32.mrf.mxu0
  %v2234 = vadd.f32 %v2151, %v2233
  %2235 = vdwg.mxu0
  %v2236 = vadd.f32 %v2174, %v182
  %v2237 = vadd.f32 %v2194, %v183
  %v2238 = vadd.f32 %v2214, %v185
  %v2239 = vadd.f32 %v2234, %v186
  %2240 = vst [vmem:[%s6] sm:$0xff] %v2236
  %2241 = vst [vmem:[%s6 + $0x8] sm:$0xff] %v2237
  %s2242 = scalar_lea.vmem %s6, 16
  %2243 = vst [vmem:[%s2242] sm:$0xff] %v2238
  %2244 = vst [vmem:[%s2242 + $0x8] sm:$0xff] %v2239
  // Predicated region
  $region26: #{rdb_forward.1} parent=0 // pred_check
    _
  $region27: #{rdb_forward.1} parent=0 // pred_check_branch
    %2246 = sbr.rel (0) target = $region29
  $region28: #{rdb_forward.1} parent=0 // pred_region
    _
  $region29: #{rdb_forward.1} parent=0 // pred_fallthru
    _
  // Predicated region
  $region30: #{rdb_forward.1} parent=0 // pred_check
    _
  $region31: #{rdb_forward.1} parent=0 // pred_check_branch
    %2248 = sbr.rel (0) target = $region33
  $region32: #{rdb_forward.1} parent=0 // pred_region
    _
  $region33: #{rdb_forward.1} parent=0 // pred_fallthru
    _

</llo_original>
